<compile_context>
chip_gen: v5e
topology: v5e:2x2
jax: 0.10.0
libtpu: 0.0.40
codegen_flags: <defaults>
</compile_context>

<pallas_src>
import functools

import jax
import jax.numpy as jnp
from jax.experimental import pallas as pl
from jax.experimental.pallas import tpu as pltpu


COMPUTE_DTYPE = jnp.float32          # set to jnp.bfloat16 on v6e / v7x
VMEM_LIMIT_BYTES = 32 * 1024 * 1024
H1 = 24                              # conv1 rows computed per image (all valid)
H2 = 16                              # conv2 row grid per image (even rows 0..14 valid)


def _round_up(x, m):
    return ((x + m - 1) // m) * m


def _sigmoid(y):
    # exp -> EUP, approximate reciprocal -> EUP (keeps VALU free).
    return pl.reciprocal(1.0 + jnp.exp(-y), approx=True)


# --------------------------------- kernel -----------------------------------


def lenet_kernel(x_ref, w1_ref, b1_ref, w2_ref, b2_ref,
                 wf1_ref, bf1_ref, wf2_ref, bf2_ref, wf3_ref, bf3_ref,
                 o_ref, s1_ref, s2_ref, *, tb):
    """Whole LeNet forward for one batch tile of `tb` images.

    x_ref  : [tb, 32, 32]    image, rows=H (28 valid), lanes=W (28 valid)
    w1_ref : [5, 32, 256]    conv1 banded weights, one matmul per kernel row di
    w2_ref : [5, 128, 256]   conv2 banded weights
    wf1_ref: [4, 128, 128]   fc1 weights, one matmul per pooled row h3
    o_ref  : [tb, 128]       logits (cols 0..9 real)
    s1_ref : [tb, 32, 128]   VMEM scratch: conv1 act after pool-W
    s2_ref : [tb, 16, 128]   VMEM scratch: conv2 act after pool-W
    """
    f32 = jnp.float32

    # ---- conv1: 5 banded matmuls over row-shifted image windows -------------
    # output lane = (ow % 2)*128 + (ow // 2)*6 + oc  -> pool-W = aligned halves
    acc1 = jnp.zeros((tb * H1, 256), f32)
    for di in range(5):
        xd = x_ref[:, di:di + H1, :].reshape(tb * H1, 32)
        acc1 = acc1 + jnp.dot(xd, w1_ref[di], preferred_element_type=f32)
    y1 = _sigmoid(acc1 + b1_ref[...])
    yw = jnp.maximum(y1[:, :128], y1[:, 128:])            # pool1 along W (VPU)
    s1_ref[:, :H1, :] = yw.reshape(tb, H1, 128)
    s1_ref[:, H1:, :] = jnp.zeros((tb, 32 - H1, 128), f32)

    # ---- conv2 (pool1 along H fused into the row reads) ---------------------
    # input row r of tap di reads pooled row max(s1[2di+r], s1[2di+r+1]);
    # output row grid R = 2*oh2 (even rows valid).
    dt2 = w2_ref.dtype
    acc2 = jnp.zeros((tb * H2, 256), f32)
    for di in range(5):
        a = jnp.maximum(s1_ref[:, 2 * di:2 * di + H2, :],
                        s1_ref[:, 2 * di + 1:2 * di + 1 + H2, :])
        a = a.reshape(tb * H2, 128).astype(dt2)
        acc2 = acc2 + jnp.dot(a, w2_ref[di], preferred_element_type=f32)
    y2 = _sigmoid(acc2 + b2_ref[...])
    s2_ref[...] = jnp.maximum(y2[:, :128], y2[:, 128:]).reshape(tb, H2, 128)

    # ---- FC head (pool2 along H fused into the 4 row reads) -----------------
    dtf = wf1_ref.dtype
    accf = jnp.zeros((tb, 128), f32)
    for h3 in range(4):
        xh = jnp.maximum(s2_ref[:, 4 * h3, :], s2_ref[:, 4 * h3 + 2, :])
        accf = accf + jnp.dot(xh.astype(dtf), wf1_ref[h3],
                              preferred_element_type=f32)
    h1 = _sigmoid(accf + bf1_ref[...])
    h2 = _sigmoid(jnp.dot(h1.astype(dtf), wf2_ref[...],
                          preferred_element_type=f32) + bf2_ref[...])
    logits = jnp.dot(h2.astype(dtf), wf3_ref[...],
                     preferred_element_type=f32) + bf3_ref[...]
    o_ref[...] = logits.astype(o_ref.dtype)


# ------------------------------ forward wrapper -----------------------------


def lenet_forward(x, p, *, tb=8):
    """x: [B, 1, 28, 28] f32 (NCHW, like PyTorch). Returns logits [B, 10]."""
    assert tb % 8 == 0
    B = x.shape[0]
    dt = p["w1"].dtype
    Bp = _round_up(B, tb)

    # Pack input once on the host: rows=H padded to 32, lanes=W padded to 32.
    xp = jnp.zeros((Bp, 32, 32), dt)
    xp = xp.at[:B, :28, :28].set(x[:, 0].astype(dt))

    wbytes = sum(p[k].size * p[k].dtype.itemsize for k in p)
    flops = Bp * (2 * 5 * H1 * 32 * 256 + 2 * 5 * H2 * 128 * 256
                  + 2 * 6 * 128 * 128)
    trans = Bp * 2 * (H1 * 256 + H2 * 256 + 3 * 128)
    bytes_accessed = xp.size * xp.dtype.itemsize + wbytes + Bp * 128 * 4

    kernel = functools.partial(lenet_kernel, tb=tb)
    out = pl.pallas_call(
        kernel,
        out_shape=jax.ShapeDtypeStruct((Bp, 128), jnp.float32),
        grid=(Bp // tb,),
        in_specs=[
            pl.BlockSpec((tb, 32, 32), lambda i: (i, 0, 0)),      # images
            pl.BlockSpec((5, 32, 256), lambda i: (0, 0, 0)),      # w1
            pl.BlockSpec((1, 256), lambda i: (0, 0)),             # b1
            pl.BlockSpec((5, 128, 256), lambda i: (0, 0, 0)),     # w2
            pl.BlockSpec((1, 256), lambda i: (0, 0)),             # b2
            pl.BlockSpec((4, 128, 128), lambda i: (0, 0, 0)),     # wf1
            pl.BlockSpec((1, 128), lambda i: (0, 0)),             # bf1
            pl.BlockSpec((128, 128), lambda i: (0, 0)),           # wf2
            pl.BlockSpec((1, 128), lambda i: (0, 0)),             # bf2
            pl.BlockSpec((128, 128), lambda i: (0, 0)),           # wf3
            pl.BlockSpec((1, 128), lambda i: (0, 0)),             # bf3
        ],
        out_specs=pl.BlockSpec((tb, 128), lambda i: (i, 0)),
        scratch_shapes=[
            pltpu.VMEM((tb, 32, 128), jnp.float32),
            pltpu.VMEM((tb, H2, 128), jnp.float32),
        ],
        compiler_params=pltpu.CompilerParams(
            dimension_semantics=("parallel",),
            vmem_limit_bytes=VMEM_LIMIT_BYTES),
        cost_estimate=pl.CostEstimate(
            flops=flops, transcendentals=trans,
            bytes_accessed=bytes_accessed),
    )(xp, p["w1"], p["b1"], p["w2"], p["b2"],
      p["wf1"], p["bf1"], p["wf2"], p["bf2"], p["wf3"], p["bf3"])
    return out[:B, :10]


# ---------------------------- one-time weight packing -----------------------


def pack_params(params, dtype=COMPUTE_DTYPE):
    """Repack PyTorch-layout weights into banded, lane-padded matmul weights."""
    f32 = jnp.float32
    w1 = params["w_conv1"].astype(f32)          # [6, 1, 5, 5]
    w2 = params["w_conv2"].astype(f32)          # [16, 6, 5, 5]

    # conv1: W1[di, w_in, (ow%2)*128 + (ow//2)*6 + oc] = w1[oc, 0, di, w_in-ow]
    di, dj, ow, oc = jnp.meshgrid(jnp.arange(5), jnp.arange(5),
                                  jnp.arange(24), jnp.arange(6), indexing="ij")
    W1 = jnp.zeros((5, 32, 256), f32).at[
        di, ow + dj, (ow % 2) * 128 + (ow // 2) * 6 + oc
    ].set(w1[oc, 0, di, dj])

    # conv2: W2[di, pw*6+c, (ow2%2)*128 + (ow2//2)*16 + oc2] = w2[oc2, c, di, dj]
    di, dj, ow2, oc2, c = jnp.meshgrid(jnp.arange(5), jnp.arange(5),
                                       jnp.arange(8), jnp.arange(16),
                                       jnp.arange(6), indexing="ij")
    W2 = jnp.zeros((5, 128, 256), f32).at[
        di, (ow2 + dj) * 6 + c, (ow2 % 2) * 128 + (ow2 // 2) * 16 + oc2
    ].set(w2[oc2, c, di, dj])

    # conv biases broadcast to their packed output columns.
    ow, oc = jnp.meshgrid(jnp.arange(24), jnp.arange(6), indexing="ij")
    b1 = jnp.zeros((1, 256), f32).at[
        0, (ow % 2) * 128 + (ow // 2) * 6 + oc
    ].set(params["b_conv1"].astype(f32)[oc])
    ow2, oc2 = jnp.meshgrid(jnp.arange(8), jnp.arange(16), indexing="ij")
    b2 = jnp.zeros((1, 256), f32).at[
        0, (ow2 % 2) * 128 + (ow2 // 2) * 16 + oc2
    ].set(params["b_conv2"].astype(f32)[oc2])

    # fc1: Wf1[h3, w3*16 + c2, j] = w_fc1[j, c2*16 + h3*4 + w3]
    wf1 = params["w_fc1"].astype(f32)                       # [120, 256]
    h3 = jnp.arange(4)[:, None, None]
    w3 = jnp.arange(4)[None, :, None]
    c2 = jnp.arange(16)[None, None, :]
    old_col = (c2 * 16 + h3 * 4 + w3).reshape(4, 64)         # [4, 64]
    Wf1 = jnp.zeros((4, 128, 128), f32).at[:, :64, :120].set(
        jnp.transpose(wf1[:, old_col], (1, 2, 0)))

    Wf2 = jnp.zeros((128, 128), f32).at[:120, :84].set(
        params["w_fc2"].T.astype(f32))
    Wf3 = jnp.zeros((128, 128), f32).at[:84, :10].set(
        params["w_fc3"].T.astype(f32))

    def vec_pad(b):
        return jnp.zeros((1, 128), f32).at[0, :b.shape[0]].set(b.astype(f32))

    return {
        "w1": W1.astype(dtype), "b1": b1,
        "w2": W2.astype(dtype), "b2": b2,
        "wf1": Wf1.astype(dtype), "bf1": vec_pad(params["b_fc1"]),
        "wf2": Wf2.astype(dtype), "bf2": vec_pad(params["b_fc2"]),
        "wf3": Wf3.astype(dtype), "bf3": vec_pad(params["b_fc3"]),
    }


# ------------------------------ params / reference --------------------------


def init_params(key):
    ks = jax.random.split(key, 10)
    scale = 0.1
    return {
        "w_conv1": scale * jax.random.normal(ks[0], (6, 1, 5, 5), jnp.float32),
        "b_conv1": scale * jax.random.normal(ks[1], (6,), jnp.float32),
        "w_conv2": scale * jax.random.normal(ks[2], (16, 6, 5, 5), jnp.float32),
        "b_conv2": scale * jax.random.normal(ks[3], (16,), jnp.float32),
        "w_fc1": scale * jax.random.normal(ks[4], (120, 16 * 4 * 4), jnp.float32),
        "b_fc1": scale * jax.random.normal(ks[5], (120,), jnp.float32),
        "w_fc2": scale * jax.random.normal(ks[6], (84, 120), jnp.float32),
        "b_fc2": scale * jax.random.normal(ks[7], (84,), jnp.float32),
        "w_fc3": scale * jax.random.normal(ks[8], (10, 84), jnp.float32),
        "b_fc3": scale * jax.random.normal(ks[9], (10,), jnp.float32),
    }


def lenet_reference(x, params):
    """Plain-JAX (XLA) reference of the PyTorch module, for self-checking."""
    dn = ("NCHW", "OIHW", "NCHW")
    y = jax.lax.conv_general_dilated(x, params["w_conv1"], (1, 1), "VALID",
                                     dimension_numbers=dn)
    y = jax.nn.sigmoid(y + params["b_conv1"][None, :, None, None])
    y = jax.lax.reduce_window(y, -jnp.inf, jax.lax.max,
                              (1, 1, 2, 2), (1, 1, 2, 2), "VALID")
    y = jax.lax.conv_general_dilated(y, params["w_conv2"], (1, 1), "VALID",
                                     dimension_numbers=dn)
    y = jax.nn.sigmoid(y + params["b_conv2"][None, :, None, None])
    y = jax.lax.reduce_window(y, -jnp.inf, jax.lax.max,
                              (1, 1, 2, 2), (1, 1, 2, 2), "VALID")
    f = y.reshape(x.shape[0], -1)
    h = jax.nn.sigmoid(f @ params["w_fc1"].T + params["b_fc1"])
    h = jax.nn.sigmoid(h @ params["w_fc2"].T + params["b_fc2"])
    return h @ params["w_fc3"].T + params["b_fc3"]


if __name__ == "__main__":
    key = jax.random.PRNGKey(0)
    pkey, xkey = jax.random.split(key)
    params = init_params(pkey)
    packed = pack_params(params, dtype=COMPUTE_DTYPE)

    # LeNet's FC head requires 28x28 input (28 -> 24 -> 12 -> 8 -> 4).
    x = jax.random.normal(xkey, (2, 1, 28, 28), jnp.float32)

    forward = jax.jit(functools.partial(lenet_forward, tb=8))
    logits = jax.block_until_ready(forward(x, packed))

    assert logits.shape == (2, 10), logits.shape
    assert bool(jnp.all(jnp.isfinite(logits))), "non-finite output"

    ref = lenet_reference(x, params)
    max_err = float(jnp.max(jnp.abs(logits - ref)))
    assert max_err < 5e-2, f"mismatch vs reference: {max_err}"
    print("KERNEL_OK")
</pallas_src>

<mosaic_0001>
module attributes {stable_mosaic.version = 11 : i64} {
  func.func @lenet_kernel(%arg0: i32, %arg1: memref<8x32x32xf32, #tpu.memory_space<vmem>>, %arg2: memref<5x32x256xf32, #tpu.memory_space<vmem>>, %arg3: memref<1x256xf32, #tpu.memory_space<vmem>>, %arg4: memref<5x128x256xf32, #tpu.memory_space<vmem>>, %arg5: memref<1x256xf32, #tpu.memory_space<vmem>>, %arg6: memref<4x128x128xf32, #tpu.memory_space<vmem>>, %arg7: memref<1x128xf32, #tpu.memory_space<vmem>>, %arg8: memref<128x128xf32, #tpu.memory_space<vmem>>, %arg9: memref<1x128xf32, #tpu.memory_space<vmem>>, %arg10: memref<128x128xf32, #tpu.memory_space<vmem>>, %arg11: memref<1x128xf32, #tpu.memory_space<vmem>>, %arg12: memref<8x128xf32, #tpu.memory_space<vmem>>, %arg13: memref<8x32x128xf32, #tpu.memory_space<vmem>>, %arg14: memref<8x16x128xf32, #tpu.memory_space<vmem>>) attributes {dimension_semantics = [#tpu.dimension_semantics<parallel>], iteration_bounds = array<i64: 1>, scalar_prefetch = 0 : i64, scratch_operands = 2 : i64, tpu.core_type = #tpu.core_type<tc>, window_params = [{transform_indices = @transform_0, window_bounds = array<i64: 8, 32, 32>}, {pipeline_mode = #tpu.pipeline_mode<synchronous>, transform_indices = @transform_1, window_bounds = array<i64: 5, 32, 256>}, {pipeline_mode = #tpu.pipeline_mode<synchronous>, transform_indices = @transform_2, window_bounds = array<i64: 1, 256>}, {pipeline_mode = #tpu.pipeline_mode<synchronous>, transform_indices = @transform_3, window_bounds = array<i64: 5, 128, 256>}, {pipeline_mode = #tpu.pipeline_mode<synchronous>, transform_indices = @transform_4, window_bounds = array<i64: 1, 256>}, {pipeline_mode = #tpu.pipeline_mode<synchronous>, transform_indices = @transform_5, window_bounds = array<i64: 4, 128, 128>}, {pipeline_mode = #tpu.pipeline_mode<synchronous>, transform_indices = @transform_6, window_bounds = array<i64: 1, 128>}, {pipeline_mode = #tpu.pipeline_mode<synchronous>, transform_indices = @transform_7, window_bounds = array<i64: 128, 128>}, {pipeline_mode = #tpu.pipeline_mode<synchronous>, transform_indices = @transform_8, window_bounds = array<i64: 1, 128>}, {pipeline_mode = #tpu.pipeline_mode<synchronous>, transform_indices = @transform_9, window_bounds = array<i64: 128, 128>}, {pipeline_mode = #tpu.pipeline_mode<synchronous>, transform_indices = @transform_10, window_bounds = array<i64: 1, 128>}, {transform_indices = @transform_11, window_bounds = array<i64: 8, 128>}]} {
    %cst = arith.constant 0.000000e+00 : f32
    %0 = vector.broadcast %cst : f32 to vector<192x256xf32>
    %c0 = arith.constant 0 : index
    %c0_0 = arith.constant 0 : index
    %c0_1 = arith.constant 0 : index
    %1 = vector.load %arg1[%c0, %c0_0, %c0_1] : memref<8x32x32xf32, #tpu.memory_space<vmem>>, vector<8x24x32xf32>
    %2 = vector.shape_cast %1 : vector<8x24x32xf32> to vector<192x32xf32>
    %c0_2 = arith.constant 0 : index
    %c0_3 = arith.constant 0 : index
    %c0_4 = arith.constant 0 : index
    %3 = vector.load %arg2[%c0_2, %c0_3, %c0_4] : memref<5x32x256xf32, #tpu.memory_space<vmem>>, vector<1x32x256xf32>
    %4 = vector.shape_cast %3 : vector<1x32x256xf32> to vector<32x256xf32>
    %cst_5 = arith.constant dense<0.000000e+00> : vector<192x256xf32>
    %5 = tpu.matmul %2, %4, %cst_5 {dimension_numbers = #tpu.dot_dimension_numbers<[1], [0], [0], [1], [0, 0, 1, 1], [], []>} : vector<192x32xf32>, vector<32x256xf32>, vector<192x256xf32> -> vector<192x256xf32>
    %6 = arith.addf %0, %5 : vector<192x256xf32>
    %c0_6 = arith.constant 0 : index
    %c1 = arith.constant 1 : index
    %c0_7 = arith.constant 0 : index
    %7 = vector.load %arg1[%c0_6, %c1, %c0_7] : memref<8x32x32xf32, #tpu.memory_space<vmem>>, vector<8x24x32xf32>
    %8 = vector.shape_cast %7 : vector<8x24x32xf32> to vector<192x32xf32>
    %c1_8 = arith.constant 1 : index
    %c0_9 = arith.constant 0 : index
    %c0_10 = arith.constant 0 : index
    %9 = vector.load %arg2[%c1_8, %c0_9, %c0_10] : memref<5x32x256xf32, #tpu.memory_space<vmem>>, vector<1x32x256xf32>
    %10 = vector.shape_cast %9 : vector<1x32x256xf32> to vector<32x256xf32>
    %cst_11 = arith.constant dense<0.000000e+00> : vector<192x256xf32>
    %11 = tpu.matmul %8, %10, %cst_11 {dimension_numbers = #tpu.dot_dimension_numbers<[1], [0], [0], [1], [0, 0, 1, 1], [], []>} : vector<192x32xf32>, vector<32x256xf32>, vector<192x256xf32> -> vector<192x256xf32>
    %12 = arith.addf %6, %11 : vector<192x256xf32>
    %c0_12 = arith.constant 0 : index
    %c2 = arith.constant 2 : index
    %c0_13 = arith.constant 0 : index
    %13 = vector.load %arg1[%c0_12, %c2, %c0_13] : memref<8x32x32xf32, #tpu.memory_space<vmem>>, vector<8x24x32xf32>
    %14 = vector.shape_cast %13 : vector<8x24x32xf32> to vector<192x32xf32>
    %c2_14 = arith.constant 2 : index
    %c0_15 = arith.constant 0 : index
    %c0_16 = arith.constant 0 : index
    %15 = vector.load %arg2[%c2_14, %c0_15, %c0_16] : memref<5x32x256xf32, #tpu.memory_space<vmem>>, vector<1x32x256xf32>
    %16 = vector.shape_cast %15 : vector<1x32x256xf32> to vector<32x256xf32>
    %cst_17 = arith.constant dense<0.000000e+00> : vector<192x256xf32>
    %17 = tpu.matmul %14, %16, %cst_17 {dimension_numbers = #tpu.dot_dimension_numbers<[1], [0], [0], [1], [0, 0, 1, 1], [], []>} : vector<192x32xf32>, vector<32x256xf32>, vector<192x256xf32> -> vector<192x256xf32>
    %18 = arith.addf %12, %17 : vector<192x256xf32>
    %c0_18 = arith.constant 0 : index
    %c3 = arith.constant 3 : index
    %c0_19 = arith.constant 0 : index
    %19 = vector.load %arg1[%c0_18, %c3, %c0_19] : memref<8x32x32xf32, #tpu.memory_space<vmem>>, vector<8x24x32xf32>
    %20 = vector.shape_cast %19 : vector<8x24x32xf32> to vector<192x32xf32>
    %c3_20 = arith.constant 3 : index
    %c0_21 = arith.constant 0 : index
    %c0_22 = arith.constant 0 : index
    %21 = vector.load %arg2[%c3_20, %c0_21, %c0_22] : memref<5x32x256xf32, #tpu.memory_space<vmem>>, vector<1x32x256xf32>
    %22 = vector.shape_cast %21 : vector<1x32x256xf32> to vector<32x256xf32>
    %cst_23 = arith.constant dense<0.000000e+00> : vector<192x256xf32>
    %23 = tpu.matmul %20, %22, %cst_23 {dimension_numbers = #tpu.dot_dimension_numbers<[1], [0], [0], [1], [0, 0, 1, 1], [], []>} : vector<192x32xf32>, vector<32x256xf32>, vector<192x256xf32> -> vector<192x256xf32>
    %24 = arith.addf %18, %23 : vector<192x256xf32>
    %c0_24 = arith.constant 0 : index
    %c4 = arith.constant 4 : index
    %c0_25 = arith.constant 0 : index
    %25 = vector.load %arg1[%c0_24, %c4, %c0_25] : memref<8x32x32xf32, #tpu.memory_space<vmem>>, vector<8x24x32xf32>
    %26 = vector.shape_cast %25 : vector<8x24x32xf32> to vector<192x32xf32>
    %c4_26 = arith.constant 4 : index
    %c0_27 = arith.constant 0 : index
    %c0_28 = arith.constant 0 : index
    %27 = vector.load %arg2[%c4_26, %c0_27, %c0_28] : memref<5x32x256xf32, #tpu.memory_space<vmem>>, vector<1x32x256xf32>
    %28 = vector.shape_cast %27 : vector<1x32x256xf32> to vector<32x256xf32>
    %cst_29 = arith.constant dense<0.000000e+00> : vector<192x256xf32>
    %29 = tpu.matmul %26, %28, %cst_29 {dimension_numbers = #tpu.dot_dimension_numbers<[1], [0], [0], [1], [0, 0, 1, 1], [], []>} : vector<192x32xf32>, vector<32x256xf32>, vector<192x256xf32> -> vector<192x256xf32>
    %30 = arith.addf %24, %29 : vector<192x256xf32>
    %c0_30 = arith.constant 0 : index
    %c0_31 = arith.constant 0 : index
    %31 = vector.load %arg3[%c0_30, %c0_31] : memref<1x256xf32, #tpu.memory_space<vmem>>, vector<1x256xf32>
    %32 = vector.broadcast %31 : vector<1x256xf32> to vector<192x256xf32>
    %33 = arith.addf %30, %32 : vector<192x256xf32>
    %cst_32 = arith.constant 0.000000e+00 : f32
    %34 = vector.broadcast %cst_32 : f32 to vector<192x256xf32>
    %35 = arith.subf %34, %33 : vector<192x256xf32>
    %36 = math.exp %35 : vector<192x256xf32>
    %cst_33 = arith.constant 1.000000e+00 : f32
    %37 = vector.broadcast %cst_33 : f32 to vector<192x256xf32>
    %38 = arith.addf %37, %36 : vector<192x256xf32>
    %39 = tpu.reciprocal %38 {approx = true} : vector<192x256xf32> -> vector<192x256xf32>
    %40 = vector.extract_strided_slice %39 {offsets = [0, 0], sizes = [192, 128], strides = [1, 1]} : vector<192x256xf32> to vector<192x128xf32>
    %41 = vector.extract_strided_slice %39 {offsets = [0, 128], sizes = [192, 128], strides = [1, 1]} : vector<192x256xf32> to vector<192x128xf32>
    %42 = arith.maximumf %40, %41 : vector<192x128xf32>
    %43 = vector.shape_cast %42 : vector<192x128xf32> to vector<8x24x128xf32>
    %c0_34 = arith.constant 0 : index
    %c0_35 = arith.constant 0 : index
    %c0_36 = arith.constant 0 : index
    %44 = vector.load %arg13[%c0_34, %c0_35, %c0_36] : memref<8x32x128xf32, #tpu.memory_space<vmem>>, vector<8x24x128xf32>
    tpu.vector_store %arg13[%c0_34, %c0_35, %c0_36], %43 {strides = array<i32>} : memref<8x32x128xf32, #tpu.memory_space<vmem>>, vector<8x24x128xf32>,
    %cst_37 = arith.constant 0.000000e+00 : f32
    %45 = vector.broadcast %cst_37 : f32 to vector<8x8x128xf32>
    %c0_38 = arith.constant 0 : index
    %c24 = arith.constant 24 : index
    %c0_39 = arith.constant 0 : index
    %46 = vector.load %arg13[%c0_38, %c24, %c0_39] : memref<8x32x128xf32, #tpu.memory_space<vmem>>, vector<8x8x128xf32>
    tpu.vector_store %arg13[%c0_38, %c24, %c0_39], %45 {strides = array<i32>} : memref<8x32x128xf32, #tpu.memory_space<vmem>>, vector<8x8x128xf32>,
    %cst_40 = arith.constant 0.000000e+00 : f32
    %47 = vector.broadcast %cst_40 : f32 to vector<128x256xf32>
    %c0_41 = arith.constant 0 : index
    %c0_42 = arith.constant 0 : index
    %c0_43 = arith.constant 0 : index
    %48 = vector.load %arg13[%c0_41, %c0_42, %c0_43] : memref<8x32x128xf32, #tpu.memory_space<vmem>>, vector<8x16x128xf32>
    %c0_44 = arith.constant 0 : index
    %c1_45 = arith.constant 1 : index
    %c0_46 = arith.constant 0 : index
    %49 = vector.load %arg13[%c0_44, %c1_45, %c0_46] : memref<8x32x128xf32, #tpu.memory_space<vmem>>, vector<8x16x128xf32>
    %50 = arith.maximumf %48, %49 : vector<8x16x128xf32>
    %51 = vector.shape_cast %50 : vector<8x16x128xf32> to vector<128x128xf32>
    %c0_47 = arith.constant 0 : index
    %c0_48 = arith.constant 0 : index
    %c0_49 = arith.constant 0 : index
    %52 = vector.load %arg4[%c0_47, %c0_48, %c0_49] : memref<5x128x256xf32, #tpu.memory_space<vmem>>, vector<1x128x256xf32>
    %53 = vector.shape_cast %52 : vector<1x128x256xf32> to vector<128x256xf32>
    %cst_50 = arith.constant dense<0.000000e+00> : vector<128x256xf32>
    %54 = tpu.matmul %51, %53, %cst_50 {dimension_numbers = #tpu.dot_dimension_numbers<[1], [0], [0], [1], [0, 0, 1, 1], [], []>} : vector<128x128xf32>, vector<128x256xf32>, vector<128x256xf32> -> vector<128x256xf32>
    %55 = arith.addf %47, %54 : vector<128x256xf32>
    %c0_51 = arith.constant 0 : index
    %c2_52 = arith.constant 2 : index
    %c0_53 = arith.constant 0 : index
    %56 = vector.load %arg13[%c0_51, %c2_52, %c0_53] : memref<8x32x128xf32, #tpu.memory_space<vmem>>, vector<8x16x128xf32>
    %c0_54 = arith.constant 0 : index
    %c3_55 = arith.constant 3 : index
    %c0_56 = arith.constant 0 : index
    %57 = vector.load %arg13[%c0_54, %c3_55, %c0_56] : memref<8x32x128xf32, #tpu.memory_space<vmem>>, vector<8x16x128xf32>
    %58 = arith.maximumf %56, %57 : vector<8x16x128xf32>
    %59 = vector.shape_cast %58 : vector<8x16x128xf32> to vector<128x128xf32>
    %c1_57 = arith.constant 1 : index
    %c0_58 = arith.constant 0 : index
    %c0_59 = arith.constant 0 : index
    %60 = vector.load %arg4[%c1_57, %c0_58, %c0_59] : memref<5x128x256xf32, #tpu.memory_space<vmem>>, vector<1x128x256xf32>
    %61 = vector.shape_cast %60 : vector<1x128x256xf32> to vector<128x256xf32>
    %cst_60 = arith.constant dense<0.000000e+00> : vector<128x256xf32>
    %62 = tpu.matmul %59, %61, %cst_60 {dimension_numbers = #tpu.dot_dimension_numbers<[1], [0], [0], [1], [0, 0, 1, 1], [], []>} : vector<128x128xf32>, vector<128x256xf32>, vector<128x256xf32> -> vector<128x256xf32>
    %63 = arith.addf %55, %62 : vector<128x256xf32>
    %c0_61 = arith.constant 0 : index
    %c4_62 = arith.constant 4 : index
    %c0_63 = arith.constant 0 : index
    %64 = vector.load %arg13[%c0_61, %c4_62, %c0_63] : memref<8x32x128xf32, #tpu.memory_space<vmem>>, vector<8x16x128xf32>
    %c0_64 = arith.constant 0 : index
    %c5 = arith.constant 5 : index
    %c0_65 = arith.constant 0 : index
    %65 = vector.load %arg13[%c0_64, %c5, %c0_65] : memref<8x32x128xf32, #tpu.memory_space<vmem>>, vector<8x16x128xf32>
    %66 = arith.maximumf %64, %65 : vector<8x16x128xf32>
    %67 = vector.shape_cast %66 : vector<8x16x128xf32> to vector<128x128xf32>
    %c2_66 = arith.constant 2 : index
    %c0_67 = arith.constant 0 : index
    %c0_68 = arith.constant 0 : index
    %68 = vector.load %arg4[%c2_66, %c0_67, %c0_68] : memref<5x128x256xf32, #tpu.memory_space<vmem>>, vector<1x128x256xf32>
    %69 = vector.shape_cast %68 : vector<1x128x256xf32> to vector<128x256xf32>
    %cst_69 = arith.constant dense<0.000000e+00> : vector<128x256xf32>
    %70 = tpu.matmul %67, %69, %cst_69 {dimension_numbers = #tpu.dot_dimension_numbers<[1], [0], [0], [1], [0, 0, 1, 1], [], []>} : vector<128x128xf32>, vector<128x256xf32>, vector<128x256xf32> -> vector<128x256xf32>
    %71 = arith.addf %63, %70 : vector<128x256xf32>
    %c0_70 = arith.constant 0 : index
    %c6 = arith.constant 6 : index
    %c0_71 = arith.constant 0 : index
    %72 = vector.load %arg13[%c0_70, %c6, %c0_71] : memref<8x32x128xf32, #tpu.memory_space<vmem>>, vector<8x16x128xf32>
    %c0_72 = arith.constant 0 : index
    %c7 = arith.constant 7 : index
    %c0_73 = arith.constant 0 : index
    %73 = vector.load %arg13[%c0_72, %c7, %c0_73] : memref<8x32x128xf32, #tpu.memory_space<vmem>>, vector<8x16x128xf32>
    %74 = arith.maximumf %72, %73 : vector<8x16x128xf32>
    %75 = vector.shape_cast %74 : vector<8x16x128xf32> to vector<128x128xf32>
    %c3_74 = arith.constant 3 : index
    %c0_75 = arith.constant 0 : index
    %c0_76 = arith.constant 0 : index
    %76 = vector.load %arg4[%c3_74, %c0_75, %c0_76] : memref<5x128x256xf32, #tpu.memory_space<vmem>>, vector<1x128x256xf32>
    %77 = vector.shape_cast %76 : vector<1x128x256xf32> to vector<128x256xf32>
    %cst_77 = arith.constant dense<0.000000e+00> : vector<128x256xf32>
    %78 = tpu.matmul %75, %77, %cst_77 {dimension_numbers = #tpu.dot_dimension_numbers<[1], [0], [0], [1], [0, 0, 1, 1], [], []>} : vector<128x128xf32>, vector<128x256xf32>, vector<128x256xf32> -> vector<128x256xf32>
    %79 = arith.addf %71, %78 : vector<128x256xf32>
    %c0_78 = arith.constant 0 : index
    %c8 = arith.constant 8 : index
    %c0_79 = arith.constant 0 : index
    %80 = vector.load %arg13[%c0_78, %c8, %c0_79] : memref<8x32x128xf32, #tpu.memory_space<vmem>>, vector<8x16x128xf32>
    %c0_80 = arith.constant 0 : index
    %c9 = arith.constant 9 : index
    %c0_81 = arith.constant 0 : index
    %81 = vector.load %arg13[%c0_80, %c9, %c0_81] : memref<8x32x128xf32, #tpu.memory_space<vmem>>, vector<8x16x128xf32>
    %82 = arith.maximumf %80, %81 : vector<8x16x128xf32>
    %83 = vector.shape_cast %82 : vector<8x16x128xf32> to vector<128x128xf32>
    %c4_82 = arith.constant 4 : index
    %c0_83 = arith.constant 0 : index
    %c0_84 = arith.constant 0 : index
    %84 = vector.load %arg4[%c4_82, %c0_83, %c0_84] : memref<5x128x256xf32, #tpu.memory_space<vmem>>, vector<1x128x256xf32>
    %85 = vector.shape_cast %84 : vector<1x128x256xf32> to vector<128x256xf32>
    %cst_85 = arith.constant dense<0.000000e+00> : vector<128x256xf32>
    %86 = tpu.matmul %83, %85, %cst_85 {dimension_numbers = #tpu.dot_dimension_numbers<[1], [0], [0], [1], [0, 0, 1, 1], [], []>} : vector<128x128xf32>, vector<128x256xf32>, vector<128x256xf32> -> vector<128x256xf32>
    %87 = arith.addf %79, %86 : vector<128x256xf32>
    %c0_86 = arith.constant 0 : index
    %c0_87 = arith.constant 0 : index
    %88 = vector.load %arg5[%c0_86, %c0_87] : memref<1x256xf32, #tpu.memory_space<vmem>>, vector<1x256xf32>
    %89 = vector.broadcast %88 : vector<1x256xf32> to vector<128x256xf32>
    %90 = arith.addf %87, %89 : vector<128x256xf32>
    %cst_88 = arith.constant 0.000000e+00 : f32
    %91 = vector.broadcast %cst_88 : f32 to vector<128x256xf32>
    %92 = arith.subf %91, %90 : vector<128x256xf32>
    %93 = math.exp %92 : vector<128x256xf32>
    %cst_89 = arith.constant 1.000000e+00 : f32
    %94 = vector.broadcast %cst_89 : f32 to vector<128x256xf32>
    %95 = arith.addf %94, %93 : vector<128x256xf32>
    %96 = tpu.reciprocal %95 {approx = true} : vector<128x256xf32> -> vector<128x256xf32>
    %97 = vector.extract_strided_slice %96 {offsets = [0, 0], sizes = [128, 128], strides = [1, 1]} : vector<128x256xf32> to vector<128x128xf32>
    %98 = vector.extract_strided_slice %96 {offsets = [0, 128], sizes = [128, 128], strides = [1, 1]} : vector<128x256xf32> to vector<128x128xf32>
    %99 = arith.maximumf %97, %98 : vector<128x128xf32>
    %100 = vector.shape_cast %99 : vector<128x128xf32> to vector<8x16x128xf32>
    %c0_90 = arith.constant 0 : index
    %c0_91 = arith.constant 0 : index
    %c0_92 = arith.constant 0 : index
    %101 = vector.load %arg14[%c0_90, %c0_91, %c0_92] : memref<8x16x128xf32, #tpu.memory_space<vmem>>, vector<8x16x128xf32>
    tpu.vector_store %arg14[%c0_90, %c0_91, %c0_92], %100 {strides = array<i32>} : memref<8x16x128xf32, #tpu.memory_space<vmem>>, vector<8x16x128xf32>,
    %cst_93 = arith.constant 0.000000e+00 : f32
    %102 = vector.broadcast %cst_93 : f32 to vector<8x128xf32>
    %c0_94 = arith.constant 0 : index
    %c0_95 = arith.constant 0 : index
    %c0_96 = arith.constant 0 : index
    %103 = vector.load %arg14[%c0_94, %c0_95, %c0_96] : memref<8x16x128xf32, #tpu.memory_space<vmem>>, vector<8x1x128xf32>
    %104 = vector.shape_cast %103 : vector<8x1x128xf32> to vector<8x128xf32>
    %c0_97 = arith.constant 0 : index
    %c2_98 = arith.constant 2 : index
    %c0_99 = arith.constant 0 : index
    %105 = vector.load %arg14[%c0_97, %c2_98, %c0_99] : memref<8x16x128xf32, #tpu.memory_space<vmem>>, vector<8x1x128xf32>
    %106 = vector.shape_cast %105 : vector<8x1x128xf32> to vector<8x128xf32>
    %107 = arith.maximumf %104, %106 : vector<8x128xf32>
    %c0_100 = arith.constant 0 : index
    %c0_101 = arith.constant 0 : index
    %c0_102 = arith.constant 0 : index
    %108 = vector.load %arg6[%c0_100, %c0_101, %c0_102] : memref<4x128x128xf32, #tpu.memory_space<vmem>>, vector<1x128x128xf32>
    %109 = vector.shape_cast %108 : vector<1x128x128xf32> to vector<128x128xf32>
    %cst_103 = arith.constant dense<0.000000e+00> : vector<8x128xf32>
    %110 = tpu.matmul %107, %109, %cst_103 {dimension_numbers = #tpu.dot_dimension_numbers<[1], [0], [0], [1], [0, 0, 1, 1], [], []>} : vector<8x128xf32>, vector<128x128xf32>, vector<8x128xf32> -> vector<8x128xf32>
    %111 = arith.addf %102, %110 : vector<8x128xf32>
    %c0_104 = arith.constant 0 : index
    %c4_105 = arith.constant 4 : index
    %c0_106 = arith.constant 0 : index
    %112 = vector.load %arg14[%c0_104, %c4_105, %c0_106] : memref<8x16x128xf32, #tpu.memory_space<vmem>>, vector<8x1x128xf32>
    %113 = vector.shape_cast %112 : vector<8x1x128xf32> to vector<8x128xf32>
    %c0_107 = arith.constant 0 : index
    %c6_108 = arith.constant 6 : index
    %c0_109 = arith.constant 0 : index
    %114 = vector.load %arg14[%c0_107, %c6_108, %c0_109] : memref<8x16x128xf32, #tpu.memory_space<vmem>>, vector<8x1x128xf32>
    %115 = vector.shape_cast %114 : vector<8x1x128xf32> to vector<8x128xf32>
    %116 = arith.maximumf %113, %115 : vector<8x128xf32>
    %c1_110 = arith.constant 1 : index
    %c0_111 = arith.constant 0 : index
    %c0_112 = arith.constant 0 : index
    %117 = vector.load %arg6[%c1_110, %c0_111, %c0_112] : memref<4x128x128xf32, #tpu.memory_space<vmem>>, vector<1x128x128xf32>
    %118 = vector.shape_cast %117 : vector<1x128x128xf32> to vector<128x128xf32>
    %cst_113 = arith.constant dense<0.000000e+00> : vector<8x128xf32>
    %119 = tpu.matmul %116, %118, %cst_113 {dimension_numbers = #tpu.dot_dimension_numbers<[1], [0], [0], [1], [0, 0, 1, 1], [], []>} : vector<8x128xf32>, vector<128x128xf32>, vector<8x128xf32> -> vector<8x128xf32>
    %120 = arith.addf %111, %119 : vector<8x128xf32>
    %c0_114 = arith.constant 0 : index
    %c8_115 = arith.constant 8 : index
    %c0_116 = arith.constant 0 : index
    %121 = vector.load %arg14[%c0_114, %c8_115, %c0_116] : memref<8x16x128xf32, #tpu.memory_space<vmem>>, vector<8x1x128xf32>
    %122 = vector.shape_cast %121 : vector<8x1x128xf32> to vector<8x128xf32>
    %c0_117 = arith.constant 0 : index
    %c10 = arith.constant 10 : index
    %c0_118 = arith.constant 0 : index
    %123 = vector.load %arg14[%c0_117, %c10, %c0_118] : memref<8x16x128xf32, #tpu.memory_space<vmem>>, vector<8x1x128xf32>
    %124 = vector.shape_cast %123 : vector<8x1x128xf32> to vector<8x128xf32>
    %125 = arith.maximumf %122, %124 : vector<8x128xf32>
    %c2_119 = arith.constant 2 : index
    %c0_120 = arith.constant 0 : index
    %c0_121 = arith.constant 0 : index
    %126 = vector.load %arg6[%c2_119, %c0_120, %c0_121] : memref<4x128x128xf32, #tpu.memory_space<vmem>>, vector<1x128x128xf32>
    %127 = vector.shape_cast %126 : vector<1x128x128xf32> to vector<128x128xf32>
    %cst_122 = arith.constant dense<0.000000e+00> : vector<8x128xf32>
    %128 = tpu.matmul %125, %127, %cst_122 {dimension_numbers = #tpu.dot_dimension_numbers<[1], [0], [0], [1], [0, 0, 1, 1], [], []>} : vector<8x128xf32>, vector<128x128xf32>, vector<8x128xf32> -> vector<8x128xf32>
    %129 = arith.addf %120, %128 : vector<8x128xf32>
    %c0_123 = arith.constant 0 : index
    %c12 = arith.constant 12 : index
    %c0_124 = arith.constant 0 : index
    %130 = vector.load %arg14[%c0_123, %c12, %c0_124] : memref<8x16x128xf32, #tpu.memory_space<vmem>>, vector<8x1x128xf32>
    %131 = vector.shape_cast %130 : vector<8x1x128xf32> to vector<8x128xf32>
    %c0_125 = arith.constant 0 : index
    %c14 = arith.constant 14 : index
    %c0_126 = arith.constant 0 : index
    %132 = vector.load %arg14[%c0_125, %c14, %c0_126] : memref<8x16x128xf32, #tpu.memory_space<vmem>>, vector<8x1x128xf32>
    %133 = vector.shape_cast %132 : vector<8x1x128xf32> to vector<8x128xf32>
    %134 = arith.maximumf %131, %133 : vector<8x128xf32>
    %c3_127 = arith.constant 3 : index
    %c0_128 = arith.constant 0 : index
    %c0_129 = arith.constant 0 : index
    %135 = vector.load %arg6[%c3_127, %c0_128, %c0_129] : memref<4x128x128xf32, #tpu.memory_space<vmem>>, vector<1x128x128xf32>
    %136 = vector.shape_cast %135 : vector<1x128x128xf32> to vector<128x128xf32>
    %cst_130 = arith.constant dense<0.000000e+00> : vector<8x128xf32>
    %137 = tpu.matmul %134, %136, %cst_130 {dimension_numbers = #tpu.dot_dimension_numbers<[1], [0], [0], [1], [0, 0, 1, 1], [], []>} : vector<8x128xf32>, vector<128x128xf32>, vector<8x128xf32> -> vector<8x128xf32>
    %138 = arith.addf %129, %137 : vector<8x128xf32>
    %c0_131 = arith.constant 0 : index
    %c0_132 = arith.constant 0 : index
    %139 = vector.load %arg7[%c0_131, %c0_132] : memref<1x128xf32, #tpu.memory_space<vmem>>, vector<1x128xf32>
    %140 = vector.broadcast %139 : vector<1x128xf32> to vector<8x128xf32>
    %141 = arith.addf %138, %140 : vector<8x128xf32>
    %cst_133 = arith.constant 0.000000e+00 : f32
    %142 = vector.broadcast %cst_133 : f32 to vector<8x128xf32>
    %143 = arith.subf %142, %141 : vector<8x128xf32>
    %144 = math.exp %143 : vector<8x128xf32>
    %cst_134 = arith.constant 1.000000e+00 : f32
    %145 = vector.broadcast %cst_134 : f32 to vector<8x128xf32>
    %146 = arith.addf %145, %144 : vector<8x128xf32>
    %147 = tpu.reciprocal %146 {approx = true} : vector<8x128xf32> -> vector<8x128xf32>
    %c0_135 = arith.constant 0 : index
    %c0_136 = arith.constant 0 : index
    %148 = vector.load %arg8[%c0_135, %c0_136] : memref<128x128xf32, #tpu.memory_space<vmem>>, vector<128x128xf32>
    %cst_137 = arith.constant dense<0.000000e+00> : vector<8x128xf32>
    %149 = tpu.matmul %147, %148, %cst_137 {dimension_numbers = #tpu.dot_dimension_numbers<[1], [0], [0], [1], [0, 0, 1, 1], [], []>} : vector<8x128xf32>, vector<128x128xf32>, vector<8x128xf32> -> vector<8x128xf32>
    %c0_138 = arith.constant 0 : index
    %c0_139 = arith.constant 0 : index
    %150 = vector.load %arg9[%c0_138, %c0_139] : memref<1x128xf32, #tpu.memory_space<vmem>>, vector<1x128xf32>
    %151 = vector.broadcast %150 : vector<1x128xf32> to vector<8x128xf32>
    %152 = arith.addf %149, %151 : vector<8x128xf32>
    %cst_140 = arith.constant 0.000000e+00 : f32
    %153 = vector.broadcast %cst_140 : f32 to vector<8x128xf32>
    %154 = arith.subf %153, %152 : vector<8x128xf32>
    %155 = math.exp %154 : vector<8x128xf32>
    %cst_141 = arith.constant 1.000000e+00 : f32
    %156 = vector.broadcast %cst_141 : f32 to vector<8x128xf32>
    %157 = arith.addf %156, %155 : vector<8x128xf32>
    %158 = tpu.reciprocal %157 {approx = true} : vector<8x128xf32> -> vector<8x128xf32>
    %c0_142 = arith.constant 0 : index
    %c0_143 = arith.constant 0 : index
    %159 = vector.load %arg10[%c0_142, %c0_143] : memref<128x128xf32, #tpu.memory_space<vmem>>, vector<128x128xf32>
    %cst_144 = arith.constant dense<0.000000e+00> : vector<8x128xf32>
    %160 = tpu.matmul %158, %159, %cst_144 {dimension_numbers = #tpu.dot_dimension_numbers<[1], [0], [0], [1], [0, 0, 1, 1], [], []>} : vector<8x128xf32>, vector<128x128xf32>, vector<8x128xf32> -> vector<8x128xf32>
    %c0_145 = arith.constant 0 : index
    %c0_146 = arith.constant 0 : index
    %161 = vector.load %arg11[%c0_145, %c0_146] : memref<1x128xf32, #tpu.memory_space<vmem>>, vector<1x128xf32>
    %162 = vector.broadcast %161 : vector<1x128xf32> to vector<8x128xf32>
    %163 = arith.addf %160, %162 : vector<8x128xf32>
    %c0_147 = arith.constant 0 : index
    %c0_148 = arith.constant 0 : index
    %164 = vector.load %arg12[%c0_147, %c0_148] : memref<8x128xf32, #tpu.memory_space<vmem>>, vector<8x128xf32>
    tpu.vector_store %arg12[%c0_147, %c0_148], %163 {strides = array<i32>} : memref<8x128xf32, #tpu.memory_space<vmem>>, vector<8x128xf32>,
    return
  }
  func.func @transform_0(%arg0: i32) -> (i32, i32, i32) {
    %c0_i32 = arith.constant 0 : i32
    %c0_i32_0 = arith.constant 0 : i32
    %c0_i32_1 = arith.constant 0 : i32
    return %arg0, %c0_i32, %c0_i32_0 : i32, i32, i32
  }
  func.func @transform_1(%arg0: i32) -> (i32, i32, i32) {
    %c0_i32 = arith.constant 0 : i32
    %c0_i32_0 = arith.constant 0 : i32
    %c0_i32_1 = arith.constant 0 : i32
    %c0_i32_2 = arith.constant 0 : i32
    return %c0_i32, %c0_i32_0, %c0_i32_1 : i32, i32, i32
  }
  func.func @transform_2(%arg0: i32) -> (i32, i32) {
    %c0_i32 = arith.constant 0 : i32
    %c0_i32_0 = arith.constant 0 : i32
    %c0_i32_1 = arith.constant 0 : i32
    return %c0_i32, %c0_i32_0 : i32, i32
  }
  func.func @transform_3(%arg0: i32) -> (i32, i32, i32) {
    %c0_i32 = arith.constant 0 : i32
    %c0_i32_0 = arith.constant 0 : i32
    %c0_i32_1 = arith.constant 0 : i32
    %c0_i32_2 = arith.constant 0 : i32
    return %c0_i32, %c0_i32_0, %c0_i32_1 : i32, i32, i32
  }
  func.func @transform_4(%arg0: i32) -> (i32, i32) {
    %c0_i32 = arith.constant 0 : i32
    %c0_i32_0 = arith.constant 0 : i32
    %c0_i32_1 = arith.constant 0 : i32
    return %c0_i32, %c0_i32_0 : i32, i32
  }
  func.func @transform_5(%arg0: i32) -> (i32, i32, i32) {
    %c0_i32 = arith.constant 0 : i32
    %c0_i32_0 = arith.constant 0 : i32
    %c0_i32_1 = arith.constant 0 : i32
    %c0_i32_2 = arith.constant 0 : i32
    return %c0_i32, %c0_i32_0, %c0_i32_1 : i32, i32, i32
  }
  func.func @transform_6(%arg0: i32) -> (i32, i32) {
    %c0_i32 = arith.constant 0 : i32
    %c0_i32_0 = arith.constant 0 : i32
    %c0_i32_1 = arith.constant 0 : i32
    return %c0_i32, %c0_i32_0 : i32, i32
  }
  func.func @transform_7(%arg0: i32) -> (i32, i32) {
    %c0_i32 = arith.constant 0 : i32
    %c0_i32_0 = arith.constant 0 : i32
    %c0_i32_1 = arith.constant 0 : i32
    return %c0_i32, %c0_i32_0 : i32, i32
  }
  func.func @transform_8(%arg0: i32) -> (i32, i32) {
    %c0_i32 = arith.constant 0 : i32
    %c0_i32_0 = arith.constant 0 : i32
    %c0_i32_1 = arith.constant 0 : i32
    return %c0_i32, %c0_i32_0 : i32, i32
  }
  func.func @transform_9(%arg0: i32) -> (i32, i32) {
    %c0_i32 = arith.constant 0 : i32
    %c0_i32_0 = arith.constant 0 : i32
    %c0_i32_1 = arith.constant 0 : i32
    return %c0_i32, %c0_i32_0 : i32, i32
  }
  func.func @transform_10(%arg0: i32) -> (i32, i32) {
    %c0_i32 = arith.constant 0 : i32
    %c0_i32_0 = arith.constant 0 : i32
    %c0_i32_1 = arith.constant 0 : i32
    return %c0_i32, %c0_i32_0 : i32, i32
  }
  func.func @transform_11(%arg0: i32) -> (i32, i32) {
    %c0_i32 = arith.constant 0 : i32
    %c0_i32_0 = arith.constant 0 : i32
    return %arg0, %c0_i32 : i32, i32
  }
}

</mosaic_0001>

<llo_original>
// kernel: lenet_forward.1
$region0: #{lenet_forward.1}
  #allocation0 [shape = 'u32[]', space=smem, size = 0x4, offset = 0x4, fixed_abs, tag = 'smem constant byte address 0x4 - core index']
  #allocation1 [shape = 'u32[72,128]{1,0:T(1,128)}', space=vmem, size = 0x9000, scoped, tag = 'internal scratch']
  #allocation2 [shape = 'f32[8,32,128]{2,1,0:T(8,128)}', space=vmem, size = 0x20000, scoped, tag = 'scratch operand']
  #allocation3 [shape = 'f32[8,16,128]{2,1,0:T(8,128)}', space=vmem, size = 0x10000, scoped, tag = 'scratch operand']
  %s0 = inlined_call_operand.vmem [shape: f32[8,32,32], index: 0, kind: input, shape index: {}]
  %s1 = inlined_call_operand.hbm [shape: f32[5,32,256], index: 1, kind: input, shape index: {}]
  %s2 = inlined_call_operand.vmem [shape: f32[1,256], index: 2, kind: input, shape index: {}]
  %s3 = inlined_call_operand.hbm [shape: f32[5,128,256], index: 3, kind: input, shape index: {}]
  %s4 = inlined_call_operand.vmem [shape: f32[1,256], index: 4, kind: input, shape index: {}]
  %s5 = inlined_call_operand.vmem [shape: f32[4,128,128], index: 5, kind: input, shape index: {}]
  %s6 = inlined_call_operand.vmem [shape: f32[1,128], index: 6, kind: input, shape index: {}]
  %s7 = inlined_call_operand.hbm [shape: f32[128,128], index: 7, kind: input, shape index: {}]
  %s8 = inlined_call_operand.vmem [shape: f32[1,128], index: 8, kind: input, shape index: {}]
  %s9 = inlined_call_operand.hbm [shape: f32[128,128], index: 9, kind: input, shape index: {}]
  %s10 = inlined_call_operand.vmem [shape: f32[1,128], index: 10, kind: input, shape index: {}]
  %s11 = inlined_call_operand.vmem [shape: f32[8,128], index: 11, kind: output, shape index: {}]
  %s12 = sld [smem:[#allocation0]]
  $region70: #{lenet_forward.1} parent=0
    _
  %s14 = ssub.s32 1, %s12
  %s15 = scalar_select 0, %s14, %s12
  $region1: #{lenet_forward.1} parent=0
    #allocation4 [shape = 'u8[163840]{0}', space=vmem, size = 0x28000, scoped, tag = 'input window, operand 1, single buffered']
    #allocation5 [shape = 's32[1]{0}', space=sflag, size = 0x4, scoped, tag = 'scoped memory for lenet_forward.1']
    #allocation6 [shape = 'u8[655360]{0}', space=vmem, size = 0xa0000, scoped, tag = 'input window, operand 3, single buffered']
    #allocation7 [shape = 's32[1]{0}', space=sflag, size = 0x4, scoped, tag = 'scoped memory for lenet_forward.1']
    #allocation8 [shape = 'u8[65536]{0}', space=vmem, size = 0x10000, scoped, tag = 'input window, operand 7, single buffered']
    #allocation9 [shape = 'u8[65536]{0}', space=vmem, size = 0x10000, scoped, tag = 'input window, operand 9, single buffered']
    #allocation10 [shape = 's32[1]{0}', space=sflag, size = 0x4, scoped, tag = 'scoped memory for lenet_forward.1']
    %16 = vsyncpa [#allocation5], 0
    %17 = vsyncpa [#allocation7], 0
    %18 = vsyncpa [#allocation10], 0
    // Predicated region
    $region2: #{lenet_forward.1} parent=1 // pred_check
      _
    $region3: #{lenet_forward.1} parent=1 // pred_check_branch
      %20 = sbr.rel (0) target = $region5
    $region4: #{lenet_forward.1} parent=1 // pred_region
      _
    $region5: #{lenet_forward.1} parent=1 // pred_fallthru
      _
    // Predicated region
    $region6: #{lenet_forward.1} parent=1 // pred_check
      _
    $region7: #{lenet_forward.1} parent=1 // pred_check_branch
      %22 = sbr.rel (0) target = $region9
    $region8: #{lenet_forward.1} parent=1 // pred_region
      %24 = vsyncadd [#allocation5], 0
      %s25 = sshll.u32 %s1, 4
      %s26 = int_to_ptr.hbm [resolvable:$true] %s25
      %s27 = sshll.u32 [#allocation4], 4
      %s28 = int_to_ptr.vmem [resolvable:$true] %s27
      %33 = dma.hbm_to_vmem [thread:$0]  %s26, 5120, %s28, [#allocation5], 256, 256, 16
    $region9: #{lenet_forward.1} parent=1 // pred_fallthru
      _
    // Predicated region
    $region10: #{lenet_forward.1} parent=1 // pred_check
      _
    $region11: #{lenet_forward.1} parent=1 // pred_check_branch
      %35 = sbr.rel (0) target = $region13
    $region12: #{lenet_forward.1} parent=1 // pred_region
      _
    $region13: #{lenet_forward.1} parent=1 // pred_fallthru
      _
    // Predicated region
    $region14: #{lenet_forward.1} parent=1 // pred_check
      _
    $region15: #{lenet_forward.1} parent=1 // pred_check_branch
      %37 = sbr.rel (0) target = $region17
    $region16: #{lenet_forward.1} parent=1 // pred_region
      %39 = vsyncadd [#allocation7], 0
      %s40 = sshll.u32 %s3, 4
      %s41 = int_to_ptr.hbm [resolvable:$true] %s40
      %s42 = sshll.u32 [#allocation6], 4
      %s43 = int_to_ptr.vmem [resolvable:$true] %s42
      %48 = dma.hbm_to_vmem [thread:$0]  %s41, 20480, %s43, [#allocation7], 256, 256, 16
    $region17: #{lenet_forward.1} parent=1 // pred_fallthru
      _
    // Predicated region
    $region18: #{lenet_forward.1} parent=1 // pred_check
      _
    $region19: #{lenet_forward.1} parent=1 // pred_check_branch
      %50 = sbr.rel (0) target = $region21
    $region20: #{lenet_forward.1} parent=1 // pred_region
      _
    $region21: #{lenet_forward.1} parent=1 // pred_fallthru
      _
    // Predicated region
    $region22: #{lenet_forward.1} parent=1 // pred_check
      _
    $region23: #{lenet_forward.1} parent=1 // pred_check_branch
      %52 = sbr.rel (0) target = $region25
    $region24: #{lenet_forward.1} parent=1 // pred_region
      _
    $region25: #{lenet_forward.1} parent=1 // pred_fallthru
      _
    // Predicated region
    $region26: #{lenet_forward.1} parent=1 // pred_check
      _
    $region27: #{lenet_forward.1} parent=1 // pred_check_branch
      %54 = sbr.rel (0) target = $region29
    $region28: #{lenet_forward.1} parent=1 // pred_region
      _
    $region29: #{lenet_forward.1} parent=1 // pred_fallthru
      _
    // Predicated region
    $region30: #{lenet_forward.1} parent=1 // pred_check
      _
    $region31: #{lenet_forward.1} parent=1 // pred_check_branch
      %56 = sbr.rel (0) target = $region33
    $region32: #{lenet_forward.1} parent=1 // pred_region
      %58 = vsyncadd [#allocation7], 0
      %s59 = sshll.u32 %s7, 4
      %s60 = int_to_ptr.hbm [resolvable:$true] %s59
      %s61 = sshll.u32 [#allocation8], 4
      %s62 = int_to_ptr.vmem [resolvable:$true] %s61
      %67 = dma.hbm_to_vmem [thread:$0]  %s60, 2048, %s62, [#allocation7], 128, 128, 8
    $region33: #{lenet_forward.1} parent=1 // pred_fallthru
      _
    // Predicated region
    $region34: #{lenet_forward.1} parent=1 // pred_check
      _
    $region35: #{lenet_forward.1} parent=1 // pred_check_branch
      %69 = sbr.rel (0) target = $region37
    $region36: #{lenet_forward.1} parent=1 // pred_region
      _
    $region37: #{lenet_forward.1} parent=1 // pred_fallthru
      _
    // Predicated region
    $region38: #{lenet_forward.1} parent=1 // pred_check
      _
    $region39: #{lenet_forward.1} parent=1 // pred_check_branch
      %71 = sbr.rel (0) target = $region41
    $region40: #{lenet_forward.1} parent=1 // pred_region
      %73 = vsyncadd [#allocation10], 0
      %s74 = sshll.u32 %s9, 4
      %s75 = int_to_ptr.hbm [resolvable:$true] %s74
      %s76 = sshll.u32 [#allocation9], 4
      %s77 = int_to_ptr.vmem [resolvable:$true] %s76
      %82 = dma.hbm_to_vmem [thread:$0]  %s75, 2048, %s77, [#allocation10], 128, 128, 8
    $region41: #{lenet_forward.1} parent=1 // pred_fallthru
      _
    // Predicated region
    $region42: #{lenet_forward.1} parent=1 // pred_check
      _
    $region43: #{lenet_forward.1} parent=1 // pred_check_branch
      %84 = sbr.rel (0) target = $region45
    $region44: #{lenet_forward.1} parent=1 // pred_region
      _
    $region45: #{lenet_forward.1} parent=1 // pred_fallthru
      _
    // Predicated region
    $region46: #{lenet_forward.1} parent=1 // pred_check
      _
    $region47: #{lenet_forward.1} parent=1 // pred_check_branch
      %86 = sbr.rel (0) target = $region49
    $region48: #{lenet_forward.1} parent=1 // pred_region
      %88 = dma.done [#allocation5], 5120
    $region49: #{lenet_forward.1} parent=1 // pred_fallthru
      _
    // Predicated region
    $region50: #{lenet_forward.1} parent=1 // pred_check
      _
    $region51: #{lenet_forward.1} parent=1 // pred_check_branch
      %90 = sbr.rel (0) target = $region53
    $region52: #{lenet_forward.1} parent=1 // pred_region
      %92 = dma.done [#allocation7], 20480
    $region53: #{lenet_forward.1} parent=1 // pred_fallthru
      _
    // Predicated region
    $region54: #{lenet_forward.1} parent=1 // pred_check
      _
    $region55: #{lenet_forward.1} parent=1 // pred_check_branch
      %94 = sbr.rel (0) target = $region57
    $region56: #{lenet_forward.1} parent=1 // pred_region
      %96 = dma.done [#allocation7], 2048
    $region57: #{lenet_forward.1} parent=1 // pred_fallthru
      _
    // Predicated region
    $region58: #{lenet_forward.1} parent=1 // pred_check
      _
    $region59: #{lenet_forward.1} parent=1 // pred_check_branch
      %98 = sbr.rel (0) target = $region61
    $region60: #{lenet_forward.1} parent=1 // pred_region
      %100 = dma.done [#allocation10], 2048
    $region61: #{lenet_forward.1} parent=1 // pred_fallthru
      _
    %v101 = vld [vmem:[%s0] sm:$0xff]
    %v102 = vld [vmem:[%s0 + $0x8] sm:$0xff]
    %v103 = vld [vmem:[%s0 + $0x10] sm:$0xff]
    %v104 = vld [vmem:[%s0 + $0x20] sm:$0xff]
    %v105 = vld [vmem:[%s0 + $0x28] sm:$0xff]
    %v106 = vld [vmem:[%s0 + $0x30] sm:$0xff]
    %v107 = vld [vmem:[%s0 + $0x40] sm:$0xff]
    %v108 = vld [vmem:[%s0 + $0x48] sm:$0xff]
    %v109 = vld [vmem:[%s0 + $0x50] sm:$0xff]
    %v110 = vld [vmem:[%s0 + $0x60] sm:$0xff]
    %v111 = vld [vmem:[%s0 + $0x68] sm:$0xff]
    %v112 = vld [vmem:[%s0 + $0x70] sm:$0xff]
    %v113 = vld [vmem:[%s0 + $0x80] sm:$0xff]
    %v114 = vld [vmem:[%s0 + $0x88] sm:$0xff]
    %v115 = vld [vmem:[%s0 + $0x90] sm:$0xff]
    %v116 = vld [vmem:[%s0 + $0xa0] sm:$0xff]
    %v117 = vld [vmem:[%s0 + $0xa8] sm:$0xff]
    %v118 = vld [vmem:[%s0 + $0xb0] sm:$0xff]
    %v119 = vld [vmem:[%s0 + $0xc0] sm:$0xff]
    %v120 = vld [vmem:[%s0 + $0xc8] sm:$0xff]
    %v121 = vld [vmem:[%s0 + $0xd0] sm:$0xff]
    %v122 = vld [vmem:[%s0 + $0xe0] sm:$0xff]
    %v123 = vld [vmem:[%s0 + $0xe8] sm:$0xff]
    %v124 = vld [vmem:[%s0 + $0xf0] sm:$0xff]
    %v125 = vld [vmem:[#allocation4] sm:$0xff]
    %v126 = vld [vmem:[#allocation4 + $0x8] sm:$0xff]
    %v127 = vld [vmem:[#allocation4 + $0x10] sm:$0xff]
    %v128 = vld [vmem:[#allocation4 + $0x18] sm:$0xff]
    %v129 = vld [vmem:[#allocation4 + $0x20] sm:$0xff]
    %v130 = vld [vmem:[#allocation4 + $0x28] sm:$0xff]
    %v131 = vld [vmem:[#allocation4 + $0x30] sm:$0xff]
    %v132 = vld [vmem:[#allocation4 + $0x38] sm:$0xff]
    %v133 = vld [vmem:[%s0 + $0x1] sm:$0xff]
    %v134 = vld [vmem:[%s0 + $0x9] sm:$0xff]
    %v135 = vld [vmem:[%s0 + $0x11] sm:$0xff]
    %v136 = vld [vmem:[%s0 + $0x21] sm:$0xff]
    %v137 = vld [vmem:[%s0 + $0x29] sm:$0xff]
    %v138 = vld [vmem:[%s0 + $0x31] sm:$0xff]
    %v139 = vld [vmem:[%s0 + $0x41] sm:$0xff]
    %v140 = vld [vmem:[%s0 + $0x49] sm:$0xff]
    %v141 = vld [vmem:[%s0 + $0x51] sm:$0xff]
    %v142 = vld [vmem:[%s0 + $0x61] sm:$0xff]
    %v143 = vld [vmem:[%s0 + $0x69] sm:$0xff]
    %v144 = vld [vmem:[%s0 + $0x71] sm:$0xff]
    %v145 = vld [vmem:[%s0 + $0x81] sm:$0xff]
    %v146 = vld [vmem:[%s0 + $0x89] sm:$0xff]
    %v147 = vld [vmem:[%s0 + $0x91] sm:$0xff]
    %v148 = vld [vmem:[%s0 + $0xa1] sm:$0xff]
    %v149 = vld [vmem:[%s0 + $0xa9] sm:$0xff]
    %v150 = vld [vmem:[%s0 + $0xb1] sm:$0xff]
    %v151 = vld [vmem:[%s0 + $0xc1] sm:$0xff]
    %v152 = vld [vmem:[%s0 + $0xc9] sm:$0xff]
    %v153 = vld [vmem:[%s0 + $0xd1] sm:$0xff]
    %v154 = vld [vmem:[%s0 + $0xe1] sm:$0xff]
    %v155 = vld [vmem:[%s0 + $0xe9] sm:$0xff]
    %v156 = vld [vmem:[%s0 + $0xf1] sm:$0xff]
    %s157 = scalar_lea.vmem [#allocation4], 64
    %v158 = vld [vmem:[%s157] sm:$0xff]
    %v159 = vld [vmem:[%s157 + $0x8] sm:$0xff]
    %v160 = vld [vmem:[%s157 + $0x10] sm:$0xff]
    %v161 = vld [vmem:[%s157 + $0x18] sm:$0xff]
    %v162 = vld [vmem:[%s157 + $0x20] sm:$0xff]
    %v163 = vld [vmem:[%s157 + $0x28] sm:$0xff]
    %v164 = vld [vmem:[%s157 + $0x30] sm:$0xff]
    %v165 = vld [vmem:[%s157 + $0x38] sm:$0xff]
    %vm166 = vcmask 261120
    %v168 = vsel %vm166, %v133, 0
    %v171 = vsel %vm166, %v134, 0
    %v174 = vsel %vm166, %v135, 0
    %v177 = vsel %vm166, %v136, 0
    %v180 = vsel %vm166, %v137, 0
    %v183 = vsel %vm166, %v138, 0
    %v186 = vsel %vm166, %v139, 0
    %v189 = vsel %vm166, %v140, 0
    %v192 = vsel %vm166, %v141, 0
    %v195 = vsel %vm166, %v142, 0
    %v198 = vsel %vm166, %v143, 0
    %v201 = vsel %vm166, %v144, 0
    %v204 = vsel %vm166, %v145, 0
    %v207 = vsel %vm166, %v146, 0
    %v210 = vsel %vm166, %v147, 0
    %v213 = vsel %vm166, %v148, 0
    %v216 = vsel %vm166, %v149, 0
    %v219 = vsel %vm166, %v150, 0
    %v222 = vsel %vm166, %v151, 0
    %v225 = vsel %vm166, %v152, 0
    %v228 = vsel %vm166, %v153, 0
    %v231 = vsel %vm166, %v154, 0
    %v234 = vsel %vm166, %v155, 0
    %v237 = vsel %vm166, %v156, 0
    %239 = vmatpush.msra.mxu0 0.0
    %240 = vmatpush.msra.mxu0 0.0
    %241 = vmatpush.msra.mxu0 0.0
    %242 = vmatpush.msra.mxu0 0.0
    %243 = vmatpush.msra.mxu0 0.0
    %244 = vmatpush.msra.mxu0 0.0
    %245 = vmatpush.msra.mxu0 0.0
    %246 = vmatpush.msra.mxu0 0.0
    %247 = vmatpush.msra.mxu0 0.0
    %248 = vmatpush.msra.mxu0 0.0
    %249 = vmatpush.msra.mxu0 0.0
    %250 = vmatpush.msra.mxu0 0.0
    %251 = vmatpush.msra.mxu0 %v164
    %252 = vmatpush.msra.mxu0 %v162
    %253 = vmatpush.msra.mxu0 %v160
    %254 = vmatpush.msra.mxu0 %v158
    %255 = vmatmul.f32.gmra.mxu0 %v168
    %v256 = vpop.f32.mrf.mxu0
    %v257 = vadd.f32 0.0, %v256
    %258 = vmatmul.f32.gmra.mxu0 %v171
    %v259 = vpop.f32.mrf.mxu0
    %v260 = vadd.f32 0.0, %v259
    %261 = vmatmul.f32.gmra.mxu0 %v174
    %v262 = vpop.f32.mrf.mxu0
    %v263 = vadd.f32 0.0, %v262
    %264 = vmatmul.f32.gmra.mxu0 %v177
    %v265 = vpop.f32.mrf.mxu0
    %v266 = vadd.f32 0.0, %v265
    %267 = vmatmul.f32.gmra.mxu0 %v180
    %v268 = vpop.f32.mrf.mxu0
    %v269 = vadd.f32 0.0, %v268
    %270 = vmatmul.f32.gmra.mxu0 %v183
    %v271 = vpop.f32.mrf.mxu0
    %v272 = vadd.f32 0.0, %v271
    %273 = vmatmul.f32.gmra.mxu0 %v186
    %v274 = vpop.f32.mrf.mxu0
    %v275 = vadd.f32 0.0, %v274
    %276 = vmatmul.f32.gmra.mxu0 %v189
    %v277 = vpop.f32.mrf.mxu0
    %v278 = vadd.f32 0.0, %v277
    %279 = vmatmul.f32.gmra.mxu0 %v192
    %v280 = vpop.f32.mrf.mxu0
    %v281 = vadd.f32 0.0, %v280
    %282 = vmatmul.f32.gmra.mxu0 %v195
    %v283 = vpop.f32.mrf.mxu0
    %v284 = vadd.f32 0.0, %v283
    %285 = vmatmul.f32.gmra.mxu0 %v198
    %v286 = vpop.f32.mrf.mxu0
    %v287 = vadd.f32 0.0, %v286
    %288 = vmatmul.f32.gmra.mxu0 %v201
    %v289 = vpop.f32.mrf.mxu0
    %v290 = vadd.f32 0.0, %v289
    %291 = vmatmul.f32.gmra.mxu0 %v204
    %v292 = vpop.f32.mrf.mxu0
    %v293 = vadd.f32 0.0, %v292
    %294 = vmatmul.f32.gmra.mxu0 %v207
    %v295 = vpop.f32.mrf.mxu0
    %v296 = vadd.f32 0.0, %v295
    %297 = vmatmul.f32.gmra.mxu0 %v210
    %v298 = vpop.f32.mrf.mxu0
    %v299 = vadd.f32 0.0, %v298
    %300 = vmatmul.f32.gmra.mxu0 %v213
    %v301 = vpop.f32.mrf.mxu0
    %v302 = vadd.f32 0.0, %v301
    %303 = vmatmul.f32.gmra.mxu0 %v216
    %v304 = vpop.f32.mrf.mxu0
    %v305 = vadd.f32 0.0, %v304
    %306 = vmatmul.f32.gmra.mxu0 %v219
    %v307 = vpop.f32.mrf.mxu0
    %v308 = vadd.f32 0.0, %v307
    %309 = vmatmul.f32.gmra.mxu0 %v222
    %v310 = vpop.f32.mrf.mxu0
    %v311 = vadd.f32 0.0, %v310
    %312 = vmatmul.f32.gmra.mxu0 %v225
    %v313 = vpop.f32.mrf.mxu0
    %v314 = vadd.f32 0.0, %v313
    %315 = vmatmul.f32.gmra.mxu0 %v228
    %v316 = vpop.f32.mrf.mxu0
    %v317 = vadd.f32 0.0, %v316
    %318 = vmatmul.f32.gmra.mxu0 %v231
    %v319 = vpop.f32.mrf.mxu0
    %v320 = vadd.f32 0.0, %v319
    %321 = vmatmul.f32.gmra.mxu0 %v234
    %v322 = vpop.f32.mrf.mxu0
    %v323 = vadd.f32 0.0, %v322
    %324 = vmatmul.f32.gmra.mxu0 %v237
    %v325 = vpop.f32.mrf.mxu0
    %v326 = vadd.f32 0.0, %v325
    %327 = vdwg.mxu0
    %328 = vmatpush.msra.mxu0 0.0
    %329 = vmatpush.msra.mxu0 0.0
    %330 = vmatpush.msra.mxu0 0.0
    %331 = vmatpush.msra.mxu0 0.0
    %332 = vmatpush.msra.mxu0 0.0
    %333 = vmatpush.msra.mxu0 0.0
    %334 = vmatpush.msra.mxu0 0.0
    %335 = vmatpush.msra.mxu0 0.0
    %336 = vmatpush.msra.mxu0 0.0
    %337 = vmatpush.msra.mxu0 0.0
    %338 = vmatpush.msra.mxu0 0.0
    %339 = vmatpush.msra.mxu0 0.0
    %340 = vmatpush.msra.mxu0 %v165
    %341 = vmatpush.msra.mxu0 %v163
    %342 = vmatpush.msra.mxu0 %v161
    %343 = vmatpush.msra.mxu0 %v159
    %344 = vmatmul.f32.gmra.mxu0 %v168
    %v345 = vpop.f32.mrf.mxu0
    %v346 = vadd.f32 0.0, %v345
    %347 = vmatmul.f32.gmra.mxu0 %v171
    %v348 = vpop.f32.mrf.mxu0
    %v349 = vadd.f32 0.0, %v348
    %350 = vmatmul.f32.gmra.mxu0 %v174
    %v351 = vpop.f32.mrf.mxu0
    %v352 = vadd.f32 0.0, %v351
    %353 = vmatmul.f32.gmra.mxu0 %v177
    %v354 = vpop.f32.mrf.mxu0
    %v355 = vadd.f32 0.0, %v354
    %356 = vmatmul.f32.gmra.mxu0 %v180
    %v357 = vpop.f32.mrf.mxu0
    %v358 = vadd.f32 0.0, %v357
    %359 = vmatmul.f32.gmra.mxu0 %v183
    %v360 = vpop.f32.mrf.mxu0
    %v361 = vadd.f32 0.0, %v360
    %362 = vmatmul.f32.gmra.mxu0 %v186
    %v363 = vpop.f32.mrf.mxu0
    %v364 = vadd.f32 0.0, %v363
    %365 = vmatmul.f32.gmra.mxu0 %v189
    %v366 = vpop.f32.mrf.mxu0
    %v367 = vadd.f32 0.0, %v366
    %368 = vmatmul.f32.gmra.mxu0 %v192
    %v369 = vpop.f32.mrf.mxu0
    %v370 = vadd.f32 0.0, %v369
    %371 = vmatmul.f32.gmra.mxu0 %v195
    %v372 = vpop.f32.mrf.mxu0
    %v373 = vadd.f32 0.0, %v372
    %374 = vmatmul.f32.gmra.mxu0 %v198
    %v375 = vpop.f32.mrf.mxu0
    %v376 = vadd.f32 0.0, %v375
    %377 = vmatmul.f32.gmra.mxu0 %v201
    %v378 = vpop.f32.mrf.mxu0
    %v379 = vadd.f32 0.0, %v378
    %380 = vmatmul.f32.gmra.mxu0 %v204
    %v381 = vpop.f32.mrf.mxu0
    %v382 = vadd.f32 0.0, %v381
    %383 = vmatmul.f32.gmra.mxu0 %v207
    %v384 = vpop.f32.mrf.mxu0
    %v385 = vadd.f32 0.0, %v384
    %386 = vmatmul.f32.gmra.mxu0 %v210
    %v387 = vpop.f32.mrf.mxu0
    %v388 = vadd.f32 0.0, %v387
    %389 = vmatmul.f32.gmra.mxu0 %v213
    %v390 = vpop.f32.mrf.mxu0
    %v391 = vadd.f32 0.0, %v390
    %392 = vmatmul.f32.gmra.mxu0 %v216
    %v393 = vpop.f32.mrf.mxu0
    %v394 = vadd.f32 0.0, %v393
    %395 = vmatmul.f32.gmra.mxu0 %v219
    %v396 = vpop.f32.mrf.mxu0
    %v397 = vadd.f32 0.0, %v396
    %398 = vmatmul.f32.gmra.mxu0 %v222
    %v399 = vpop.f32.mrf.mxu0
    %v400 = vadd.f32 0.0, %v399
    %401 = vmatmul.f32.gmra.mxu0 %v225
    %v402 = vpop.f32.mrf.mxu0
    %v403 = vadd.f32 0.0, %v402
    %404 = vmatmul.f32.gmra.mxu0 %v228
    %v405 = vpop.f32.mrf.mxu0
    %v406 = vadd.f32 0.0, %v405
    %407 = vmatmul.f32.gmra.mxu0 %v231
    %v408 = vpop.f32.mrf.mxu0
    %v409 = vadd.f32 0.0, %v408
    %410 = vmatmul.f32.gmra.mxu0 %v234
    %v411 = vpop.f32.mrf.mxu0
    %v412 = vadd.f32 0.0, %v411
    %413 = vmatmul.f32.gmra.mxu0 %v237
    %v414 = vpop.f32.mrf.mxu0
    %v415 = vadd.f32 0.0, %v414
    %416 = vdwg.mxu0
    %v418 = vsel %vm166, %v101, 0
    %v421 = vsel %vm166, %v102, 0
    %v424 = vsel %vm166, %v103, 0
    %v427 = vsel %vm166, %v104, 0
    %v430 = vsel %vm166, %v105, 0
    %v433 = vsel %vm166, %v106, 0
    %v436 = vsel %vm166, %v107, 0
    %v439 = vsel %vm166, %v108, 0
    %v442 = vsel %vm166, %v109, 0
    %v445 = vsel %vm166, %v110, 0
    %v448 = vsel %vm166, %v111, 0
    %v451 = vsel %vm166, %v112, 0
    %v454 = vsel %vm166, %v113, 0
    %v457 = vsel %vm166, %v114, 0
    %v460 = vsel %vm166, %v115, 0
    %v463 = vsel %vm166, %v116, 0
    %v466 = vsel %vm166, %v117, 0
    %v469 = vsel %vm166, %v118, 0
    %v472 = vsel %vm166, %v119, 0
    %v475 = vsel %vm166, %v120, 0
    %v478 = vsel %vm166, %v121, 0
    %v481 = vsel %vm166, %v122, 0
    %v484 = vsel %vm166, %v123, 0
    %v487 = vsel %vm166, %v124, 0
    %489 = vmatpush.msra.mxu0 0.0
    %490 = vmatpush.msra.mxu0 0.0
    %491 = vmatpush.msra.mxu0 0.0
    %492 = vmatpush.msra.mxu0 0.0
    %493 = vmatpush.msra.mxu0 0.0
    %494 = vmatpush.msra.mxu0 0.0
    %495 = vmatpush.msra.mxu0 0.0
    %496 = vmatpush.msra.mxu0 0.0
    %497 = vmatpush.msra.mxu0 0.0
    %498 = vmatpush.msra.mxu0 0.0
    %499 = vmatpush.msra.mxu0 0.0
    %500 = vmatpush.msra.mxu0 0.0
    %501 = vmatpush.msra.mxu0 %v131
    %502 = vmatpush.msra.mxu0 %v129
    %503 = vmatpush.msra.mxu0 %v127
    %504 = vmatpush.msra.mxu0 %v125
    %505 = vmatmul.f32.gmra.mxu0 %v418
    %v506 = vpop.f32.mrf.mxu0
    %v507 = vadd.f32 %v257, %v506
    %508 = vmatmul.f32.gmra.mxu0 %v421
    %v509 = vpop.f32.mrf.mxu0
    %v510 = vadd.f32 %v260, %v509
    %511 = vmatmul.f32.gmra.mxu0 %v424
    %v512 = vpop.f32.mrf.mxu0
    %v513 = vadd.f32 %v263, %v512
    %514 = vmatmul.f32.gmra.mxu0 %v427
    %v515 = vpop.f32.mrf.mxu0
    %v516 = vadd.f32 %v266, %v515
    %517 = vmatmul.f32.gmra.mxu0 %v430
    %v518 = vpop.f32.mrf.mxu0
    %v519 = vadd.f32 %v269, %v518
    %520 = vmatmul.f32.gmra.mxu0 %v433
    %v521 = vpop.f32.mrf.mxu0
    %v522 = vadd.f32 %v272, %v521
    %523 = vmatmul.f32.gmra.mxu0 %v436
    %v524 = vpop.f32.mrf.mxu0
    %v525 = vadd.f32 %v275, %v524
    %526 = vmatmul.f32.gmra.mxu0 %v439
    %v527 = vpop.f32.mrf.mxu0
    %v528 = vadd.f32 %v278, %v527
    %529 = vmatmul.f32.gmra.mxu0 %v442
    %v530 = vpop.f32.mrf.mxu0
    %v531 = vadd.f32 %v281, %v530
    %532 = vmatmul.f32.gmra.mxu0 %v445
    %v533 = vpop.f32.mrf.mxu0
    %v534 = vadd.f32 %v284, %v533
    %535 = vmatmul.f32.gmra.mxu0 %v448
    %v536 = vpop.f32.mrf.mxu0
    %v537 = vadd.f32 %v287, %v536
    %538 = vmatmul.f32.gmra.mxu0 %v451
    %v539 = vpop.f32.mrf.mxu0
    %v540 = vadd.f32 %v290, %v539
    %541 = vmatmul.f32.gmra.mxu0 %v454
    %v542 = vpop.f32.mrf.mxu0
    %v543 = vadd.f32 %v293, %v542
    %544 = vmatmul.f32.gmra.mxu0 %v457
    %v545 = vpop.f32.mrf.mxu0
    %v546 = vadd.f32 %v296, %v545
    %547 = vmatmul.f32.gmra.mxu0 %v460
    %v548 = vpop.f32.mrf.mxu0
    %v549 = vadd.f32 %v299, %v548
    %550 = vmatmul.f32.gmra.mxu0 %v463
    %v551 = vpop.f32.mrf.mxu0
    %v552 = vadd.f32 %v302, %v551
    %553 = vmatmul.f32.gmra.mxu0 %v466
    %v554 = vpop.f32.mrf.mxu0
    %v555 = vadd.f32 %v305, %v554
    %556 = vmatmul.f32.gmra.mxu0 %v469
    %v557 = vpop.f32.mrf.mxu0
    %v558 = vadd.f32 %v308, %v557
    %559 = vmatmul.f32.gmra.mxu0 %v472
    %v560 = vpop.f32.mrf.mxu0
    %v561 = vadd.f32 %v311, %v560
    %562 = vmatmul.f32.gmra.mxu0 %v475
    %v563 = vpop.f32.mrf.mxu0
    %v564 = vadd.f32 %v314, %v563
    %565 = vmatmul.f32.gmra.mxu0 %v478
    %v566 = vpop.f32.mrf.mxu0
    %v567 = vadd.f32 %v317, %v566
    %568 = vmatmul.f32.gmra.mxu0 %v481
    %v569 = vpop.f32.mrf.mxu0
    %v570 = vadd.f32 %v320, %v569
    %571 = vmatmul.f32.gmra.mxu0 %v484
    %v572 = vpop.f32.mrf.mxu0
    %v573 = vadd.f32 %v323, %v572
    %574 = vmatmul.f32.gmra.mxu0 %v487
    %v575 = vpop.f32.mrf.mxu0
    %v576 = vadd.f32 %v326, %v575
    %577 = vdwg.mxu0
    %578 = vmatpush.msra.mxu0 0.0
    %579 = vmatpush.msra.mxu0 0.0
    %580 = vmatpush.msra.mxu0 0.0
    %581 = vmatpush.msra.mxu0 0.0
    %582 = vmatpush.msra.mxu0 0.0
    %583 = vmatpush.msra.mxu0 0.0
    %584 = vmatpush.msra.mxu0 0.0
    %585 = vmatpush.msra.mxu0 0.0
    %586 = vmatpush.msra.mxu0 0.0
    %587 = vmatpush.msra.mxu0 0.0
    %588 = vmatpush.msra.mxu0 0.0
    %589 = vmatpush.msra.mxu0 0.0
    %590 = vmatpush.msra.mxu0 %v132
    %591 = vmatpush.msra.mxu0 %v130
    %592 = vmatpush.msra.mxu0 %v128
    %593 = vmatpush.msra.mxu0 %v126
    %594 = vmatmul.f32.gmra.mxu0 %v418
    %v595 = vpop.f32.mrf.mxu0
    %v596 = vadd.f32 %v346, %v595
    %597 = vmatmul.f32.gmra.mxu0 %v421
    %v598 = vpop.f32.mrf.mxu0
    %v599 = vadd.f32 %v349, %v598
    %600 = vmatmul.f32.gmra.mxu0 %v424
    %v601 = vpop.f32.mrf.mxu0
    %v602 = vadd.f32 %v352, %v601
    %603 = vmatmul.f32.gmra.mxu0 %v427
    %v604 = vpop.f32.mrf.mxu0
    %v605 = vadd.f32 %v355, %v604
    %606 = vmatmul.f32.gmra.mxu0 %v430
    %v607 = vpop.f32.mrf.mxu0
    %v608 = vadd.f32 %v358, %v607
    %609 = vmatmul.f32.gmra.mxu0 %v433
    %v610 = vpop.f32.mrf.mxu0
    %v611 = vadd.f32 %v361, %v610
    %612 = vmatmul.f32.gmra.mxu0 %v436
    %v613 = vpop.f32.mrf.mxu0
    %v614 = vadd.f32 %v364, %v613
    %615 = vmatmul.f32.gmra.mxu0 %v439
    %v616 = vpop.f32.mrf.mxu0
    %v617 = vadd.f32 %v367, %v616
    %618 = vmatmul.f32.gmra.mxu0 %v442
    %v619 = vpop.f32.mrf.mxu0
    %v620 = vadd.f32 %v370, %v619
    %621 = vmatmul.f32.gmra.mxu0 %v445
    %v622 = vpop.f32.mrf.mxu0
    %v623 = vadd.f32 %v373, %v622
    %624 = vmatmul.f32.gmra.mxu0 %v448
    %v625 = vpop.f32.mrf.mxu0
    %v626 = vadd.f32 %v376, %v625
    %627 = vmatmul.f32.gmra.mxu0 %v451
    %v628 = vpop.f32.mrf.mxu0
    %v629 = vadd.f32 %v379, %v628
    %630 = vmatmul.f32.gmra.mxu0 %v454
    %v631 = vpop.f32.mrf.mxu0
    %v632 = vadd.f32 %v382, %v631
    %633 = vmatmul.f32.gmra.mxu0 %v457
    %v634 = vpop.f32.mrf.mxu0
    %v635 = vadd.f32 %v385, %v634
    %636 = vmatmul.f32.gmra.mxu0 %v460
    %v637 = vpop.f32.mrf.mxu0
    %v638 = vadd.f32 %v388, %v637
    %639 = vmatmul.f32.gmra.mxu0 %v463
    %v640 = vpop.f32.mrf.mxu0
    %v641 = vadd.f32 %v391, %v640
    %642 = vmatmul.f32.gmra.mxu0 %v466
    %v643 = vpop.f32.mrf.mxu0
    %v644 = vadd.f32 %v394, %v643
    %645 = vmatmul.f32.gmra.mxu0 %v469
    %v646 = vpop.f32.mrf.mxu0
    %v647 = vadd.f32 %v397, %v646
    %648 = vmatmul.f32.gmra.mxu0 %v472
    %v649 = vpop.f32.mrf.mxu0
    %v650 = vadd.f32 %v400, %v649
    %651 = vmatmul.f32.gmra.mxu0 %v475
    %v652 = vpop.f32.mrf.mxu0
    %v653 = vadd.f32 %v403, %v652
    %654 = vmatmul.f32.gmra.mxu0 %v478
    %v655 = vpop.f32.mrf.mxu0
    %v656 = vadd.f32 %v406, %v655
    %657 = vmatmul.f32.gmra.mxu0 %v481
    %v658 = vpop.f32.mrf.mxu0
    %v659 = vadd.f32 %v409, %v658
    %660 = vmatmul.f32.gmra.mxu0 %v484
    %v661 = vpop.f32.mrf.mxu0
    %v662 = vadd.f32 %v412, %v661
    %663 = vmatmul.f32.gmra.mxu0 %v487
    %v664 = vpop.f32.mrf.mxu0
    %v665 = vadd.f32 %v415, %v664
    %666 = vdwg.mxu0
    %v667 = vld [vmem:[%s0 + $0x2] sm:$0xff]
    %v668 = vld [vmem:[%s0 + $0xa] sm:$0xff]
    %v669 = vld [vmem:[%s0 + $0x12] sm:$0xff]
    %v670 = vld [vmem:[%s0 + $0x22] sm:$0xff]
    %v671 = vld [vmem:[%s0 + $0x2a] sm:$0xff]
    %v672 = vld [vmem:[%s0 + $0x32] sm:$0xff]
    %v673 = vld [vmem:[%s0 + $0x42] sm:$0xff]
    %v674 = vld [vmem:[%s0 + $0x4a] sm:$0xff]
    %v675 = vld [vmem:[%s0 + $0x52] sm:$0xff]
    %v676 = vld [vmem:[%s0 + $0x62] sm:$0xff]
    %v677 = vld [vmem:[%s0 + $0x6a] sm:$0xff]
    %v678 = vld [vmem:[%s0 + $0x72] sm:$0xff]
    %v679 = vld [vmem:[%s0 + $0x82] sm:$0xff]
    %v680 = vld [vmem:[%s0 + $0x8a] sm:$0xff]
    %v681 = vld [vmem:[%s0 + $0x92] sm:$0xff]
    %v682 = vld [vmem:[%s0 + $0xa2] sm:$0xff]
    %v683 = vld [vmem:[%s0 + $0xaa] sm:$0xff]
    %v684 = vld [vmem:[%s0 + $0xb2] sm:$0xff]
    %v685 = vld [vmem:[%s0 + $0xc2] sm:$0xff]
    %v686 = vld [vmem:[%s0 + $0xca] sm:$0xff]
    %v687 = vld [vmem:[%s0 + $0xd2] sm:$0xff]
    %v688 = vld [vmem:[%s0 + $0xe2] sm:$0xff]
    %v689 = vld [vmem:[%s0 + $0xea] sm:$0xff]
    %v690 = vld [vmem:[%s0 + $0xf2] sm:$0xff]
    %s691 = scalar_lea.vmem [#allocation4], 128
    %v692 = vld [vmem:[%s691] sm:$0xff]
    %v693 = vld [vmem:[%s691 + $0x8] sm:$0xff]
    %v694 = vld [vmem:[%s691 + $0x10] sm:$0xff]
    %v695 = vld [vmem:[%s691 + $0x18] sm:$0xff]
    %v696 = vld [vmem:[%s691 + $0x20] sm:$0xff]
    %v697 = vld [vmem:[%s691 + $0x28] sm:$0xff]
    %v698 = vld [vmem:[%s691 + $0x30] sm:$0xff]
    %v699 = vld [vmem:[%s691 + $0x38] sm:$0xff]
    %v701 = vsel %vm166, %v667, 0
    %v704 = vsel %vm166, %v668, 0
    %v707 = vsel %vm166, %v669, 0
    %v710 = vsel %vm166, %v670, 0
    %v713 = vsel %vm166, %v671, 0
    %v716 = vsel %vm166, %v672, 0
    %v719 = vsel %vm166, %v673, 0
    %v722 = vsel %vm166, %v674, 0
    %v725 = vsel %vm166, %v675, 0
    %v728 = vsel %vm166, %v676, 0
    %v731 = vsel %vm166, %v677, 0
    %v734 = vsel %vm166, %v678, 0
    %v737 = vsel %vm166, %v679, 0
    %v740 = vsel %vm166, %v680, 0
    %v743 = vsel %vm166, %v681, 0
    %v746 = vsel %vm166, %v682, 0
    %v749 = vsel %vm166, %v683, 0
    %v752 = vsel %vm166, %v684, 0
    %v755 = vsel %vm166, %v685, 0
    %v758 = vsel %vm166, %v686, 0
    %v761 = vsel %vm166, %v687, 0
    %v764 = vsel %vm166, %v688, 0
    %v767 = vsel %vm166, %v689, 0
    %v770 = vsel %vm166, %v690, 0
    %772 = vmatpush.msra.mxu0 0.0
    %773 = vmatpush.msra.mxu0 0.0
    %774 = vmatpush.msra.mxu0 0.0
    %775 = vmatpush.msra.mxu0 0.0
    %776 = vmatpush.msra.mxu0 0.0
    %777 = vmatpush.msra.mxu0 0.0
    %778 = vmatpush.msra.mxu0 0.0
    %779 = vmatpush.msra.mxu0 0.0
    %780 = vmatpush.msra.mxu0 0.0
    %781 = vmatpush.msra.mxu0 0.0
    %782 = vmatpush.msra.mxu0 0.0
    %783 = vmatpush.msra.mxu0 0.0
    %784 = vmatpush.msra.mxu0 %v698
    %785 = vmatpush.msra.mxu0 %v696
    %786 = vmatpush.msra.mxu0 %v694
    %787 = vmatpush.msra.mxu0 %v692
    %788 = vmatmul.f32.gmra.mxu0 %v701
    %v789 = vpop.f32.mrf.mxu0
    %v790 = vadd.f32 0.0, %v789
    %791 = vmatmul.f32.gmra.mxu0 %v704
    %v792 = vpop.f32.mrf.mxu0
    %v793 = vadd.f32 0.0, %v792
    %794 = vmatmul.f32.gmra.mxu0 %v707
    %v795 = vpop.f32.mrf.mxu0
    %v796 = vadd.f32 0.0, %v795
    %797 = vmatmul.f32.gmra.mxu0 %v710
    %v798 = vpop.f32.mrf.mxu0
    %v799 = vadd.f32 0.0, %v798
    %800 = vmatmul.f32.gmra.mxu0 %v713
    %v801 = vpop.f32.mrf.mxu0
    %v802 = vadd.f32 0.0, %v801
    %803 = vmatmul.f32.gmra.mxu0 %v716
    %v804 = vpop.f32.mrf.mxu0
    %v805 = vadd.f32 0.0, %v804
    %806 = vmatmul.f32.gmra.mxu0 %v719
    %v807 = vpop.f32.mrf.mxu0
    %v808 = vadd.f32 0.0, %v807
    %809 = vmatmul.f32.gmra.mxu0 %v722
    %v810 = vpop.f32.mrf.mxu0
    %v811 = vadd.f32 0.0, %v810
    %812 = vmatmul.f32.gmra.mxu0 %v725
    %v813 = vpop.f32.mrf.mxu0
    %v814 = vadd.f32 0.0, %v813
    %815 = vmatmul.f32.gmra.mxu0 %v728
    %v816 = vpop.f32.mrf.mxu0
    %v817 = vadd.f32 0.0, %v816
    %818 = vmatmul.f32.gmra.mxu0 %v731
    %v819 = vpop.f32.mrf.mxu0
    %v820 = vadd.f32 0.0, %v819
    %821 = vmatmul.f32.gmra.mxu0 %v734
    %v822 = vpop.f32.mrf.mxu0
    %v823 = vadd.f32 0.0, %v822
    %824 = vmatmul.f32.gmra.mxu0 %v737
    %v825 = vpop.f32.mrf.mxu0
    %v826 = vadd.f32 0.0, %v825
    %827 = vmatmul.f32.gmra.mxu0 %v740
    %v828 = vpop.f32.mrf.mxu0
    %v829 = vadd.f32 0.0, %v828
    %830 = vmatmul.f32.gmra.mxu0 %v743
    %v831 = vpop.f32.mrf.mxu0
    %v832 = vadd.f32 0.0, %v831
    %833 = vmatmul.f32.gmra.mxu0 %v746
    %v834 = vpop.f32.mrf.mxu0
    %v835 = vadd.f32 0.0, %v834
    %836 = vmatmul.f32.gmra.mxu0 %v749
    %v837 = vpop.f32.mrf.mxu0
    %v838 = vadd.f32 0.0, %v837
    %839 = vmatmul.f32.gmra.mxu0 %v752
    %v840 = vpop.f32.mrf.mxu0
    %v841 = vadd.f32 0.0, %v840
    %842 = vmatmul.f32.gmra.mxu0 %v755
    %v843 = vpop.f32.mrf.mxu0
    %v844 = vadd.f32 0.0, %v843
    %845 = vmatmul.f32.gmra.mxu0 %v758
    %v846 = vpop.f32.mrf.mxu0
    %v847 = vadd.f32 0.0, %v846
    %848 = vmatmul.f32.gmra.mxu0 %v761
    %v849 = vpop.f32.mrf.mxu0
    %v850 = vadd.f32 0.0, %v849
    %851 = vmatmul.f32.gmra.mxu0 %v764
    %v852 = vpop.f32.mrf.mxu0
    %v853 = vadd.f32 0.0, %v852
    %854 = vmatmul.f32.gmra.mxu0 %v767
    %v855 = vpop.f32.mrf.mxu0
    %v856 = vadd.f32 0.0, %v855
    %857 = vmatmul.f32.gmra.mxu0 %v770
    %v858 = vpop.f32.mrf.mxu0
    %v859 = vadd.f32 0.0, %v858
    %860 = vdwg.mxu0
    %861 = vmatpush.msra.mxu0 0.0
    %862 = vmatpush.msra.mxu0 0.0
    %863 = vmatpush.msra.mxu0 0.0
    %864 = vmatpush.msra.mxu0 0.0
    %865 = vmatpush.msra.mxu0 0.0
    %866 = vmatpush.msra.mxu0 0.0
    %867 = vmatpush.msra.mxu0 0.0
    %868 = vmatpush.msra.mxu0 0.0
    %869 = vmatpush.msra.mxu0 0.0
    %870 = vmatpush.msra.mxu0 0.0
    %871 = vmatpush.msra.mxu0 0.0
    %872 = vmatpush.msra.mxu0 0.0
    %873 = vmatpush.msra.mxu0 %v699
    %874 = vmatpush.msra.mxu0 %v697
    %875 = vmatpush.msra.mxu0 %v695
    %876 = vmatpush.msra.mxu0 %v693
    %877 = vmatmul.f32.gmra.mxu0 %v701
    %v878 = vpop.f32.mrf.mxu0
    %v879 = vadd.f32 0.0, %v878
    %880 = vmatmul.f32.gmra.mxu0 %v704
    %v881 = vpop.f32.mrf.mxu0
    %v882 = vadd.f32 0.0, %v881
    %883 = vmatmul.f32.gmra.mxu0 %v707
    %v884 = vpop.f32.mrf.mxu0
    %v885 = vadd.f32 0.0, %v884
    %886 = vmatmul.f32.gmra.mxu0 %v710
    %v887 = vpop.f32.mrf.mxu0
    %v888 = vadd.f32 0.0, %v887
    %889 = vmatmul.f32.gmra.mxu0 %v713
    %v890 = vpop.f32.mrf.mxu0
    %v891 = vadd.f32 0.0, %v890
    %892 = vmatmul.f32.gmra.mxu0 %v716
    %v893 = vpop.f32.mrf.mxu0
    %v894 = vadd.f32 0.0, %v893
    %895 = vmatmul.f32.gmra.mxu0 %v719
    %v896 = vpop.f32.mrf.mxu0
    %v897 = vadd.f32 0.0, %v896
    %898 = vmatmul.f32.gmra.mxu0 %v722
    %v899 = vpop.f32.mrf.mxu0
    %v900 = vadd.f32 0.0, %v899
    %901 = vmatmul.f32.gmra.mxu0 %v725
    %v902 = vpop.f32.mrf.mxu0
    %v903 = vadd.f32 0.0, %v902
    %904 = vmatmul.f32.gmra.mxu0 %v728
    %v905 = vpop.f32.mrf.mxu0
    %v906 = vadd.f32 0.0, %v905
    %907 = vmatmul.f32.gmra.mxu0 %v731
    %v908 = vpop.f32.mrf.mxu0
    %v909 = vadd.f32 0.0, %v908
    %910 = vmatmul.f32.gmra.mxu0 %v734
    %v911 = vpop.f32.mrf.mxu0
    %v912 = vadd.f32 0.0, %v911
    %913 = vmatmul.f32.gmra.mxu0 %v737
    %v914 = vpop.f32.mrf.mxu0
    %v915 = vadd.f32 0.0, %v914
    %916 = vmatmul.f32.gmra.mxu0 %v740
    %v917 = vpop.f32.mrf.mxu0
    %v918 = vadd.f32 0.0, %v917
    %919 = vmatmul.f32.gmra.mxu0 %v743
    %v920 = vpop.f32.mrf.mxu0
    %v921 = vadd.f32 0.0, %v920
    %922 = vmatmul.f32.gmra.mxu0 %v746
    %v923 = vpop.f32.mrf.mxu0
    %v924 = vadd.f32 0.0, %v923
    %925 = vmatmul.f32.gmra.mxu0 %v749
    %v926 = vpop.f32.mrf.mxu0
    %v927 = vadd.f32 0.0, %v926
    %928 = vmatmul.f32.gmra.mxu0 %v752
    %v929 = vpop.f32.mrf.mxu0
    %v930 = vadd.f32 0.0, %v929
    %931 = vmatmul.f32.gmra.mxu0 %v755
    %v932 = vpop.f32.mrf.mxu0
    %v933 = vadd.f32 0.0, %v932
    %934 = vmatmul.f32.gmra.mxu0 %v758
    %v935 = vpop.f32.mrf.mxu0
    %v936 = vadd.f32 0.0, %v935
    %937 = vmatmul.f32.gmra.mxu0 %v761
    %v938 = vpop.f32.mrf.mxu0
    %v939 = vadd.f32 0.0, %v938
    %940 = vmatmul.f32.gmra.mxu0 %v764
    %v941 = vpop.f32.mrf.mxu0
    %v942 = vadd.f32 0.0, %v941
    %943 = vmatmul.f32.gmra.mxu0 %v767
    %v944 = vpop.f32.mrf.mxu0
    %v945 = vadd.f32 0.0, %v944
    %946 = vmatmul.f32.gmra.mxu0 %v770
    %v947 = vpop.f32.mrf.mxu0
    %v948 = vadd.f32 0.0, %v947
    %949 = vdwg.mxu0
    %v950 = vadd.f32 %v507, %v790
    %v951 = vadd.f32 %v596, %v879
    %v952 = vadd.f32 %v510, %v793
    %v953 = vadd.f32 %v599, %v882
    %v954 = vadd.f32 %v513, %v796
    %v955 = vadd.f32 %v602, %v885
    %v956 = vadd.f32 %v516, %v799
    %v957 = vadd.f32 %v605, %v888
    %v958 = vadd.f32 %v519, %v802
    %v959 = vadd.f32 %v608, %v891
    %v960 = vadd.f32 %v522, %v805
    %v961 = vadd.f32 %v611, %v894
    %v962 = vadd.f32 %v525, %v808
    %v963 = vadd.f32 %v614, %v897
    %v964 = vadd.f32 %v528, %v811
    %v965 = vadd.f32 %v617, %v900
    %v966 = vadd.f32 %v531, %v814
    %v967 = vadd.f32 %v620, %v903
    %v968 = vadd.f32 %v534, %v817
    %v969 = vadd.f32 %v623, %v906
    %v970 = vadd.f32 %v537, %v820
    %v971 = vadd.f32 %v626, %v909
    %v972 = vadd.f32 %v540, %v823
    %v973 = vadd.f32 %v629, %v912
    %v974 = vadd.f32 %v543, %v826
    %v975 = vadd.f32 %v632, %v915
    %v976 = vadd.f32 %v546, %v829
    %v977 = vadd.f32 %v635, %v918
    %v978 = vadd.f32 %v549, %v832
    %v979 = vadd.f32 %v638, %v921
    %v980 = vadd.f32 %v552, %v835
    %v981 = vadd.f32 %v641, %v924
    %v982 = vadd.f32 %v555, %v838
    %v983 = vadd.f32 %v644, %v927
    %v984 = vadd.f32 %v558, %v841
    %v985 = vadd.f32 %v647, %v930
    %v986 = vadd.f32 %v561, %v844
    %v987 = vadd.f32 %v650, %v933
    %v988 = vadd.f32 %v564, %v847
    %v989 = vadd.f32 %v653, %v936
    %v990 = vadd.f32 %v567, %v850
    %v991 = vadd.f32 %v656, %v939
    %v992 = vadd.f32 %v570, %v853
    %v993 = vadd.f32 %v659, %v942
    %v994 = vadd.f32 %v573, %v856
    %v995 = vadd.f32 %v662, %v945
    %v996 = vadd.f32 %v576, %v859
    %v997 = vadd.f32 %v665, %v948
    %v998 = vld [vmem:[%s0 + $0x3] sm:$0xff]
    %v999 = vld [vmem:[%s0 + $0xb] sm:$0xff]
    %v1000 = vld [vmem:[%s0 + $0x13] sm:$0xff]
    %v1001 = vld [vmem:[%s0 + $0x23] sm:$0xff]
    %v1002 = vld [vmem:[%s0 + $0x2b] sm:$0xff]
    %v1003 = vld [vmem:[%s0 + $0x33] sm:$0xff]
    %v1004 = vld [vmem:[%s0 + $0x43] sm:$0xff]
    %v1005 = vld [vmem:[%s0 + $0x4b] sm:$0xff]
    %v1006 = vld [vmem:[%s0 + $0x53] sm:$0xff]
    %v1007 = vld [vmem:[%s0 + $0x63] sm:$0xff]
    %v1008 = vld [vmem:[%s0 + $0x6b] sm:$0xff]
    %v1009 = vld [vmem:[%s0 + $0x73] sm:$0xff]
    %v1010 = vld [vmem:[%s0 + $0x83] sm:$0xff]
    %v1011 = vld [vmem:[%s0 + $0x8b] sm:$0xff]
    %v1012 = vld [vmem:[%s0 + $0x93] sm:$0xff]
    %v1013 = vld [vmem:[%s0 + $0xa3] sm:$0xff]
    %v1014 = vld [vmem:[%s0 + $0xab] sm:$0xff]
    %v1015 = vld [vmem:[%s0 + $0xb3] sm:$0xff]
    %v1016 = vld [vmem:[%s0 + $0xc3] sm:$0xff]
    %v1017 = vld [vmem:[%s0 + $0xcb] sm:$0xff]
    %v1018 = vld [vmem:[%s0 + $0xd3] sm:$0xff]
    %v1019 = vld [vmem:[%s0 + $0xe3] sm:$0xff]
    %v1020 = vld [vmem:[%s0 + $0xeb] sm:$0xff]
    %v1021 = vld [vmem:[%s0 + $0xf3] sm:$0xff]
    %s1022 = scalar_lea.vmem [#allocation4], 192
    %v1023 = vld [vmem:[%s1022] sm:$0xff]
    %v1024 = vld [vmem:[%s1022 + $0x8] sm:$0xff]
    %v1025 = vld [vmem:[%s1022 + $0x10] sm:$0xff]
    %v1026 = vld [vmem:[%s1022 + $0x18] sm:$0xff]
    %v1027 = vld [vmem:[%s1022 + $0x20] sm:$0xff]
    %v1028 = vld [vmem:[%s1022 + $0x28] sm:$0xff]
    %v1029 = vld [vmem:[%s1022 + $0x30] sm:$0xff]
    %v1030 = vld [vmem:[%s1022 + $0x38] sm:$0xff]
    %v1032 = vsel %vm166, %v998, 0
    %v1035 = vsel %vm166, %v999, 0
    %v1038 = vsel %vm166, %v1000, 0
    %v1041 = vsel %vm166, %v1001, 0
    %v1044 = vsel %vm166, %v1002, 0
    %v1047 = vsel %vm166, %v1003, 0
    %v1050 = vsel %vm166, %v1004, 0
    %v1053 = vsel %vm166, %v1005, 0
    %v1056 = vsel %vm166, %v1006, 0
    %v1059 = vsel %vm166, %v1007, 0
    %v1062 = vsel %vm166, %v1008, 0
    %v1065 = vsel %vm166, %v1009, 0
    %v1068 = vsel %vm166, %v1010, 0
    %v1071 = vsel %vm166, %v1011, 0
    %v1074 = vsel %vm166, %v1012, 0
    %v1077 = vsel %vm166, %v1013, 0
    %v1080 = vsel %vm166, %v1014, 0
    %v1083 = vsel %vm166, %v1015, 0
    %v1086 = vsel %vm166, %v1016, 0
    %v1089 = vsel %vm166, %v1017, 0
    %v1092 = vsel %vm166, %v1018, 0
    %v1095 = vsel %vm166, %v1019, 0
    %v1098 = vsel %vm166, %v1020, 0
    %v1101 = vsel %vm166, %v1021, 0
    %1103 = vmatpush.msra.mxu0 0.0
    %1104 = vmatpush.msra.mxu0 0.0
    %1105 = vmatpush.msra.mxu0 0.0
    %1106 = vmatpush.msra.mxu0 0.0
    %1107 = vmatpush.msra.mxu0 0.0
    %1108 = vmatpush.msra.mxu0 0.0
    %1109 = vmatpush.msra.mxu0 0.0
    %1110 = vmatpush.msra.mxu0 0.0
    %1111 = vmatpush.msra.mxu0 0.0
    %1112 = vmatpush.msra.mxu0 0.0
    %1113 = vmatpush.msra.mxu0 0.0
    %1114 = vmatpush.msra.mxu0 0.0
    %1115 = vmatpush.msra.mxu0 %v1029
    %1116 = vmatpush.msra.mxu0 %v1027
    %1117 = vmatpush.msra.mxu0 %v1025
    %1118 = vmatpush.msra.mxu0 %v1023
    %1119 = vmatmul.f32.gmra.mxu0 %v1032
    %v1120 = vpop.f32.mrf.mxu0
    %v1121 = vadd.f32 0.0, %v1120
    %1122 = vmatmul.f32.gmra.mxu0 %v1035
    %v1123 = vpop.f32.mrf.mxu0
    %v1124 = vadd.f32 0.0, %v1123
    %1125 = vmatmul.f32.gmra.mxu0 %v1038
    %v1126 = vpop.f32.mrf.mxu0
    %v1127 = vadd.f32 0.0, %v1126
    %1128 = vmatmul.f32.gmra.mxu0 %v1041
    %v1129 = vpop.f32.mrf.mxu0
    %v1130 = vadd.f32 0.0, %v1129
    %1131 = vmatmul.f32.gmra.mxu0 %v1044
    %v1132 = vpop.f32.mrf.mxu0
    %v1133 = vadd.f32 0.0, %v1132
    %1134 = vmatmul.f32.gmra.mxu0 %v1047
    %v1135 = vpop.f32.mrf.mxu0
    %v1136 = vadd.f32 0.0, %v1135
    %1137 = vmatmul.f32.gmra.mxu0 %v1050
    %v1138 = vpop.f32.mrf.mxu0
    %v1139 = vadd.f32 0.0, %v1138
    %1140 = vmatmul.f32.gmra.mxu0 %v1053
    %v1141 = vpop.f32.mrf.mxu0
    %v1142 = vadd.f32 0.0, %v1141
    %1143 = vmatmul.f32.gmra.mxu0 %v1056
    %v1144 = vpop.f32.mrf.mxu0
    %v1145 = vadd.f32 0.0, %v1144
    %1146 = vmatmul.f32.gmra.mxu0 %v1059
    %v1147 = vpop.f32.mrf.mxu0
    %v1148 = vadd.f32 0.0, %v1147
    %1149 = vmatmul.f32.gmra.mxu0 %v1062
    %v1150 = vpop.f32.mrf.mxu0
    %v1151 = vadd.f32 0.0, %v1150
    %1152 = vmatmul.f32.gmra.mxu0 %v1065
    %v1153 = vpop.f32.mrf.mxu0
    %v1154 = vadd.f32 0.0, %v1153
    %1155 = vmatmul.f32.gmra.mxu0 %v1068
    %v1156 = vpop.f32.mrf.mxu0
    %v1157 = vadd.f32 0.0, %v1156
    %1158 = vmatmul.f32.gmra.mxu0 %v1071
    %v1159 = vpop.f32.mrf.mxu0
    %v1160 = vadd.f32 0.0, %v1159
    %1161 = vmatmul.f32.gmra.mxu0 %v1074
    %v1162 = vpop.f32.mrf.mxu0
    %v1163 = vadd.f32 0.0, %v1162
    %1164 = vmatmul.f32.gmra.mxu0 %v1077
    %v1165 = vpop.f32.mrf.mxu0
    %v1166 = vadd.f32 0.0, %v1165
    %1167 = vmatmul.f32.gmra.mxu0 %v1080
    %v1168 = vpop.f32.mrf.mxu0
    %v1169 = vadd.f32 0.0, %v1168
    %1170 = vmatmul.f32.gmra.mxu0 %v1083
    %v1171 = vpop.f32.mrf.mxu0
    %v1172 = vadd.f32 0.0, %v1171
    %1173 = vmatmul.f32.gmra.mxu0 %v1086
    %v1174 = vpop.f32.mrf.mxu0
    %v1175 = vadd.f32 0.0, %v1174
    %1176 = vmatmul.f32.gmra.mxu0 %v1089
    %v1177 = vpop.f32.mrf.mxu0
    %v1178 = vadd.f32 0.0, %v1177
    %1179 = vmatmul.f32.gmra.mxu0 %v1092
    %v1180 = vpop.f32.mrf.mxu0
    %v1181 = vadd.f32 0.0, %v1180
    %1182 = vmatmul.f32.gmra.mxu0 %v1095
    %v1183 = vpop.f32.mrf.mxu0
    %v1184 = vadd.f32 0.0, %v1183
    %1185 = vmatmul.f32.gmra.mxu0 %v1098
    %v1186 = vpop.f32.mrf.mxu0
    %v1187 = vadd.f32 0.0, %v1186
    %1188 = vmatmul.f32.gmra.mxu0 %v1101
    %v1189 = vpop.f32.mrf.mxu0
    %v1190 = vadd.f32 0.0, %v1189
    %1191 = vdwg.mxu0
    %1192 = vmatpush.msra.mxu0 0.0
    %1193 = vmatpush.msra.mxu0 0.0
    %1194 = vmatpush.msra.mxu0 0.0
    %1195 = vmatpush.msra.mxu0 0.0
    %1196 = vmatpush.msra.mxu0 0.0
    %1197 = vmatpush.msra.mxu0 0.0
    %1198 = vmatpush.msra.mxu0 0.0
    %1199 = vmatpush.msra.mxu0 0.0
    %1200 = vmatpush.msra.mxu0 0.0
    %1201 = vmatpush.msra.mxu0 0.0
    %1202 = vmatpush.msra.mxu0 0.0
    %1203 = vmatpush.msra.mxu0 0.0
    %1204 = vmatpush.msra.mxu0 %v1030
    %1205 = vmatpush.msra.mxu0 %v1028
    %1206 = vmatpush.msra.mxu0 %v1026
    %1207 = vmatpush.msra.mxu0 %v1024
    %1208 = vmatmul.f32.gmra.mxu0 %v1032
    %v1209 = vpop.f32.mrf.mxu0
    %v1210 = vadd.f32 0.0, %v1209
    %1211 = vmatmul.f32.gmra.mxu0 %v1035
    %v1212 = vpop.f32.mrf.mxu0
    %v1213 = vadd.f32 0.0, %v1212
    %1214 = vmatmul.f32.gmra.mxu0 %v1038
    %v1215 = vpop.f32.mrf.mxu0
    %v1216 = vadd.f32 0.0, %v1215
    %1217 = vmatmul.f32.gmra.mxu0 %v1041
    %v1218 = vpop.f32.mrf.mxu0
    %v1219 = vadd.f32 0.0, %v1218
    %1220 = vmatmul.f32.gmra.mxu0 %v1044
    %v1221 = vpop.f32.mrf.mxu0
    %v1222 = vadd.f32 0.0, %v1221
    %1223 = vmatmul.f32.gmra.mxu0 %v1047
    %v1224 = vpop.f32.mrf.mxu0
    %v1225 = vadd.f32 0.0, %v1224
    %1226 = vmatmul.f32.gmra.mxu0 %v1050
    %v1227 = vpop.f32.mrf.mxu0
    %v1228 = vadd.f32 0.0, %v1227
    %1229 = vmatmul.f32.gmra.mxu0 %v1053
    %v1230 = vpop.f32.mrf.mxu0
    %v1231 = vadd.f32 0.0, %v1230
    %1232 = vmatmul.f32.gmra.mxu0 %v1056
    %v1233 = vpop.f32.mrf.mxu0
    %v1234 = vadd.f32 0.0, %v1233
    %1235 = vmatmul.f32.gmra.mxu0 %v1059
    %v1236 = vpop.f32.mrf.mxu0
    %v1237 = vadd.f32 0.0, %v1236
    %1238 = vmatmul.f32.gmra.mxu0 %v1062
    %v1239 = vpop.f32.mrf.mxu0
    %v1240 = vadd.f32 0.0, %v1239
    %1241 = vmatmul.f32.gmra.mxu0 %v1065
    %v1242 = vpop.f32.mrf.mxu0
    %v1243 = vadd.f32 0.0, %v1242
    %1244 = vmatmul.f32.gmra.mxu0 %v1068
    %v1245 = vpop.f32.mrf.mxu0
    %v1246 = vadd.f32 0.0, %v1245
    %1247 = vmatmul.f32.gmra.mxu0 %v1071
    %v1248 = vpop.f32.mrf.mxu0
    %v1249 = vadd.f32 0.0, %v1248
    %1250 = vmatmul.f32.gmra.mxu0 %v1074
    %v1251 = vpop.f32.mrf.mxu0
    %v1252 = vadd.f32 0.0, %v1251
    %1253 = vmatmul.f32.gmra.mxu0 %v1077
    %v1254 = vpop.f32.mrf.mxu0
    %v1255 = vadd.f32 0.0, %v1254
    %1256 = vmatmul.f32.gmra.mxu0 %v1080
    %v1257 = vpop.f32.mrf.mxu0
    %v1258 = vadd.f32 0.0, %v1257
    %1259 = vmatmul.f32.gmra.mxu0 %v1083
    %v1260 = vpop.f32.mrf.mxu0
    %v1261 = vadd.f32 0.0, %v1260
    %1262 = vmatmul.f32.gmra.mxu0 %v1086
    %v1263 = vpop.f32.mrf.mxu0
    %v1264 = vadd.f32 0.0, %v1263
    %1265 = vmatmul.f32.gmra.mxu0 %v1089
    %v1266 = vpop.f32.mrf.mxu0
    %v1267 = vadd.f32 0.0, %v1266
    %1268 = vmatmul.f32.gmra.mxu0 %v1092
    %v1269 = vpop.f32.mrf.mxu0
    %v1270 = vadd.f32 0.0, %v1269
    %1271 = vmatmul.f32.gmra.mxu0 %v1095
    %v1272 = vpop.f32.mrf.mxu0
    %v1273 = vadd.f32 0.0, %v1272
    %1274 = vmatmul.f32.gmra.mxu0 %v1098
    %v1275 = vpop.f32.mrf.mxu0
    %v1276 = vadd.f32 0.0, %v1275
    %1277 = vmatmul.f32.gmra.mxu0 %v1101
    %v1278 = vpop.f32.mrf.mxu0
    %v1279 = vadd.f32 0.0, %v1278
    %1280 = vdwg.mxu0
    %v1281 = vadd.f32 %v950, %v1121
    %v1282 = vadd.f32 %v951, %v1210
    %v1283 = vadd.f32 %v952, %v1124
    %v1284 = vadd.f32 %v953, %v1213
    %v1285 = vadd.f32 %v954, %v1127
    %v1286 = vadd.f32 %v955, %v1216
    %v1287 = vadd.f32 %v956, %v1130
    %v1288 = vadd.f32 %v957, %v1219
    %v1289 = vadd.f32 %v958, %v1133
    %v1290 = vadd.f32 %v959, %v1222
    %v1291 = vadd.f32 %v960, %v1136
    %v1292 = vadd.f32 %v961, %v1225
    %v1293 = vadd.f32 %v962, %v1139
    %v1294 = vadd.f32 %v963, %v1228
    %v1295 = vadd.f32 %v964, %v1142
    %v1296 = vadd.f32 %v965, %v1231
    %v1297 = vadd.f32 %v966, %v1145
    %v1298 = vadd.f32 %v967, %v1234
    %v1299 = vadd.f32 %v968, %v1148
    %v1300 = vadd.f32 %v969, %v1237
    %v1301 = vadd.f32 %v970, %v1151
    %v1302 = vadd.f32 %v971, %v1240
    %v1303 = vadd.f32 %v972, %v1154
    %v1304 = vadd.f32 %v973, %v1243
    %v1305 = vadd.f32 %v974, %v1157
    %v1306 = vadd.f32 %v975, %v1246
    %v1307 = vadd.f32 %v976, %v1160
    %v1308 = vadd.f32 %v977, %v1249
    %v1309 = vadd.f32 %v978, %v1163
    %v1310 = vadd.f32 %v979, %v1252
    %v1311 = vadd.f32 %v980, %v1166
    %v1312 = vadd.f32 %v981, %v1255
    %v1313 = vadd.f32 %v982, %v1169
    %v1314 = vadd.f32 %v983, %v1258
    %v1315 = vadd.f32 %v984, %v1172
    %v1316 = vadd.f32 %v985, %v1261
    %v1317 = vadd.f32 %v986, %v1175
    %v1318 = vadd.f32 %v987, %v1264
    %v1319 = vadd.f32 %v988, %v1178
    %v1320 = vadd.f32 %v989, %v1267
    %v1321 = vadd.f32 %v990, %v1181
    %v1322 = vadd.f32 %v991, %v1270
    %v1323 = vadd.f32 %v992, %v1184
    %v1324 = vadd.f32 %v993, %v1273
    %v1325 = vadd.f32 %v994, %v1187
    %v1326 = vadd.f32 %v995, %v1276
    %v1327 = vadd.f32 %v996, %v1190
    %v1328 = vadd.f32 %v997, %v1279
    %v1329 = vld [vmem:[%s0 + $0x4] sm:$0xff]
    %v1330 = vld [vmem:[%s0 + $0xc] sm:$0xff]
    %v1331 = vld [vmem:[%s0 + $0x14] sm:$0xff]
    %v1332 = vld [vmem:[%s0 + $0x24] sm:$0xff]
    %v1333 = vld [vmem:[%s0 + $0x2c] sm:$0xff]
    %v1334 = vld [vmem:[%s0 + $0x34] sm:$0xff]
    %v1335 = vld [vmem:[%s0 + $0x44] sm:$0xff]
    %v1336 = vld [vmem:[%s0 + $0x4c] sm:$0xff]
    %v1337 = vld [vmem:[%s0 + $0x54] sm:$0xff]
    %v1338 = vld [vmem:[%s0 + $0x64] sm:$0xff]
    %v1339 = vld [vmem:[%s0 + $0x6c] sm:$0xff]
    %v1340 = vld [vmem:[%s0 + $0x74] sm:$0xff]
    %v1341 = vld [vmem:[%s0 + $0x84] sm:$0xff]
    %v1342 = vld [vmem:[%s0 + $0x8c] sm:$0xff]
    %v1343 = vld [vmem:[%s0 + $0x94] sm:$0xff]
    %v1344 = vld [vmem:[%s0 + $0xa4] sm:$0xff]
    %v1345 = vld [vmem:[%s0 + $0xac] sm:$0xff]
    %v1346 = vld [vmem:[%s0 + $0xb4] sm:$0xff]
    %v1347 = vld [vmem:[%s0 + $0xc4] sm:$0xff]
    %v1348 = vld [vmem:[%s0 + $0xcc] sm:$0xff]
    %v1349 = vld [vmem:[%s0 + $0xd4] sm:$0xff]
    %v1350 = vld [vmem:[%s0 + $0xe4] sm:$0xff]
    %v1351 = vld [vmem:[%s0 + $0xec] sm:$0xff]
    %v1352 = vld [vmem:[%s0 + $0xf4] sm:$0xff]
    %s1353 = scalar_lea.vmem [#allocation4], 256
    %v1354 = vld [vmem:[%s1353] sm:$0xff]
    %v1355 = vld [vmem:[%s1353 + $0x8] sm:$0xff]
    %v1356 = vld [vmem:[%s1353 + $0x10] sm:$0xff]
    %v1357 = vld [vmem:[%s1353 + $0x18] sm:$0xff]
    %v1358 = vld [vmem:[%s1353 + $0x20] sm:$0xff]
    %v1359 = vld [vmem:[%s1353 + $0x28] sm:$0xff]
    %v1360 = vld [vmem:[%s1353 + $0x30] sm:$0xff]
    %v1361 = vld [vmem:[%s1353 + $0x38] sm:$0xff]
    %v1363 = vsel %vm166, %v1329, 0
    %v1366 = vsel %vm166, %v1330, 0
    %v1369 = vsel %vm166, %v1331, 0
    %v1372 = vsel %vm166, %v1332, 0
    %v1375 = vsel %vm166, %v1333, 0
    %v1378 = vsel %vm166, %v1334, 0
    %v1381 = vsel %vm166, %v1335, 0
    %v1384 = vsel %vm166, %v1336, 0
    %v1387 = vsel %vm166, %v1337, 0
    %v1390 = vsel %vm166, %v1338, 0
    %v1393 = vsel %vm166, %v1339, 0
    %v1396 = vsel %vm166, %v1340, 0
    %v1399 = vsel %vm166, %v1341, 0
    %v1402 = vsel %vm166, %v1342, 0
    %v1405 = vsel %vm166, %v1343, 0
    %v1408 = vsel %vm166, %v1344, 0
    %v1411 = vsel %vm166, %v1345, 0
    %v1414 = vsel %vm166, %v1346, 0
    %v1417 = vsel %vm166, %v1347, 0
    %v1420 = vsel %vm166, %v1348, 0
    %v1423 = vsel %vm166, %v1349, 0
    %v1426 = vsel %vm166, %v1350, 0
    %v1429 = vsel %vm166, %v1351, 0
    %v1432 = vsel %vm166, %v1352, 0
    %1434 = vmatpush.msra.mxu0 0.0
    %1435 = vmatpush.msra.mxu0 0.0
    %1436 = vmatpush.msra.mxu0 0.0
    %1437 = vmatpush.msra.mxu0 0.0
    %1438 = vmatpush.msra.mxu0 0.0
    %1439 = vmatpush.msra.mxu0 0.0
    %1440 = vmatpush.msra.mxu0 0.0
    %1441 = vmatpush.msra.mxu0 0.0
    %1442 = vmatpush.msra.mxu0 0.0
    %1443 = vmatpush.msra.mxu0 0.0
    %1444 = vmatpush.msra.mxu0 0.0
    %1445 = vmatpush.msra.mxu0 0.0
    %1446 = vmatpush.msra.mxu0 %v1360
    %1447 = vmatpush.msra.mxu0 %v1358
    %1448 = vmatpush.msra.mxu0 %v1356
    %1449 = vmatpush.msra.mxu0 %v1354
    %1450 = vmatmul.f32.gmra.mxu0 %v1363
    %v1451 = vpop.f32.mrf.mxu0
    %v1452 = vadd.f32 0.0, %v1451
    %1453 = vmatmul.f32.gmra.mxu0 %v1366
    %v1454 = vpop.f32.mrf.mxu0
    %v1455 = vadd.f32 0.0, %v1454
    %1456 = vmatmul.f32.gmra.mxu0 %v1369
    %v1457 = vpop.f32.mrf.mxu0
    %v1458 = vadd.f32 0.0, %v1457
    %1459 = vmatmul.f32.gmra.mxu0 %v1372
    %v1460 = vpop.f32.mrf.mxu0
    %v1461 = vadd.f32 0.0, %v1460
    %1462 = vmatmul.f32.gmra.mxu0 %v1375
    %v1463 = vpop.f32.mrf.mxu0
    %v1464 = vadd.f32 0.0, %v1463
    %1465 = vmatmul.f32.gmra.mxu0 %v1378
    %v1466 = vpop.f32.mrf.mxu0
    %v1467 = vadd.f32 0.0, %v1466
    %1468 = vmatmul.f32.gmra.mxu0 %v1381
    %v1469 = vpop.f32.mrf.mxu0
    %v1470 = vadd.f32 0.0, %v1469
    %1471 = vmatmul.f32.gmra.mxu0 %v1384
    %v1472 = vpop.f32.mrf.mxu0
    %v1473 = vadd.f32 0.0, %v1472
    %1474 = vmatmul.f32.gmra.mxu0 %v1387
    %v1475 = vpop.f32.mrf.mxu0
    %v1476 = vadd.f32 0.0, %v1475
    %1477 = vmatmul.f32.gmra.mxu0 %v1390
    %v1478 = vpop.f32.mrf.mxu0
    %v1479 = vadd.f32 0.0, %v1478
    %1480 = vmatmul.f32.gmra.mxu0 %v1393
    %v1481 = vpop.f32.mrf.mxu0
    %v1482 = vadd.f32 0.0, %v1481
    %1483 = vmatmul.f32.gmra.mxu0 %v1396
    %v1484 = vpop.f32.mrf.mxu0
    %v1485 = vadd.f32 0.0, %v1484
    %1486 = vmatmul.f32.gmra.mxu0 %v1399
    %v1487 = vpop.f32.mrf.mxu0
    %v1488 = vadd.f32 0.0, %v1487
    %1489 = vmatmul.f32.gmra.mxu0 %v1402
    %v1490 = vpop.f32.mrf.mxu0
    %v1491 = vadd.f32 0.0, %v1490
    %1492 = vmatmul.f32.gmra.mxu0 %v1405
    %v1493 = vpop.f32.mrf.mxu0
    %v1494 = vadd.f32 0.0, %v1493
    %1495 = vmatmul.f32.gmra.mxu0 %v1408
    %v1496 = vpop.f32.mrf.mxu0
    %v1497 = vadd.f32 0.0, %v1496
    %1498 = vmatmul.f32.gmra.mxu0 %v1411
    %v1499 = vpop.f32.mrf.mxu0
    %v1500 = vadd.f32 0.0, %v1499
    %1501 = vmatmul.f32.gmra.mxu0 %v1414
    %v1502 = vpop.f32.mrf.mxu0
    %v1503 = vadd.f32 0.0, %v1502
    %1504 = vmatmul.f32.gmra.mxu0 %v1417
    %v1505 = vpop.f32.mrf.mxu0
    %v1506 = vadd.f32 0.0, %v1505
    %1507 = vmatmul.f32.gmra.mxu0 %v1420
    %v1508 = vpop.f32.mrf.mxu0
    %v1509 = vadd.f32 0.0, %v1508
    %1510 = vmatmul.f32.gmra.mxu0 %v1423
    %v1511 = vpop.f32.mrf.mxu0
    %v1512 = vadd.f32 0.0, %v1511
    %1513 = vmatmul.f32.gmra.mxu0 %v1426
    %v1514 = vpop.f32.mrf.mxu0
    %v1515 = vadd.f32 0.0, %v1514
    %1516 = vmatmul.f32.gmra.mxu0 %v1429
    %v1517 = vpop.f32.mrf.mxu0
    %v1518 = vadd.f32 0.0, %v1517
    %1519 = vmatmul.f32.gmra.mxu0 %v1432
    %v1520 = vpop.f32.mrf.mxu0
    %v1521 = vadd.f32 0.0, %v1520
    %1522 = vdwg.mxu0
    %1523 = vmatpush.msra.mxu0 0.0
    %1524 = vmatpush.msra.mxu0 0.0
    %1525 = vmatpush.msra.mxu0 0.0
    %1526 = vmatpush.msra.mxu0 0.0
    %1527 = vmatpush.msra.mxu0 0.0
    %1528 = vmatpush.msra.mxu0 0.0
    %1529 = vmatpush.msra.mxu0 0.0
    %1530 = vmatpush.msra.mxu0 0.0
    %1531 = vmatpush.msra.mxu0 0.0
    %1532 = vmatpush.msra.mxu0 0.0
    %1533 = vmatpush.msra.mxu0 0.0
    %1534 = vmatpush.msra.mxu0 0.0
    %1535 = vmatpush.msra.mxu0 %v1361
    %1536 = vmatpush.msra.mxu0 %v1359
    %1537 = vmatpush.msra.mxu0 %v1357
    %1538 = vmatpush.msra.mxu0 %v1355
    %1539 = vmatmul.f32.gmra.mxu0 %v1363
    %v1540 = vpop.f32.mrf.mxu0
    %v1541 = vadd.f32 0.0, %v1540
    %1542 = vmatmul.f32.gmra.mxu0 %v1366
    %v1543 = vpop.f32.mrf.mxu0
    %v1544 = vadd.f32 0.0, %v1543
    %1545 = vmatmul.f32.gmra.mxu0 %v1369
    %v1546 = vpop.f32.mrf.mxu0
    %v1547 = vadd.f32 0.0, %v1546
    %1548 = vmatmul.f32.gmra.mxu0 %v1372
    %v1549 = vpop.f32.mrf.mxu0
    %v1550 = vadd.f32 0.0, %v1549
    %1551 = vmatmul.f32.gmra.mxu0 %v1375
    %v1552 = vpop.f32.mrf.mxu0
    %v1553 = vadd.f32 0.0, %v1552
    %1554 = vmatmul.f32.gmra.mxu0 %v1378
    %v1555 = vpop.f32.mrf.mxu0
    %v1556 = vadd.f32 0.0, %v1555
    %1557 = vmatmul.f32.gmra.mxu0 %v1381
    %v1558 = vpop.f32.mrf.mxu0
    %v1559 = vadd.f32 0.0, %v1558
    %1560 = vmatmul.f32.gmra.mxu0 %v1384
    %v1561 = vpop.f32.mrf.mxu0
    %v1562 = vadd.f32 0.0, %v1561
    %1563 = vmatmul.f32.gmra.mxu0 %v1387
    %v1564 = vpop.f32.mrf.mxu0
    %v1565 = vadd.f32 0.0, %v1564
    %1566 = vmatmul.f32.gmra.mxu0 %v1390
    %v1567 = vpop.f32.mrf.mxu0
    %v1568 = vadd.f32 0.0, %v1567
    %1569 = vmatmul.f32.gmra.mxu0 %v1393
    %v1570 = vpop.f32.mrf.mxu0
    %v1571 = vadd.f32 0.0, %v1570
    %1572 = vmatmul.f32.gmra.mxu0 %v1396
    %v1573 = vpop.f32.mrf.mxu0
    %v1574 = vadd.f32 0.0, %v1573
    %1575 = vmatmul.f32.gmra.mxu0 %v1399
    %v1576 = vpop.f32.mrf.mxu0
    %v1577 = vadd.f32 0.0, %v1576
    %1578 = vmatmul.f32.gmra.mxu0 %v1402
    %v1579 = vpop.f32.mrf.mxu0
    %v1580 = vadd.f32 0.0, %v1579
    %1581 = vmatmul.f32.gmra.mxu0 %v1405
    %v1582 = vpop.f32.mrf.mxu0
    %v1583 = vadd.f32 0.0, %v1582
    %1584 = vmatmul.f32.gmra.mxu0 %v1408
    %v1585 = vpop.f32.mrf.mxu0
    %v1586 = vadd.f32 0.0, %v1585
    %1587 = vmatmul.f32.gmra.mxu0 %v1411
    %v1588 = vpop.f32.mrf.mxu0
    %v1589 = vadd.f32 0.0, %v1588
    %1590 = vmatmul.f32.gmra.mxu0 %v1414
    %v1591 = vpop.f32.mrf.mxu0
    %v1592 = vadd.f32 0.0, %v1591
    %1593 = vmatmul.f32.gmra.mxu0 %v1417
    %v1594 = vpop.f32.mrf.mxu0
    %v1595 = vadd.f32 0.0, %v1594
    %1596 = vmatmul.f32.gmra.mxu0 %v1420
    %v1597 = vpop.f32.mrf.mxu0
    %v1598 = vadd.f32 0.0, %v1597
    %1599 = vmatmul.f32.gmra.mxu0 %v1423
    %v1600 = vpop.f32.mrf.mxu0
    %v1601 = vadd.f32 0.0, %v1600
    %1602 = vmatmul.f32.gmra.mxu0 %v1426
    %v1603 = vpop.f32.mrf.mxu0
    %v1604 = vadd.f32 0.0, %v1603
    %1605 = vmatmul.f32.gmra.mxu0 %v1429
    %v1606 = vpop.f32.mrf.mxu0
    %v1607 = vadd.f32 0.0, %v1606
    %1608 = vmatmul.f32.gmra.mxu0 %v1432
    %v1609 = vpop.f32.mrf.mxu0
    %v1610 = vadd.f32 0.0, %v1609
    %1611 = vdwg.mxu0
    %v1612 = vadd.f32 %v1281, %v1452
    %v1613 = vadd.f32 %v1282, %v1541
    %v1614 = vadd.f32 %v1283, %v1455
    %v1615 = vadd.f32 %v1284, %v1544
    %v1616 = vadd.f32 %v1285, %v1458
    %v1617 = vadd.f32 %v1286, %v1547
    %v1618 = vadd.f32 %v1287, %v1461
    %v1619 = vadd.f32 %v1288, %v1550
    %v1620 = vadd.f32 %v1289, %v1464
    %v1621 = vadd.f32 %v1290, %v1553
    %v1622 = vadd.f32 %v1291, %v1467
    %v1623 = vadd.f32 %v1292, %v1556
    %v1624 = vadd.f32 %v1293, %v1470
    %v1625 = vadd.f32 %v1294, %v1559
    %v1626 = vadd.f32 %v1295, %v1473
    %v1627 = vadd.f32 %v1296, %v1562
    %v1628 = vadd.f32 %v1297, %v1476
    %v1629 = vadd.f32 %v1298, %v1565
    %v1630 = vadd.f32 %v1299, %v1479
    %v1631 = vadd.f32 %v1300, %v1568
    %v1632 = vadd.f32 %v1301, %v1482
    %v1633 = vadd.f32 %v1302, %v1571
    %v1634 = vadd.f32 %v1303, %v1485
    %v1635 = vadd.f32 %v1304, %v1574
    %v1636 = vadd.f32 %v1305, %v1488
    %v1637 = vadd.f32 %v1306, %v1577
    %v1638 = vadd.f32 %v1307, %v1491
    %v1639 = vadd.f32 %v1308, %v1580
    %v1640 = vadd.f32 %v1309, %v1494
    %v1641 = vadd.f32 %v1310, %v1583
    %v1642 = vadd.f32 %v1311, %v1497
    %v1643 = vadd.f32 %v1312, %v1586
    %v1644 = vadd.f32 %v1313, %v1500
    %v1645 = vadd.f32 %v1314, %v1589
    %v1646 = vadd.f32 %v1315, %v1503
    %v1647 = vadd.f32 %v1316, %v1592
    %v1648 = vadd.f32 %v1317, %v1506
    %v1649 = vadd.f32 %v1318, %v1595
    %v1650 = vadd.f32 %v1319, %v1509
    %v1651 = vadd.f32 %v1320, %v1598
    %v1652 = vadd.f32 %v1321, %v1512
    %v1653 = vadd.f32 %v1322, %v1601
    %v1654 = vadd.f32 %v1323, %v1515
    %v1655 = vadd.f32 %v1324, %v1604
    %v1656 = vadd.f32 %v1325, %v1518
    %v1657 = vadd.f32 %v1326, %v1607
    %v1658 = vadd.f32 %v1327, %v1521
    %v1659 = vadd.f32 %v1328, %v1610
    %v1660 = vld [vmem:[%s2] sm:$0x3]
    %v1662 = vperm.slane %v1660, 0
    %v1663 = vperm.slane %v1660, 1
    %v1666 = vadd.f32 %v1612, %v1662
    %v1667 = vadd.f32 %v1613, %v1663
    %v1668 = vadd.f32 %v1614, %v1662
    %v1669 = vadd.f32 %v1615, %v1663
    %v1670 = vadd.f32 %v1616, %v1662
    %v1671 = vadd.f32 %v1617, %v1663
    %v1672 = vadd.f32 %v1618, %v1662
    %v1673 = vadd.f32 %v1619, %v1663
    %v1674 = vadd.f32 %v1620, %v1662
    %v1675 = vadd.f32 %v1621, %v1663
    %v1676 = vadd.f32 %v1622, %v1662
    %v1677 = vadd.f32 %v1623, %v1663
    %v1678 = vadd.f32 %v1624, %v1662
    %v1679 = vadd.f32 %v1625, %v1663
    %v1680 = vadd.f32 %v1626, %v1662
    %v1681 = vadd.f32 %v1627, %v1663
    %v1682 = vadd.f32 %v1628, %v1662
    %v1683 = vadd.f32 %v1629, %v1663
    %v1684 = vadd.f32 %v1630, %v1662
    %v1685 = vadd.f32 %v1631, %v1663
    %v1686 = vadd.f32 %v1632, %v1662
    %v1687 = vadd.f32 %v1633, %v1663
    %v1688 = vadd.f32 %v1634, %v1662
    %v1689 = vadd.f32 %v1635, %v1663
    %v1690 = vadd.f32 %v1636, %v1662
    %v1691 = vadd.f32 %v1637, %v1663
    %v1692 = vadd.f32 %v1638, %v1662
    %v1693 = vadd.f32 %v1639, %v1663
    %v1694 = vadd.f32 %v1640, %v1662
    %v1695 = vadd.f32 %v1641, %v1663
    %v1696 = vadd.f32 %v1642, %v1662
    %v1697 = vadd.f32 %v1643, %v1663
    %v1698 = vadd.f32 %v1644, %v1662
    %v1699 = vadd.f32 %v1645, %v1663
    %v1700 = vadd.f32 %v1646, %v1662
    %v1701 = vadd.f32 %v1647, %v1663
    %v1702 = vadd.f32 %v1648, %v1662
    %v1703 = vadd.f32 %v1649, %v1663
    %v1704 = vadd.f32 %v1650, %v1662
    %v1705 = vadd.f32 %v1651, %v1663
    %v1706 = vadd.f32 %v1652, %v1662
    %v1707 = vadd.f32 %v1653, %v1663
    %v1708 = vadd.f32 %v1654, %v1662
    %v1709 = vadd.f32 %v1655, %v1663
    %v1710 = vadd.f32 %v1656, %v1662
    %v1711 = vadd.f32 %v1657, %v1663
    %v1712 = vadd.f32 %v1658, %v1662
    %v1713 = vadd.f32 %v1659, %v1663
    %v1714 = vsub.f32 0.0, %v1666
    %v1715 = vsub.f32 0.0, %v1667
    %v1716 = vsub.f32 0.0, %v1668
    %v1717 = vsub.f32 0.0, %v1669
    %v1718 = vsub.f32 0.0, %v1670
    %v1719 = vsub.f32 0.0, %v1671
    %v1720 = vsub.f32 0.0, %v1672
    %v1721 = vsub.f32 0.0, %v1673
    %v1722 = vsub.f32 0.0, %v1674
    %v1723 = vsub.f32 0.0, %v1675
    %v1724 = vsub.f32 0.0, %v1676
    %v1725 = vsub.f32 0.0, %v1677
    %v1726 = vsub.f32 0.0, %v1678
    %v1727 = vsub.f32 0.0, %v1679
    %v1728 = vsub.f32 0.0, %v1680
    %v1729 = vsub.f32 0.0, %v1681
    %v1730 = vsub.f32 0.0, %v1682
    %v1731 = vsub.f32 0.0, %v1683
    %v1732 = vsub.f32 0.0, %v1684
    %v1733 = vsub.f32 0.0, %v1685
    %v1734 = vsub.f32 0.0, %v1686
    %v1735 = vsub.f32 0.0, %v1687
    %v1736 = vsub.f32 0.0, %v1688
    %v1737 = vsub.f32 0.0, %v1689
    %v1738 = vsub.f32 0.0, %v1690
    %v1739 = vsub.f32 0.0, %v1691
    %v1740 = vsub.f32 0.0, %v1692
    %v1741 = vsub.f32 0.0, %v1693
    %v1742 = vsub.f32 0.0, %v1694
    %v1743 = vsub.f32 0.0, %v1695
    %v1744 = vsub.f32 0.0, %v1696
    %v1745 = vsub.f32 0.0, %v1697
    %v1746 = vsub.f32 0.0, %v1698
    %v1747 = vsub.f32 0.0, %v1699
    %v1748 = vsub.f32 0.0, %v1700
    %v1749 = vsub.f32 0.0, %v1701
    %v1750 = vsub.f32 0.0, %v1702
    %v1751 = vsub.f32 0.0, %v1703
    %v1752 = vsub.f32 0.0, %v1704
    %v1753 = vsub.f32 0.0, %v1705
    %v1754 = vsub.f32 0.0, %v1706
    %v1755 = vsub.f32 0.0, %v1707
    %v1756 = vsub.f32 0.0, %v1708
    %v1757 = vsub.f32 0.0, %v1709
    %v1758 = vsub.f32 0.0, %v1710
    %v1759 = vsub.f32 0.0, %v1711
    %v1760 = vsub.f32 0.0, %v1712
    %v1761 = vsub.f32 0.0, %v1713
    %v1762 = vmul.f32 %v1714, 1.442695
    %v1763 = vpow.pop %v1762
    %v1764 = vmul.f32 %v1715, 1.442695
    %v1765 = vpow.pop %v1764
    %v1766 = vmul.f32 %v1716, 1.442695
    %v1767 = vpow.pop %v1766
    %v1768 = vmul.f32 %v1717, 1.442695
    %v1769 = vpow.pop %v1768
    %v1770 = vmul.f32 %v1718, 1.442695
    %v1771 = vpow.pop %v1770
    %v1772 = vmul.f32 %v1719, 1.442695
    %v1773 = vpow.pop %v1772
    %v1774 = vmul.f32 %v1720, 1.442695
    %v1775 = vpow.pop %v1774
    %v1776 = vmul.f32 %v1721, 1.442695
    %v1777 = vpow.pop %v1776
    %v1778 = vmul.f32 %v1722, 1.442695
    %v1779 = vpow.pop %v1778
    %v1780 = vmul.f32 %v1723, 1.442695
    %v1781 = vpow.pop %v1780
    %v1782 = vmul.f32 %v1724, 1.442695
    %v1783 = vpow.pop %v1782
    %v1784 = vmul.f32 %v1725, 1.442695
    %v1785 = vpow.pop %v1784
    %v1786 = vmul.f32 %v1726, 1.442695
    %v1787 = vpow.pop %v1786
    %v1788 = vmul.f32 %v1727, 1.442695
    %v1789 = vpow.pop %v1788
    %v1790 = vmul.f32 %v1728, 1.442695
    %v1791 = vpow.pop %v1790
    %v1792 = vmul.f32 %v1729, 1.442695
    %v1793 = vpow.pop %v1792
    %v1794 = vmul.f32 %v1730, 1.442695
    %v1795 = vpow.pop %v1794
    %v1796 = vmul.f32 %v1731, 1.442695
    %v1797 = vpow.pop %v1796
    %v1798 = vmul.f32 %v1732, 1.442695
    %v1799 = vpow.pop %v1798
    %v1800 = vmul.f32 %v1733, 1.442695
    %v1801 = vpow.pop %v1800
    %v1802 = vmul.f32 %v1734, 1.442695
    %v1803 = vpow.pop %v1802
    %v1804 = vmul.f32 %v1735, 1.442695
    %v1805 = vpow.pop %v1804
    %v1806 = vmul.f32 %v1736, 1.442695
    %v1807 = vpow.pop %v1806
    %v1808 = vmul.f32 %v1737, 1.442695
    %v1809 = vpow.pop %v1808
    %v1810 = vmul.f32 %v1738, 1.442695
    %v1811 = vpow.pop %v1810
    %v1812 = vmul.f32 %v1739, 1.442695
    %v1813 = vpow.pop %v1812
    %v1814 = vmul.f32 %v1740, 1.442695
    %v1815 = vpow.pop %v1814
    %v1816 = vmul.f32 %v1741, 1.442695
    %v1817 = vpow.pop %v1816
    %v1818 = vmul.f32 %v1742, 1.442695
    %v1819 = vpow.pop %v1818
    %v1820 = vmul.f32 %v1743, 1.442695
    %v1821 = vpow.pop %v1820
    %v1822 = vmul.f32 %v1744, 1.442695
    %v1823 = vpow.pop %v1822
    %v1824 = vmul.f32 %v1745, 1.442695
    %v1825 = vpow.pop %v1824
    %v1826 = vmul.f32 %v1746, 1.442695
    %v1827 = vpow.pop %v1826
    %v1828 = vmul.f32 %v1747, 1.442695
    %v1829 = vpow.pop %v1828
    %v1830 = vmul.f32 %v1748, 1.442695
    %v1831 = vpow.pop %v1830
    %v1832 = vmul.f32 %v1749, 1.442695
    %v1833 = vpow.pop %v1832
    %v1834 = vmul.f32 %v1750, 1.442695
    %v1835 = vpow.pop %v1834
    %v1836 = vmul.f32 %v1751, 1.442695
    %v1837 = vpow.pop %v1836
    %v1838 = vmul.f32 %v1752, 1.442695
    %v1839 = vpow.pop %v1838
    %v1840 = vmul.f32 %v1753, 1.442695
    %v1841 = vpow.pop %v1840
    %v1842 = vmul.f32 %v1754, 1.442695
    %v1843 = vpow.pop %v1842
    %v1844 = vmul.f32 %v1755, 1.442695
    %v1845 = vpow.pop %v1844
    %v1846 = vmul.f32 %v1756, 1.442695
    %v1847 = vpow.pop %v1846
    %v1848 = vmul.f32 %v1757, 1.442695
    %v1849 = vpow.pop %v1848
    %v1850 = vmul.f32 %v1758, 1.442695
    %v1851 = vpow.pop %v1850
    %v1852 = vmul.f32 %v1759, 1.442695
    %v1853 = vpow.pop %v1852
    %v1854 = vmul.f32 %v1760, 1.442695
    %v1855 = vpow.pop %v1854
    %v1856 = vmul.f32 %v1761, 1.442695
    %v1857 = vpow.pop %v1856
    %v1858 = vadd.f32 %v1763, 1.0
    %v1859 = vadd.f32 %v1765, 1.0
    %v1860 = vadd.f32 %v1767, 1.0
    %v1861 = vadd.f32 %v1769, 1.0
    %v1862 = vadd.f32 %v1771, 1.0
    %v1863 = vadd.f32 %v1773, 1.0
    %v1864 = vadd.f32 %v1775, 1.0
    %v1865 = vadd.f32 %v1777, 1.0
    %v1866 = vadd.f32 %v1779, 1.0
    %v1867 = vadd.f32 %v1781, 1.0
    %v1868 = vadd.f32 %v1783, 1.0
    %v1869 = vadd.f32 %v1785, 1.0
    %v1870 = vadd.f32 %v1787, 1.0
    %v1871 = vadd.f32 %v1789, 1.0
    %v1872 = vadd.f32 %v1791, 1.0
    %v1873 = vadd.f32 %v1793, 1.0
    %v1874 = vadd.f32 %v1795, 1.0
    %v1875 = vadd.f32 %v1797, 1.0
    %v1876 = vadd.f32 %v1799, 1.0
    %v1877 = vadd.f32 %v1801, 1.0
    %v1878 = vadd.f32 %v1803, 1.0
    %v1879 = vadd.f32 %v1805, 1.0
    %v1880 = vadd.f32 %v1807, 1.0
    %v1881 = vadd.f32 %v1809, 1.0
    %v1882 = vadd.f32 %v1811, 1.0
    %v1883 = vadd.f32 %v1813, 1.0
    %v1884 = vadd.f32 %v1815, 1.0
    %v1885 = vadd.f32 %v1817, 1.0
    %v1886 = vadd.f32 %v1819, 1.0
    %v1887 = vadd.f32 %v1821, 1.0
    %v1888 = vadd.f32 %v1823, 1.0
    %v1889 = vadd.f32 %v1825, 1.0
    %v1890 = vadd.f32 %v1827, 1.0
    %v1891 = vadd.f32 %v1829, 1.0
    %v1892 = vadd.f32 %v1831, 1.0
    %v1893 = vadd.f32 %v1833, 1.0
    %v1894 = vadd.f32 %v1835, 1.0
    %v1895 = vadd.f32 %v1837, 1.0
    %v1896 = vadd.f32 %v1839, 1.0
    %v1897 = vadd.f32 %v1841, 1.0
    %v1898 = vadd.f32 %v1843, 1.0
    %v1899 = vadd.f32 %v1845, 1.0
    %v1900 = vadd.f32 %v1847, 1.0
    %v1901 = vadd.f32 %v1849, 1.0
    %v1902 = vadd.f32 %v1851, 1.0
    %v1903 = vadd.f32 %v1853, 1.0
    %v1904 = vadd.f32 %v1855, 1.0
    %v1905 = vadd.f32 %v1857, 1.0
    %v1906 = vrcp.pop %v1858
    %v1907 = vrcp.pop %v1859
    %v1908 = vrcp.pop %v1860
    %v1909 = vrcp.pop %v1861
    %v1910 = vrcp.pop %v1862
    %v1911 = vrcp.pop %v1863
    %v1912 = vrcp.pop %v1864
    %v1913 = vrcp.pop %v1865
    %v1914 = vrcp.pop %v1866
    %v1915 = vrcp.pop %v1867
    %v1916 = vrcp.pop %v1868
    %v1917 = vrcp.pop %v1869
    %v1918 = vrcp.pop %v1870
    %v1919 = vrcp.pop %v1871
    %v1920 = vrcp.pop %v1872
    %v1921 = vrcp.pop %v1873
    %v1922 = vrcp.pop %v1874
    %v1923 = vrcp.pop %v1875
    %v1924 = vrcp.pop %v1876
    %v1925 = vrcp.pop %v1877
    %v1926 = vrcp.pop %v1878
    %v1927 = vrcp.pop %v1879
    %v1928 = vrcp.pop %v1880
    %v1929 = vrcp.pop %v1881
    %v1930 = vrcp.pop %v1882
    %v1931 = vrcp.pop %v1883
    %v1932 = vrcp.pop %v1884
    %v1933 = vrcp.pop %v1885
    %v1934 = vrcp.pop %v1886
    %v1935 = vrcp.pop %v1887
    %v1936 = vrcp.pop %v1888
    %v1937 = vrcp.pop %v1889
    %v1938 = vrcp.pop %v1890
    %v1939 = vrcp.pop %v1891
    %v1940 = vrcp.pop %v1892
    %v1941 = vrcp.pop %v1893
    %v1942 = vrcp.pop %v1894
    %v1943 = vrcp.pop %v1895
    %v1944 = vrcp.pop %v1896
    %v1945 = vrcp.pop %v1897
    %v1946 = vrcp.pop %v1898
    %v1947 = vrcp.pop %v1899
    %v1948 = vrcp.pop %v1900
    %v1949 = vrcp.pop %v1901
    %v1950 = vrcp.pop %v1902
    %v1951 = vrcp.pop %v1903
    %v1952 = vrcp.pop %v1904
    %v1953 = vrcp.pop %v1905
    %v1954 = vmax.f32 %v1906, %v1907
    %v1955 = vmax.f32 %v1908, %v1909
    %v1956 = vmax.f32 %v1910, %v1911
    %v1957 = vmax.f32 %v1912, %v1913
    %v1958 = vmax.f32 %v1914, %v1915
    %v1959 = vmax.f32 %v1916, %v1917
    %v1960 = vmax.f32 %v1918, %v1919
    %v1961 = vmax.f32 %v1920, %v1921
    %v1962 = vmax.f32 %v1922, %v1923
    %v1963 = vmax.f32 %v1924, %v1925
    %v1964 = vmax.f32 %v1926, %v1927
    %v1965 = vmax.f32 %v1928, %v1929
    %v1966 = vmax.f32 %v1930, %v1931
    %v1967 = vmax.f32 %v1932, %v1933
    %v1968 = vmax.f32 %v1934, %v1935
    %v1969 = vmax.f32 %v1936, %v1937
    %v1970 = vmax.f32 %v1938, %v1939
    %v1971 = vmax.f32 %v1940, %v1941
    %v1972 = vmax.f32 %v1942, %v1943
    %v1973 = vmax.f32 %v1944, %v1945
    %v1974 = vmax.f32 %v1946, %v1947
    %v1975 = vmax.f32 %v1948, %v1949
    %v1976 = vmax.f32 %v1950, %v1951
    %v1977 = vmax.f32 %v1952, %v1953
    %1978 = vst [vmem:[#allocation2] sm:$0xff] %v1954
    %1979 = vst [vmem:[#allocation2 + $0x8] sm:$0xff] %v1955
    %1980 = vst [vmem:[#allocation2 + $0x10] sm:$0xff] %v1956
    %1981 = vst [vmem:[#allocation2 + $0x20] sm:$0xff] %v1957
    %1982 = vst [vmem:[#allocation2 + $0x28] sm:$0xff] %v1958
    %1983 = vst [vmem:[#allocation2 + $0x30] sm:$0xff] %v1959
    %1984 = vst [vmem:[#allocation2 + $0x40] sm:$0xff] %v1960
    %1985 = vst [vmem:[#allocation2 + $0x48] sm:$0xff] %v1961
    %1986 = vst [vmem:[#allocation2 + $0x50] sm:$0xff] %v1962
    %1987 = vst [vmem:[#allocation2 + $0x60] sm:$0xff] %v1963
    %1988 = vst [vmem:[#allocation2 + $0x68] sm:$0xff] %v1964
    %1989 = vst [vmem:[#allocation2 + $0x70] sm:$0xff] %v1965
    %1990 = vst [vmem:[#allocation2 + $0x80] sm:$0xff] %v1966
    %1991 = vst [vmem:[#allocation2 + $0x88] sm:$0xff] %v1967
    %1992 = vst [vmem:[#allocation2 + $0x90] sm:$0xff] %v1968
    %1993 = vst [vmem:[#allocation2 + $0xa0] sm:$0xff] %v1969
    %1994 = vst [vmem:[#allocation2 + $0xa8] sm:$0xff] %v1970
    %1995 = vst [vmem:[#allocation2 + $0xb0] sm:$0xff] %v1971
    %1996 = vst [vmem:[#allocation2 + $0xc0] sm:$0xff] %v1972
    %1997 = vst [vmem:[#allocation2 + $0xc8] sm:$0xff] %v1973
    %1998 = vst [vmem:[#allocation2 + $0xd0] sm:$0xff] %v1974
    %1999 = vst [vmem:[#allocation2 + $0xe0] sm:$0xff] %v1975
    %2000 = vst [vmem:[#allocation2 + $0xe8] sm:$0xff] %v1976
    %2001 = vst [vmem:[#allocation2 + $0xf0] sm:$0xff] %v1977
    %2002 = vst [vmem:[#allocation2 + $0x18] sm:$0xff] 0.0
    %2003 = vst [vmem:[#allocation2 + $0x38] sm:$0xff] 0.0
    %2004 = vst [vmem:[#allocation2 + $0x58] sm:$0xff] 0.0
    %2005 = vst [vmem:[#allocation2 + $0x78] sm:$0xff] 0.0
    %2006 = vst [vmem:[#allocation2 + $0x98] sm:$0xff] 0.0
    %2007 = vst [vmem:[#allocation2 + $0xb8] sm:$0xff] 0.0
    %2008 = vst [vmem:[#allocation2 + $0xd8] sm:$0xff] 0.0
    %2009 = vst [vmem:[#allocation2 + $0xf8] sm:$0xff] 0.0
    %v2010 = vld [vmem:[#allocation2] sm:$0xff]
    %v2011 = vld [vmem:[#allocation2 + $0x8] sm:$0xff]
    %v2012 = vld [vmem:[#allocation2 + $0x20] sm:$0xff]
    %v2013 = vld [vmem:[#allocation2 + $0x28] sm:$0xff]
    %v2014 = vld [vmem:[#allocation2 + $0x40] sm:$0xff]
    %v2015 = vld [vmem:[#allocation2 + $0x48] sm:$0xff]
    %v2016 = vld [vmem:[#allocation2 + $0x60] sm:$0xff]
    %v2017 = vld [vmem:[#allocation2 + $0x68] sm:$0xff]
    %v2018 = vld [vmem:[#allocation2 + $0x80] sm:$0xff]
    %v2019 = vld [vmem:[#allocation2 + $0x88] sm:$0xff]
    %v2020 = vld [vmem:[#allocation2 + $0xa0] sm:$0xff]
    %v2021 = vld [vmem:[#allocation2 + $0xa8] sm:$0xff]
    %v2022 = vld [vmem:[#allocation2 + $0xc0] sm:$0xff]
    %v2023 = vld [vmem:[#allocation2 + $0xc8] sm:$0xff]
    %v2024 = vld [vmem:[#allocation2 + $0xe0] sm:$0xff]
    %v2025 = vld [vmem:[#allocation2 + $0xe8] sm:$0xff]
    %v2026 = vld [vmem:[#allocation2 + $0x1] sm:$0xff]
    %v2027 = vld [vmem:[#allocation2 + $0x9] sm:$0xff]
    %v2028 = vld [vmem:[#allocation2 + $0x21] sm:$0xff]
    %v2029 = vld [vmem:[#allocation2 + $0x29] sm:$0xff]
    %v2030 = vld [vmem:[#allocation2 + $0x41] sm:$0xff]
    %v2031 = vld [vmem:[#allocation2 + $0x49] sm:$0xff]
    %v2032 = vld [vmem:[#allocation2 + $0x61] sm:$0xff]
    %v2033 = vld [vmem:[#allocation2 + $0x69] sm:$0xff]
    %v2034 = vld [vmem:[#allocation2 + $0x81] sm:$0xff]
    %v2035 = vld [vmem:[#allocation2 + $0x89] sm:$0xff]
    %v2036 = vld [vmem:[#allocation2 + $0xa1] sm:$0xff]
    %v2037 = vld [vmem:[#allocation2 + $0xa9] sm:$0xff]
    %v2038 = vld [vmem:[#allocation2 + $0xc1] sm:$0xff]
    %v2039 = vld [vmem:[#allocation2 + $0xc9] sm:$0xff]
    %v2040 = vld [vmem:[#allocation2 + $0xe1] sm:$0xff]
    %v2041 = vld [vmem:[#allocation2 + $0xe9] sm:$0xff]
    %v2042 = vmax.f32 %v2010, %v2026
    %v2043 = vmax.f32 %v2011, %v2027
    %v2044 = vmax.f32 %v2012, %v2028
    %v2045 = vmax.f32 %v2013, %v2029
    %v2046 = vmax.f32 %v2014, %v2030
    %v2047 = vmax.f32 %v2015, %v2031
    %v2048 = vmax.f32 %v2016, %v2032
    %v2049 = vmax.f32 %v2017, %v2033
    %v2050 = vmax.f32 %v2018, %v2034
    %v2051 = vmax.f32 %v2019, %v2035
    %v2052 = vmax.f32 %v2020, %v2036
    %v2053 = vmax.f32 %v2021, %v2037
    %v2054 = vmax.f32 %v2022, %v2038
    %v2055 = vmax.f32 %v2023, %v2039
    %v2056 = vmax.f32 %v2024, %v2040
    %v2057 = vmax.f32 %v2025, %v2041
    %v2058 = vld [vmem:[#allocation6] sm:$0xff]
    %v2059 = vld [vmem:[#allocation6 + $0x8] sm:$0xff]
    %v2060 = vld [vmem:[#allocation6 + $0x10] sm:$0xff]
    %v2061 = vld [vmem:[#allocation6 + $0x18] sm:$0xff]
    %v2062 = vld [vmem:[#allocation6 + $0x20] sm:$0xff]
    %v2063 = vld [vmem:[#allocation6 + $0x28] sm:$0xff]
    %v2064 = vld [vmem:[#allocation6 + $0x30] sm:$0xff]
    %v2065 = vld [vmem:[#allocation6 + $0x38] sm:$0xff]
    %v2066 = vld [vmem:[#allocation6 + $0x40] sm:$0xff]
    %v2067 = vld [vmem:[#allocation6 + $0x48] sm:$0xff]
    %v2068 = vld [vmem:[#allocation6 + $0x50] sm:$0xff]
    %v2069 = vld [vmem:[#allocation6 + $0x58] sm:$0xff]
    %v2070 = vld [vmem:[#allocation6 + $0x60] sm:$0xff]
    %v2071 = vld [vmem:[#allocation6 + $0x68] sm:$0xff]
    %v2072 = vld [vmem:[#allocation6 + $0x70] sm:$0xff]
    %v2073 = vld [vmem:[#allocation6 + $0x78] sm:$0xff]
    %v2074 = vld [vmem:[#allocation6 + $0x80] sm:$0xff]
    %v2075 = vld [vmem:[#allocation6 + $0x88] sm:$0xff]
    %v2076 = vld [vmem:[#allocation6 + $0x90] sm:$0xff]
    %v2077 = vld [vmem:[#allocation6 + $0x98] sm:$0xff]
    %v2078 = vld [vmem:[#allocation6 + $0xa0] sm:$0xff]
    %v2079 = vld [vmem:[#allocation6 + $0xa8] sm:$0xff]
    %v2080 = vld [vmem:[#allocation6 + $0xb0] sm:$0xff]
    %v2081 = vld [vmem:[#allocation6 + $0xb8] sm:$0xff]
    %v2082 = vld [vmem:[#allocation6 + $0xc0] sm:$0xff]
    %v2083 = vld [vmem:[#allocation6 + $0xc8] sm:$0xff]
    %v2084 = vld [vmem:[#allocation6 + $0xd0] sm:$0xff]
    %v2085 = vld [vmem:[#allocation6 + $0xd8] sm:$0xff]
    %v2086 = vld [vmem:[#allocation6 + $0xe0] sm:$0xff]
    %v2087 = vld [vmem:[#allocation6 + $0xe8] sm:$0xff]
    %v2088 = vld [vmem:[#allocation6 + $0xf0] sm:$0xff]
    %v2089 = vld [vmem:[#allocation6 + $0xf8] sm:$0xff]
    %v2090 = vld [vmem:[#allocation2 + $0x2] sm:$0xff]
    %v2091 = vld [vmem:[#allocation2 + $0xa] sm:$0xff]
    %v2092 = vld [vmem:[#allocation2 + $0x22] sm:$0xff]
    %v2093 = vld [vmem:[#allocation2 + $0x2a] sm:$0xff]
    %v2094 = vld [vmem:[#allocation2 + $0x42] sm:$0xff]
    %v2095 = vld [vmem:[#allocation2 + $0x4a] sm:$0xff]
    %v2096 = vld [vmem:[#allocation2 + $0x62] sm:$0xff]
    %v2097 = vld [vmem:[#allocation2 + $0x6a] sm:$0xff]
    %v2098 = vld [vmem:[#allocation2 + $0x82] sm:$0xff]
    %v2099 = vld [vmem:[#allocation2 + $0x8a] sm:$0xff]
    %v2100 = vld [vmem:[#allocation2 + $0xa2] sm:$0xff]
    %v2101 = vld [vmem:[#allocation2 + $0xaa] sm:$0xff]
    %v2102 = vld [vmem:[#allocation2 + $0xc2] sm:$0xff]
    %v2103 = vld [vmem:[#allocation2 + $0xca] sm:$0xff]
    %v2104 = vld [vmem:[#allocation2 + $0xe2] sm:$0xff]
    %v2105 = vld [vmem:[#allocation2 + $0xea] sm:$0xff]
    %v2106 = vld [vmem:[#allocation2 + $0x3] sm:$0xff]
    %v2107 = vld [vmem:[#allocation2 + $0xb] sm:$0xff]
    %v2108 = vld [vmem:[#allocation2 + $0x23] sm:$0xff]
    %v2109 = vld [vmem:[#allocation2 + $0x2b] sm:$0xff]
    %v2110 = vld [vmem:[#allocation2 + $0x43] sm:$0xff]
    %v2111 = vld [vmem:[#allocation2 + $0x4b] sm:$0xff]
    %v2112 = vld [vmem:[#allocation2 + $0x63] sm:$0xff]
    %v2113 = vld [vmem:[#allocation2 + $0x6b] sm:$0xff]
    %v2114 = vld [vmem:[#allocation2 + $0x83] sm:$0xff]
    %v2115 = vld [vmem:[#allocation2 + $0x8b] sm:$0xff]
    %v2116 = vld [vmem:[#allocation2 + $0xa3] sm:$0xff]
    %v2117 = vld [vmem:[#allocation2 + $0xab] sm:$0xff]
    %v2118 = vld [vmem:[#allocation2 + $0xc3] sm:$0xff]
    %v2119 = vld [vmem:[#allocation2 + $0xcb] sm:$0xff]
    %v2120 = vld [vmem:[#allocation2 + $0xe3] sm:$0xff]
    %v2121 = vld [vmem:[#allocation2 + $0xeb] sm:$0xff]
    %v2122 = vmax.f32 %v2090, %v2106
    %v2123 = vmax.f32 %v2091, %v2107
    %v2124 = vmax.f32 %v2092, %v2108
    %v2125 = vmax.f32 %v2093, %v2109
    %v2126 = vmax.f32 %v2094, %v2110
    %v2127 = vmax.f32 %v2095, %v2111
    %v2128 = vmax.f32 %v2096, %v2112
    %v2129 = vmax.f32 %v2097, %v2113
    %v2130 = vmax.f32 %v2098, %v2114
    %v2131 = vmax.f32 %v2099, %v2115
    %v2132 = vmax.f32 %v2100, %v2116
    %v2133 = vmax.f32 %v2101, %v2117
    %v2134 = vmax.f32 %v2102, %v2118
    %v2135 = vmax.f32 %v2103, %v2119
    %v2136 = vmax.f32 %v2104, %v2120
    %v2137 = vmax.f32 %v2105, %v2121
    %s2138 = scalar_lea.vmem [#allocation6], 256
    %v2139 = vld [vmem:[%s2138] sm:$0xff]
    %v2140 = vld [vmem:[%s2138 + $0x8] sm:$0xff]
    %v2141 = vld [vmem:[%s2138 + $0x10] sm:$0xff]
    %v2142 = vld [vmem:[%s2138 + $0x18] sm:$0xff]
    %v2143 = vld [vmem:[%s2138 + $0x20] sm:$0xff]
    %v2144 = vld [vmem:[%s2138 + $0x28] sm:$0xff]
    %v2145 = vld [vmem:[%s2138 + $0x30] sm:$0xff]
    %v2146 = vld [vmem:[%s2138 + $0x38] sm:$0xff]
    %v2147 = vld [vmem:[%s2138 + $0x40] sm:$0xff]
    %v2148 = vld [vmem:[%s2138 + $0x48] sm:$0xff]
    %v2149 = vld [vmem:[%s2138 + $0x50] sm:$0xff]
    %v2150 = vld [vmem:[%s2138 + $0x58] sm:$0xff]
    %v2151 = vld [vmem:[%s2138 + $0x60] sm:$0xff]
    %v2152 = vld [vmem:[%s2138 + $0x68] sm:$0xff]
    %v2153 = vld [vmem:[%s2138 + $0x70] sm:$0xff]
    %v2154 = vld [vmem:[%s2138 + $0x78] sm:$0xff]
    %v2155 = vld [vmem:[%s2138 + $0x80] sm:$0xff]
    %v2156 = vld [vmem:[%s2138 + $0x88] sm:$0xff]
    %v2157 = vld [vmem:[%s2138 + $0x90] sm:$0xff]
    %v2158 = vld [vmem:[%s2138 + $0x98] sm:$0xff]
    %v2159 = vld [vmem:[%s2138 + $0xa0] sm:$0xff]
    %v2160 = vld [vmem:[%s2138 + $0xa8] sm:$0xff]
    %v2161 = vld [vmem:[%s2138 + $0xb0] sm:$0xff]
    %v2162 = vld [vmem:[%s2138 + $0xb8] sm:$0xff]
    %v2163 = vld [vmem:[%s2138 + $0xc0] sm:$0xff]
    %v2164 = vld [vmem:[%s2138 + $0xc8] sm:$0xff]
    %v2165 = vld [vmem:[%s2138 + $0xd0] sm:$0xff]
    %v2166 = vld [vmem:[%s2138 + $0xd8] sm:$0xff]
    %v2167 = vld [vmem:[%s2138 + $0xe0] sm:$0xff]
    %v2168 = vld [vmem:[%s2138 + $0xe8] sm:$0xff]
    %v2169 = vld [vmem:[%s2138 + $0xf0] sm:$0xff]
    %v2170 = vld [vmem:[%s2138 + $0xf8] sm:$0xff]
    %2171 = vmatpush.msra.mxu0 %v2169
    %2172 = vmatpush.msra.mxu0 %v2167
    %2173 = vmatpush.msra.mxu0 %v2165
    %2174 = vmatpush.msra.mxu0 %v2163
    %2175 = vmatpush.msra.mxu0 %v2161
    %2176 = vmatpush.msra.mxu0 %v2159
    %2177 = vmatpush.msra.mxu0 %v2157
    %2178 = vmatpush.msra.mxu0 %v2155
    %2179 = vmatpush.msra.mxu0 %v2153
    %2180 = vmatpush.msra.mxu0 %v2151
    %2181 = vmatpush.msra.mxu0 %v2149
    %2182 = vmatpush.msra.mxu0 %v2147
    %2183 = vmatpush.msra.mxu0 %v2145
    %2184 = vmatpush.msra.mxu0 %v2143
    %2185 = vmatpush.msra.mxu0 %v2141
    %2186 = vmatpush.msra.mxu0 %v2139
    %2187 = vmatmul.f32.gmra.mxu0 %v2122
    %v2188 = vpop.f32.mrf.mxu0
    %v2189 = vadd.f32 0.0, %v2188
    %2190 = vmatmul.f32.gmra.mxu0 %v2123
    %v2191 = vpop.f32.mrf.mxu0
    %v2192 = vadd.f32 0.0, %v2191
    %2193 = vmatmul.f32.gmra.mxu0 %v2124
    %v2194 = vpop.f32.mrf.mxu0
    %v2195 = vadd.f32 0.0, %v2194
    %2196 = vmatmul.f32.gmra.mxu0 %v2125
    %v2197 = vpop.f32.mrf.mxu0
    %v2198 = vadd.f32 0.0, %v2197
    %2199 = vmatmul.f32.gmra.mxu0 %v2126
    %v2200 = vpop.f32.mrf.mxu0
    %v2201 = vadd.f32 0.0, %v2200
    %2202 = vmatmul.f32.gmra.mxu0 %v2127
    %v2203 = vpop.f32.mrf.mxu0
    %v2204 = vadd.f32 0.0, %v2203
    %2205 = vmatmul.f32.gmra.mxu0 %v2128
    %v2206 = vpop.f32.mrf.mxu0
    %v2207 = vadd.f32 0.0, %v2206
    %2208 = vmatmul.f32.gmra.mxu0 %v2129
    %v2209 = vpop.f32.mrf.mxu0
    %v2210 = vadd.f32 0.0, %v2209
    %2211 = vmatmul.f32.gmra.mxu0 %v2130
    %v2212 = vpop.f32.mrf.mxu0
    %v2213 = vadd.f32 0.0, %v2212
    %2214 = vmatmul.f32.gmra.mxu0 %v2131
    %v2215 = vpop.f32.mrf.mxu0
    %v2216 = vadd.f32 0.0, %v2215
    %2217 = vmatmul.f32.gmra.mxu0 %v2132
    %v2218 = vpop.f32.mrf.mxu0
    %v2219 = vadd.f32 0.0, %v2218
    %2220 = vmatmul.f32.gmra.mxu0 %v2133
    %v2221 = vpop.f32.mrf.mxu0
    %v2222 = vadd.f32 0.0, %v2221
    %2223 = vmatmul.f32.gmra.mxu0 %v2134
    %v2224 = vpop.f32.mrf.mxu0
    %v2225 = vadd.f32 0.0, %v2224
    %2226 = vmatmul.f32.gmra.mxu0 %v2135
    %v2227 = vpop.f32.mrf.mxu0
    %v2228 = vadd.f32 0.0, %v2227
    %2229 = vmatmul.f32.gmra.mxu0 %v2136
    %v2230 = vpop.f32.mrf.mxu0
    %v2231 = vadd.f32 0.0, %v2230
    %2232 = vmatmul.f32.gmra.mxu0 %v2137
    %v2233 = vpop.f32.mrf.mxu0
    %v2234 = vadd.f32 0.0, %v2233
    %2235 = vdwg.mxu0
    %2236 = vmatpush.msra.mxu0 %v2170
    %2237 = vmatpush.msra.mxu0 %v2168
    %2238 = vmatpush.msra.mxu0 %v2166
    %2239 = vmatpush.msra.mxu0 %v2164
    %2240 = vmatpush.msra.mxu0 %v2162
    %2241 = vmatpush.msra.mxu0 %v2160
    %2242 = vmatpush.msra.mxu0 %v2158
    %2243 = vmatpush.msra.mxu0 %v2156
    %2244 = vmatpush.msra.mxu0 %v2154
    %2245 = vmatpush.msra.mxu0 %v2152
    %2246 = vmatpush.msra.mxu0 %v2150
    %2247 = vmatpush.msra.mxu0 %v2148
    %2248 = vmatpush.msra.mxu0 %v2146
    %2249 = vmatpush.msra.mxu0 %v2144
    %2250 = vmatpush.msra.mxu0 %v2142
    %2251 = vmatpush.msra.mxu0 %v2140
    %2252 = vmatmul.f32.gmra.mxu0 %v2122
    %v2253 = vpop.f32.mrf.mxu0
    %v2254 = vadd.f32 0.0, %v2253
    %2255 = vmatmul.f32.gmra.mxu0 %v2123
    %v2256 = vpop.f32.mrf.mxu0
    %v2257 = vadd.f32 0.0, %v2256
    %2258 = vmatmul.f32.gmra.mxu0 %v2124
    %v2259 = vpop.f32.mrf.mxu0
    %v2260 = vadd.f32 0.0, %v2259
    %2261 = vmatmul.f32.gmra.mxu0 %v2125
    %v2262 = vpop.f32.mrf.mxu0
    %v2263 = vadd.f32 0.0, %v2262
    %2264 = vmatmul.f32.gmra.mxu0 %v2126
    %v2265 = vpop.f32.mrf.mxu0
    %v2266 = vadd.f32 0.0, %v2265
    %2267 = vmatmul.f32.gmra.mxu0 %v2127
    %v2268 = vpop.f32.mrf.mxu0
    %v2269 = vadd.f32 0.0, %v2268
    %2270 = vmatmul.f32.gmra.mxu0 %v2128
    %v2271 = vpop.f32.mrf.mxu0
    %v2272 = vadd.f32 0.0, %v2271
    %2273 = vmatmul.f32.gmra.mxu0 %v2129
    %v2274 = vpop.f32.mrf.mxu0
    %v2275 = vadd.f32 0.0, %v2274
    %2276 = vmatmul.f32.gmra.mxu0 %v2130
    %v2277 = vpop.f32.mrf.mxu0
    %v2278 = vadd.f32 0.0, %v2277
    %2279 = vmatmul.f32.gmra.mxu0 %v2131
    %v2280 = vpop.f32.mrf.mxu0
    %v2281 = vadd.f32 0.0, %v2280
    %2282 = vmatmul.f32.gmra.mxu0 %v2132
    %v2283 = vpop.f32.mrf.mxu0
    %v2284 = vadd.f32 0.0, %v2283
    %2285 = vmatmul.f32.gmra.mxu0 %v2133
    %v2286 = vpop.f32.mrf.mxu0
    %v2287 = vadd.f32 0.0, %v2286
    %2288 = vmatmul.f32.gmra.mxu0 %v2134
    %v2289 = vpop.f32.mrf.mxu0
    %v2290 = vadd.f32 0.0, %v2289
    %2291 = vmatmul.f32.gmra.mxu0 %v2135
    %v2292 = vpop.f32.mrf.mxu0
    %v2293 = vadd.f32 0.0, %v2292
    %2294 = vmatmul.f32.gmra.mxu0 %v2136
    %v2295 = vpop.f32.mrf.mxu0
    %v2296 = vadd.f32 0.0, %v2295
    %2297 = vmatmul.f32.gmra.mxu0 %v2137
    %v2298 = vpop.f32.mrf.mxu0
    %v2299 = vadd.f32 0.0, %v2298
    %2300 = vdwg.mxu0
    %2301 = vmatpush.msra.mxu0 %v2088
    %2302 = vmatpush.msra.mxu0 %v2086
    %2303 = vmatpush.msra.mxu0 %v2084
    %2304 = vmatpush.msra.mxu0 %v2082
    %2305 = vmatpush.msra.mxu0 %v2080
    %2306 = vmatpush.msra.mxu0 %v2078
    %2307 = vmatpush.msra.mxu0 %v2076
    %2308 = vmatpush.msra.mxu0 %v2074
    %2309 = vmatpush.msra.mxu0 %v2072
    %2310 = vmatpush.msra.mxu0 %v2070
    %2311 = vmatpush.msra.mxu0 %v2068
    %2312 = vmatpush.msra.mxu0 %v2066
    %2313 = vmatpush.msra.mxu0 %v2064
    %2314 = vmatpush.msra.mxu0 %v2062
    %2315 = vmatpush.msra.mxu0 %v2060
    %2316 = vmatpush.msra.mxu0 %v2058
    %2317 = vmatmul.f32.gmra.mxu0 %v2042
    %v2318 = vpop.f32.mrf.mxu0
    %v2319 = vadd.f32 %v2189, %v2318
    %2320 = vmatmul.f32.gmra.mxu0 %v2043
    %v2321 = vpop.f32.mrf.mxu0
    %v2322 = vadd.f32 %v2192, %v2321
    %2323 = vmatmul.f32.gmra.mxu0 %v2044
    %v2324 = vpop.f32.mrf.mxu0
    %v2325 = vadd.f32 %v2195, %v2324
    %2326 = vmatmul.f32.gmra.mxu0 %v2045
    %v2327 = vpop.f32.mrf.mxu0
    %v2328 = vadd.f32 %v2198, %v2327
    %2329 = vmatmul.f32.gmra.mxu0 %v2046
    %v2330 = vpop.f32.mrf.mxu0
    %v2331 = vadd.f32 %v2201, %v2330
    %2332 = vmatmul.f32.gmra.mxu0 %v2047
    %v2333 = vpop.f32.mrf.mxu0
    %v2334 = vadd.f32 %v2204, %v2333
    %2335 = vmatmul.f32.gmra.mxu0 %v2048
    %v2336 = vpop.f32.mrf.mxu0
    %v2337 = vadd.f32 %v2207, %v2336
    %2338 = vmatmul.f32.gmra.mxu0 %v2049
    %v2339 = vpop.f32.mrf.mxu0
    %v2340 = vadd.f32 %v2210, %v2339
    %2341 = vmatmul.f32.gmra.mxu0 %v2050
    %v2342 = vpop.f32.mrf.mxu0
    %v2343 = vadd.f32 %v2213, %v2342
    %2344 = vmatmul.f32.gmra.mxu0 %v2051
    %v2345 = vpop.f32.mrf.mxu0
    %v2346 = vadd.f32 %v2216, %v2345
    %2347 = vmatmul.f32.gmra.mxu0 %v2052
    %v2348 = vpop.f32.mrf.mxu0
    %v2349 = vadd.f32 %v2219, %v2348
    %2350 = vmatmul.f32.gmra.mxu0 %v2053
    %v2351 = vpop.f32.mrf.mxu0
    %v2352 = vadd.f32 %v2222, %v2351
    %2353 = vmatmul.f32.gmra.mxu0 %v2054
    %v2354 = vpop.f32.mrf.mxu0
    %v2355 = vadd.f32 %v2225, %v2354
    %2356 = vmatmul.f32.gmra.mxu0 %v2055
    %v2357 = vpop.f32.mrf.mxu0
    %v2358 = vadd.f32 %v2228, %v2357
    %2359 = vmatmul.f32.gmra.mxu0 %v2056
    %v2360 = vpop.f32.mrf.mxu0
    %v2361 = vadd.f32 %v2231, %v2360
    %2362 = vmatmul.f32.gmra.mxu0 %v2057
    %v2363 = vpop.f32.mrf.mxu0
    %v2364 = vadd.f32 %v2234, %v2363
    %2365 = vdwg.mxu0
    %2366 = vmatpush.msra.mxu0 %v2089
    %2367 = vmatpush.msra.mxu0 %v2087
    %2368 = vmatpush.msra.mxu0 %v2085
    %2369 = vmatpush.msra.mxu0 %v2083
    %2370 = vmatpush.msra.mxu0 %v2081
    %2371 = vmatpush.msra.mxu0 %v2079
    %2372 = vmatpush.msra.mxu0 %v2077
    %2373 = vmatpush.msra.mxu0 %v2075
    %2374 = vmatpush.msra.mxu0 %v2073
    %2375 = vmatpush.msra.mxu0 %v2071
    %2376 = vmatpush.msra.mxu0 %v2069
    %2377 = vmatpush.msra.mxu0 %v2067
    %2378 = vmatpush.msra.mxu0 %v2065
    %2379 = vmatpush.msra.mxu0 %v2063
    %2380 = vmatpush.msra.mxu0 %v2061
    %2381 = vmatpush.msra.mxu0 %v2059
    %2382 = vmatmul.f32.gmra.mxu0 %v2042
    %v2383 = vpop.f32.mrf.mxu0
    %v2384 = vadd.f32 %v2254, %v2383
    %2385 = vmatmul.f32.gmra.mxu0 %v2043
    %v2386 = vpop.f32.mrf.mxu0
    %v2387 = vadd.f32 %v2257, %v2386
    %2388 = vmatmul.f32.gmra.mxu0 %v2044
    %v2389 = vpop.f32.mrf.mxu0
    %v2390 = vadd.f32 %v2260, %v2389
    %2391 = vmatmul.f32.gmra.mxu0 %v2045
    %v2392 = vpop.f32.mrf.mxu0
    %v2393 = vadd.f32 %v2263, %v2392
    %2394 = vmatmul.f32.gmra.mxu0 %v2046
    %v2395 = vpop.f32.mrf.mxu0
    %v2396 = vadd.f32 %v2266, %v2395
    %2397 = vmatmul.f32.gmra.mxu0 %v2047
    %v2398 = vpop.f32.mrf.mxu0
    %v2399 = vadd.f32 %v2269, %v2398
    %2400 = vmatmul.f32.gmra.mxu0 %v2048
    %v2401 = vpop.f32.mrf.mxu0
    %v2402 = vadd.f32 %v2272, %v2401
    %2403 = vmatmul.f32.gmra.mxu0 %v2049
    %v2404 = vpop.f32.mrf.mxu0
    %v2405 = vadd.f32 %v2275, %v2404
    %2406 = vmatmul.f32.gmra.mxu0 %v2050
    %v2407 = vpop.f32.mrf.mxu0
    %v2408 = vadd.f32 %v2278, %v2407
    %2409 = vmatmul.f32.gmra.mxu0 %v2051
    %v2410 = vpop.f32.mrf.mxu0
    %v2411 = vadd.f32 %v2281, %v2410
    %2412 = vmatmul.f32.gmra.mxu0 %v2052
    %v2413 = vpop.f32.mrf.mxu0
    %v2414 = vadd.f32 %v2284, %v2413
    %2415 = vmatmul.f32.gmra.mxu0 %v2053
    %v2416 = vpop.f32.mrf.mxu0
    %v2417 = vadd.f32 %v2287, %v2416
    %2418 = vmatmul.f32.gmra.mxu0 %v2054
    %v2419 = vpop.f32.mrf.mxu0
    %v2420 = vadd.f32 %v2290, %v2419
    %2421 = vmatmul.f32.gmra.mxu0 %v2055
    %v2422 = vpop.f32.mrf.mxu0
    %v2423 = vadd.f32 %v2293, %v2422
    %2424 = vmatmul.f32.gmra.mxu0 %v2056
    %v2425 = vpop.f32.mrf.mxu0
    %v2426 = vadd.f32 %v2296, %v2425
    %2427 = vmatmul.f32.gmra.mxu0 %v2057
    %v2428 = vpop.f32.mrf.mxu0
    %v2429 = vadd.f32 %v2299, %v2428
    %2430 = vdwg.mxu0
    %v2431 = vld [vmem:[#allocation2 + $0x4] sm:$0xff]
    %v2432 = vld [vmem:[#allocation2 + $0xc] sm:$0xff]
    %v2433 = vld [vmem:[#allocation2 + $0x24] sm:$0xff]
    %v2434 = vld [vmem:[#allocation2 + $0x2c] sm:$0xff]
    %v2435 = vld [vmem:[#allocation2 + $0x44] sm:$0xff]
    %v2436 = vld [vmem:[#allocation2 + $0x4c] sm:$0xff]
    %v2437 = vld [vmem:[#allocation2 + $0x64] sm:$0xff]
    %v2438 = vld [vmem:[#allocation2 + $0x6c] sm:$0xff]
    %v2439 = vld [vmem:[#allocation2 + $0x84] sm:$0xff]
    %v2440 = vld [vmem:[#allocation2 + $0x8c] sm:$0xff]
    %v2441 = vld [vmem:[#allocation2 + $0xa4] sm:$0xff]
    %v2442 = vld [vmem:[#allocation2 + $0xac] sm:$0xff]
    %v2443 = vld [vmem:[#allocation2 + $0xc4] sm:$0xff]
    %v2444 = vld [vmem:[#allocation2 + $0xcc] sm:$0xff]
    %v2445 = vld [vmem:[#allocation2 + $0xe4] sm:$0xff]
    %v2446 = vld [vmem:[#allocation2 + $0xec] sm:$0xff]
    %v2447 = vld [vmem:[#allocation2 + $0x5] sm:$0xff]
    %v2448 = vld [vmem:[#allocation2 + $0xd] sm:$0xff]
    %v2449 = vld [vmem:[#allocation2 + $0x25] sm:$0xff]
    %v2450 = vld [vmem:[#allocation2 + $0x2d] sm:$0xff]
    %v2451 = vld [vmem:[#allocation2 + $0x45] sm:$0xff]
    %v2452 = vld [vmem:[#allocation2 + $0x4d] sm:$0xff]
    %v2453 = vld [vmem:[#allocation2 + $0x65] sm:$0xff]
    %v2454 = vld [vmem:[#allocation2 + $0x6d] sm:$0xff]
    %v2455 = vld [vmem:[#allocation2 + $0x85] sm:$0xff]
    %v2456 = vld [vmem:[#allocation2 + $0x8d] sm:$0xff]
    %v2457 = vld [vmem:[#allocation2 + $0xa5] sm:$0xff]
    %v2458 = vld [vmem:[#allocation2 + $0xad] sm:$0xff]
    %v2459 = vld [vmem:[#allocation2 + $0xc5] sm:$0xff]
    %v2460 = vld [vmem:[#allocation2 + $0xcd] sm:$0xff]
    %v2461 = vld [vmem:[#allocation2 + $0xe5] sm:$0xff]
    %v2462 = vld [vmem:[#allocation2 + $0xed] sm:$0xff]
    %v2463 = vmax.f32 %v2431, %v2447
    %v2464 = vmax.f32 %v2432, %v2448
    %v2465 = vmax.f32 %v2433, %v2449
    %v2466 = vmax.f32 %v2434, %v2450
    %v2467 = vmax.f32 %v2435, %v2451
    %v2468 = vmax.f32 %v2436, %v2452
    %v2469 = vmax.f32 %v2437, %v2453
    %v2470 = vmax.f32 %v2438, %v2454
    %v2471 = vmax.f32 %v2439, %v2455
    %v2472 = vmax.f32 %v2440, %v2456
    %v2473 = vmax.f32 %v2441, %v2457
    %v2474 = vmax.f32 %v2442, %v2458
    %v2475 = vmax.f32 %v2443, %v2459
    %v2476 = vmax.f32 %v2444, %v2460
    %v2477 = vmax.f32 %v2445, %v2461
    %v2478 = vmax.f32 %v2446, %v2462
    %s2479 = scalar_lea.vmem [#allocation6], 512
    %v2480 = vld [vmem:[%s2479] sm:$0xff]
    %v2481 = vld [vmem:[%s2479 + $0x8] sm:$0xff]
    %v2482 = vld [vmem:[%s2479 + $0x10] sm:$0xff]
    %v2483 = vld [vmem:[%s2479 + $0x18] sm:$0xff]
    %v2484 = vld [vmem:[%s2479 + $0x20] sm:$0xff]
    %v2485 = vld [vmem:[%s2479 + $0x28] sm:$0xff]
    %v2486 = vld [vmem:[%s2479 + $0x30] sm:$0xff]
    %v2487 = vld [vmem:[%s2479 + $0x38] sm:$0xff]
    %v2488 = vld [vmem:[%s2479 + $0x40] sm:$0xff]
    %v2489 = vld [vmem:[%s2479 + $0x48] sm:$0xff]
    %v2490 = vld [vmem:[%s2479 + $0x50] sm:$0xff]
    %v2491 = vld [vmem:[%s2479 + $0x58] sm:$0xff]
    %v2492 = vld [vmem:[%s2479 + $0x60] sm:$0xff]
    %v2493 = vld [vmem:[%s2479 + $0x68] sm:$0xff]
    %v2494 = vld [vmem:[%s2479 + $0x70] sm:$0xff]
    %v2495 = vld [vmem:[%s2479 + $0x78] sm:$0xff]
    %v2496 = vld [vmem:[%s2479 + $0x80] sm:$0xff]
    %v2497 = vld [vmem:[%s2479 + $0x88] sm:$0xff]
    %v2498 = vld [vmem:[%s2479 + $0x90] sm:$0xff]
    %v2499 = vld [vmem:[%s2479 + $0x98] sm:$0xff]
    %v2500 = vld [vmem:[%s2479 + $0xa0] sm:$0xff]
    %v2501 = vld [vmem:[%s2479 + $0xa8] sm:$0xff]
    %v2502 = vld [vmem:[%s2479 + $0xb0] sm:$0xff]
    %v2503 = vld [vmem:[%s2479 + $0xb8] sm:$0xff]
    %v2504 = vld [vmem:[%s2479 + $0xc0] sm:$0xff]
    %v2505 = vld [vmem:[%s2479 + $0xc8] sm:$0xff]
    %v2506 = vld [vmem:[%s2479 + $0xd0] sm:$0xff]
    %v2507 = vld [vmem:[%s2479 + $0xd8] sm:$0xff]
    %v2508 = vld [vmem:[%s2479 + $0xe0] sm:$0xff]
    %v2509 = vld [vmem:[%s2479 + $0xe8] sm:$0xff]
    %v2510 = vld [vmem:[%s2479 + $0xf0] sm:$0xff]
    %v2511 = vld [vmem:[%s2479 + $0xf8] sm:$0xff]
    %2512 = vmatpush.msra.mxu0 %v2510
    %2513 = vmatpush.msra.mxu0 %v2508
    %2514 = vmatpush.msra.mxu0 %v2506
    %2515 = vmatpush.msra.mxu0 %v2504
    %2516 = vmatpush.msra.mxu0 %v2502
    %2517 = vmatpush.msra.mxu0 %v2500
    %2518 = vmatpush.msra.mxu0 %v2498
    %2519 = vmatpush.msra.mxu0 %v2496
    %2520 = vmatpush.msra.mxu0 %v2494
    %2521 = vmatpush.msra.mxu0 %v2492
    %2522 = vmatpush.msra.mxu0 %v2490
    %2523 = vmatpush.msra.mxu0 %v2488
    %2524 = vmatpush.msra.mxu0 %v2486
    %2525 = vmatpush.msra.mxu0 %v2484
    %2526 = vmatpush.msra.mxu0 %v2482
    %2527 = vmatpush.msra.mxu0 %v2480
    %2528 = vmatmul.f32.gmra.mxu0 %v2463
    %v2529 = vpop.f32.mrf.mxu0
    %v2530 = vadd.f32 0.0, %v2529
    %2531 = vmatmul.f32.gmra.mxu0 %v2464
    %v2532 = vpop.f32.mrf.mxu0
    %v2533 = vadd.f32 0.0, %v2532
    %2534 = vmatmul.f32.gmra.mxu0 %v2465
    %v2535 = vpop.f32.mrf.mxu0
    %v2536 = vadd.f32 0.0, %v2535
    %2537 = vmatmul.f32.gmra.mxu0 %v2466
    %v2538 = vpop.f32.mrf.mxu0
    %v2539 = vadd.f32 0.0, %v2538
    %2540 = vmatmul.f32.gmra.mxu0 %v2467
    %v2541 = vpop.f32.mrf.mxu0
    %v2542 = vadd.f32 0.0, %v2541
    %2543 = vmatmul.f32.gmra.mxu0 %v2468
    %v2544 = vpop.f32.mrf.mxu0
    %v2545 = vadd.f32 0.0, %v2544
    %2546 = vmatmul.f32.gmra.mxu0 %v2469
    %v2547 = vpop.f32.mrf.mxu0
    %v2548 = vadd.f32 0.0, %v2547
    %2549 = vmatmul.f32.gmra.mxu0 %v2470
    %v2550 = vpop.f32.mrf.mxu0
    %v2551 = vadd.f32 0.0, %v2550
    %2552 = vmatmul.f32.gmra.mxu0 %v2471
    %v2553 = vpop.f32.mrf.mxu0
    %v2554 = vadd.f32 0.0, %v2553
    %2555 = vmatmul.f32.gmra.mxu0 %v2472
    %v2556 = vpop.f32.mrf.mxu0
    %v2557 = vadd.f32 0.0, %v2556
    %2558 = vmatmul.f32.gmra.mxu0 %v2473
    %v2559 = vpop.f32.mrf.mxu0
    %v2560 = vadd.f32 0.0, %v2559
    %2561 = vmatmul.f32.gmra.mxu0 %v2474
    %v2562 = vpop.f32.mrf.mxu0
    %v2563 = vadd.f32 0.0, %v2562
    %2564 = vmatmul.f32.gmra.mxu0 %v2475
    %v2565 = vpop.f32.mrf.mxu0
    %v2566 = vadd.f32 0.0, %v2565
    %2567 = vmatmul.f32.gmra.mxu0 %v2476
    %v2568 = vpop.f32.mrf.mxu0
    %v2569 = vadd.f32 0.0, %v2568
    %2570 = vmatmul.f32.gmra.mxu0 %v2477
    %v2571 = vpop.f32.mrf.mxu0
    %v2572 = vadd.f32 0.0, %v2571
    %2573 = vmatmul.f32.gmra.mxu0 %v2478
    %v2574 = vpop.f32.mrf.mxu0
    %v2575 = vadd.f32 0.0, %v2574
    %2576 = vdwg.mxu0
    %2577 = vmatpush.msra.mxu0 %v2511
    %2578 = vmatpush.msra.mxu0 %v2509
    %2579 = vmatpush.msra.mxu0 %v2507
    %2580 = vmatpush.msra.mxu0 %v2505
    %2581 = vmatpush.msra.mxu0 %v2503
    %2582 = vmatpush.msra.mxu0 %v2501
    %2583 = vmatpush.msra.mxu0 %v2499
    %2584 = vmatpush.msra.mxu0 %v2497
    %2585 = vmatpush.msra.mxu0 %v2495
    %2586 = vmatpush.msra.mxu0 %v2493
    %2587 = vmatpush.msra.mxu0 %v2491
    %2588 = vmatpush.msra.mxu0 %v2489
    %2589 = vmatpush.msra.mxu0 %v2487
    %2590 = vmatpush.msra.mxu0 %v2485
    %2591 = vmatpush.msra.mxu0 %v2483
    %2592 = vmatpush.msra.mxu0 %v2481
    %2593 = vmatmul.f32.gmra.mxu0 %v2463
    %v2594 = vpop.f32.mrf.mxu0
    %v2595 = vadd.f32 0.0, %v2594
    %2596 = vmatmul.f32.gmra.mxu0 %v2464
    %v2597 = vpop.f32.mrf.mxu0
    %v2598 = vadd.f32 0.0, %v2597
    %2599 = vmatmul.f32.gmra.mxu0 %v2465
    %v2600 = vpop.f32.mrf.mxu0
    %v2601 = vadd.f32 0.0, %v2600
    %2602 = vmatmul.f32.gmra.mxu0 %v2466
    %v2603 = vpop.f32.mrf.mxu0
    %v2604 = vadd.f32 0.0, %v2603
    %2605 = vmatmul.f32.gmra.mxu0 %v2467
    %v2606 = vpop.f32.mrf.mxu0
    %v2607 = vadd.f32 0.0, %v2606
    %2608 = vmatmul.f32.gmra.mxu0 %v2468
    %v2609 = vpop.f32.mrf.mxu0
    %v2610 = vadd.f32 0.0, %v2609
    %2611 = vmatmul.f32.gmra.mxu0 %v2469
    %v2612 = vpop.f32.mrf.mxu0
    %v2613 = vadd.f32 0.0, %v2612
    %2614 = vmatmul.f32.gmra.mxu0 %v2470
    %v2615 = vpop.f32.mrf.mxu0
    %v2616 = vadd.f32 0.0, %v2615
    %2617 = vmatmul.f32.gmra.mxu0 %v2471
    %v2618 = vpop.f32.mrf.mxu0
    %v2619 = vadd.f32 0.0, %v2618
    %2620 = vmatmul.f32.gmra.mxu0 %v2472
    %v2621 = vpop.f32.mrf.mxu0
    %v2622 = vadd.f32 0.0, %v2621
    %2623 = vmatmul.f32.gmra.mxu0 %v2473
    %v2624 = vpop.f32.mrf.mxu0
    %v2625 = vadd.f32 0.0, %v2624
    %2626 = vmatmul.f32.gmra.mxu0 %v2474
    %v2627 = vpop.f32.mrf.mxu0
    %v2628 = vadd.f32 0.0, %v2627
    %2629 = vmatmul.f32.gmra.mxu0 %v2475
    %v2630 = vpop.f32.mrf.mxu0
    %v2631 = vadd.f32 0.0, %v2630
    %2632 = vmatmul.f32.gmra.mxu0 %v2476
    %v2633 = vpop.f32.mrf.mxu0
    %v2634 = vadd.f32 0.0, %v2633
    %2635 = vmatmul.f32.gmra.mxu0 %v2477
    %v2636 = vpop.f32.mrf.mxu0
    %v2637 = vadd.f32 0.0, %v2636
    %2638 = vmatmul.f32.gmra.mxu0 %v2478
    %v2639 = vpop.f32.mrf.mxu0
    %v2640 = vadd.f32 0.0, %v2639
    %2641 = vdwg.mxu0
    %v2642 = vadd.f32 %v2319, %v2530
    %v2643 = vadd.f32 %v2384, %v2595
    %v2644 = vadd.f32 %v2322, %v2533
    %v2645 = vadd.f32 %v2387, %v2598
    %v2646 = vadd.f32 %v2325, %v2536
    %v2647 = vadd.f32 %v2390, %v2601
    %v2648 = vadd.f32 %v2328, %v2539
    %v2649 = vadd.f32 %v2393, %v2604
    %v2650 = vadd.f32 %v2331, %v2542
    %v2651 = vadd.f32 %v2396, %v2607
    %v2652 = vadd.f32 %v2334, %v2545
    %v2653 = vadd.f32 %v2399, %v2610
    %v2654 = vadd.f32 %v2337, %v2548
    %v2655 = vadd.f32 %v2402, %v2613
    %v2656 = vadd.f32 %v2340, %v2551
    %v2657 = vadd.f32 %v2405, %v2616
    %v2658 = vadd.f32 %v2343, %v2554
    %v2659 = vadd.f32 %v2408, %v2619
    %v2660 = vadd.f32 %v2346, %v2557
    %v2661 = vadd.f32 %v2411, %v2622
    %v2662 = vadd.f32 %v2349, %v2560
    %v2663 = vadd.f32 %v2414, %v2625
    %v2664 = vadd.f32 %v2352, %v2563
    %v2665 = vadd.f32 %v2417, %v2628
    %v2666 = vadd.f32 %v2355, %v2566
    %v2667 = vadd.f32 %v2420, %v2631
    %v2668 = vadd.f32 %v2358, %v2569
    %v2669 = vadd.f32 %v2423, %v2634
    %v2670 = vadd.f32 %v2361, %v2572
    %v2671 = vadd.f32 %v2426, %v2637
    %v2672 = vadd.f32 %v2364, %v2575
    %v2673 = vadd.f32 %v2429, %v2640
    %v2674 = vld [vmem:[#allocation2 + $0x6] sm:$0xff]
    %v2675 = vld [vmem:[#allocation2 + $0xe] sm:$0xff]
    %v2676 = vld [vmem:[#allocation2 + $0x26] sm:$0xff]
    %v2677 = vld [vmem:[#allocation2 + $0x2e] sm:$0xff]
    %v2678 = vld [vmem:[#allocation2 + $0x46] sm:$0xff]
    %v2679 = vld [vmem:[#allocation2 + $0x4e] sm:$0xff]
    %v2680 = vld [vmem:[#allocation2 + $0x66] sm:$0xff]
    %v2681 = vld [vmem:[#allocation2 + $0x6e] sm:$0xff]
    %v2682 = vld [vmem:[#allocation2 + $0x86] sm:$0xff]
    %v2683 = vld [vmem:[#allocation2 + $0x8e] sm:$0xff]
    %v2684 = vld [vmem:[#allocation2 + $0xa6] sm:$0xff]
    %v2685 = vld [vmem:[#allocation2 + $0xae] sm:$0xff]
    %v2686 = vld [vmem:[#allocation2 + $0xc6] sm:$0xff]
    %v2687 = vld [vmem:[#allocation2 + $0xce] sm:$0xff]
    %v2688 = vld [vmem:[#allocation2 + $0xe6] sm:$0xff]
    %v2689 = vld [vmem:[#allocation2 + $0xee] sm:$0xff]
    %v2690 = vld [vmem:[#allocation2 + $0x7] sm:$0xff]
    %v2691 = vld [vmem:[#allocation2 + $0xf] sm:$0xff]
    %v2692 = vld [vmem:[#allocation2 + $0x27] sm:$0xff]
    %v2693 = vld [vmem:[#allocation2 + $0x2f] sm:$0xff]
    %v2694 = vld [vmem:[#allocation2 + $0x47] sm:$0xff]
    %v2695 = vld [vmem:[#allocation2 + $0x4f] sm:$0xff]
    %v2696 = vld [vmem:[#allocation2 + $0x67] sm:$0xff]
    %v2697 = vld [vmem:[#allocation2 + $0x6f] sm:$0xff]
    %v2698 = vld [vmem:[#allocation2 + $0x87] sm:$0xff]
    %v2699 = vld [vmem:[#allocation2 + $0x8f] sm:$0xff]
    %v2700 = vld [vmem:[#allocation2 + $0xa7] sm:$0xff]
    %v2701 = vld [vmem:[#allocation2 + $0xaf] sm:$0xff]
    %v2702 = vld [vmem:[#allocation2 + $0xc7] sm:$0xff]
    %v2703 = vld [vmem:[#allocation2 + $0xcf] sm:$0xff]
    %v2704 = vld [vmem:[#allocation2 + $0xe7] sm:$0xff]
    %v2705 = vld [vmem:[#allocation2 + $0xef] sm:$0xff]
    %v2706 = vmax.f32 %v2674, %v2690
    %v2707 = vmax.f32 %v2675, %v2691
    %v2708 = vmax.f32 %v2676, %v2692
    %v2709 = vmax.f32 %v2677, %v2693
    %v2710 = vmax.f32 %v2678, %v2694
    %v2711 = vmax.f32 %v2679, %v2695
    %v2712 = vmax.f32 %v2680, %v2696
    %v2713 = vmax.f32 %v2681, %v2697
    %v2714 = vmax.f32 %v2682, %v2698
    %v2715 = vmax.f32 %v2683, %v2699
    %v2716 = vmax.f32 %v2684, %v2700
    %v2717 = vmax.f32 %v2685, %v2701
    %v2718 = vmax.f32 %v2686, %v2702
    %v2719 = vmax.f32 %v2687, %v2703
    %v2720 = vmax.f32 %v2688, %v2704
    %v2721 = vmax.f32 %v2689, %v2705
    %s2722 = scalar_lea.vmem [#allocation6], 768
    %v2723 = vld [vmem:[%s2722] sm:$0xff]
    %v2724 = vld [vmem:[%s2722 + $0x8] sm:$0xff]
    %v2725 = vld [vmem:[%s2722 + $0x10] sm:$0xff]
    %v2726 = vld [vmem:[%s2722 + $0x18] sm:$0xff]
    %v2727 = vld [vmem:[%s2722 + $0x20] sm:$0xff]
    %v2728 = vld [vmem:[%s2722 + $0x28] sm:$0xff]
    %v2729 = vld [vmem:[%s2722 + $0x30] sm:$0xff]
    %v2730 = vld [vmem:[%s2722 + $0x38] sm:$0xff]
    %v2731 = vld [vmem:[%s2722 + $0x40] sm:$0xff]
    %v2732 = vld [vmem:[%s2722 + $0x48] sm:$0xff]
    %v2733 = vld [vmem:[%s2722 + $0x50] sm:$0xff]
    %v2734 = vld [vmem:[%s2722 + $0x58] sm:$0xff]
    %v2735 = vld [vmem:[%s2722 + $0x60] sm:$0xff]
    %v2736 = vld [vmem:[%s2722 + $0x68] sm:$0xff]
    %v2737 = vld [vmem:[%s2722 + $0x70] sm:$0xff]
    %v2738 = vld [vmem:[%s2722 + $0x78] sm:$0xff]
    %v2739 = vld [vmem:[%s2722 + $0x80] sm:$0xff]
    %v2740 = vld [vmem:[%s2722 + $0x88] sm:$0xff]
    %v2741 = vld [vmem:[%s2722 + $0x90] sm:$0xff]
    %v2742 = vld [vmem:[%s2722 + $0x98] sm:$0xff]
    %v2743 = vld [vmem:[%s2722 + $0xa0] sm:$0xff]
    %v2744 = vld [vmem:[%s2722 + $0xa8] sm:$0xff]
    %v2745 = vld [vmem:[%s2722 + $0xb0] sm:$0xff]
    %v2746 = vld [vmem:[%s2722 + $0xb8] sm:$0xff]
    %v2747 = vld [vmem:[%s2722 + $0xc0] sm:$0xff]
    %v2748 = vld [vmem:[%s2722 + $0xc8] sm:$0xff]
    %v2749 = vld [vmem:[%s2722 + $0xd0] sm:$0xff]
    %v2750 = vld [vmem:[%s2722 + $0xd8] sm:$0xff]
    %v2751 = vld [vmem:[%s2722 + $0xe0] sm:$0xff]
    %v2752 = vld [vmem:[%s2722 + $0xe8] sm:$0xff]
    %v2753 = vld [vmem:[%s2722 + $0xf0] sm:$0xff]
    %v2754 = vld [vmem:[%s2722 + $0xf8] sm:$0xff]
    %2755 = vmatpush.msra.mxu0 %v2753
    %2756 = vmatpush.msra.mxu0 %v2751
    %2757 = vmatpush.msra.mxu0 %v2749
    %2758 = vmatpush.msra.mxu0 %v2747
    %2759 = vmatpush.msra.mxu0 %v2745
    %2760 = vmatpush.msra.mxu0 %v2743
    %2761 = vmatpush.msra.mxu0 %v2741
    %2762 = vmatpush.msra.mxu0 %v2739
    %2763 = vmatpush.msra.mxu0 %v2737
    %2764 = vmatpush.msra.mxu0 %v2735
    %2765 = vmatpush.msra.mxu0 %v2733
    %2766 = vmatpush.msra.mxu0 %v2731
    %2767 = vmatpush.msra.mxu0 %v2729
    %2768 = vmatpush.msra.mxu0 %v2727
    %2769 = vmatpush.msra.mxu0 %v2725
    %2770 = vmatpush.msra.mxu0 %v2723
    %2771 = vmatmul.f32.gmra.mxu0 %v2706
    %v2772 = vpop.f32.mrf.mxu0
    %v2773 = vadd.f32 0.0, %v2772
    %2774 = vmatmul.f32.gmra.mxu0 %v2707
    %v2775 = vpop.f32.mrf.mxu0
    %v2776 = vadd.f32 0.0, %v2775
    %2777 = vmatmul.f32.gmra.mxu0 %v2708
    %v2778 = vpop.f32.mrf.mxu0
    %v2779 = vadd.f32 0.0, %v2778
    %2780 = vmatmul.f32.gmra.mxu0 %v2709
    %v2781 = vpop.f32.mrf.mxu0
    %v2782 = vadd.f32 0.0, %v2781
    %2783 = vmatmul.f32.gmra.mxu0 %v2710
    %v2784 = vpop.f32.mrf.mxu0
    %v2785 = vadd.f32 0.0, %v2784
    %2786 = vmatmul.f32.gmra.mxu0 %v2711
    %v2787 = vpop.f32.mrf.mxu0
    %v2788 = vadd.f32 0.0, %v2787
    %2789 = vmatmul.f32.gmra.mxu0 %v2712
    %v2790 = vpop.f32.mrf.mxu0
    %v2791 = vadd.f32 0.0, %v2790
    %2792 = vmatmul.f32.gmra.mxu0 %v2713
    %v2793 = vpop.f32.mrf.mxu0
    %v2794 = vadd.f32 0.0, %v2793
    %2795 = vmatmul.f32.gmra.mxu0 %v2714
    %v2796 = vpop.f32.mrf.mxu0
    %v2797 = vadd.f32 0.0, %v2796
    %2798 = vmatmul.f32.gmra.mxu0 %v2715
    %v2799 = vpop.f32.mrf.mxu0
    %v2800 = vadd.f32 0.0, %v2799
    %2801 = vmatmul.f32.gmra.mxu0 %v2716
    %v2802 = vpop.f32.mrf.mxu0
    %v2803 = vadd.f32 0.0, %v2802
    %2804 = vmatmul.f32.gmra.mxu0 %v2717
    %v2805 = vpop.f32.mrf.mxu0
    %v2806 = vadd.f32 0.0, %v2805
    %2807 = vmatmul.f32.gmra.mxu0 %v2718
    %v2808 = vpop.f32.mrf.mxu0
    %v2809 = vadd.f32 0.0, %v2808
    %2810 = vmatmul.f32.gmra.mxu0 %v2719
    %v2811 = vpop.f32.mrf.mxu0
    %v2812 = vadd.f32 0.0, %v2811
    %2813 = vmatmul.f32.gmra.mxu0 %v2720
    %v2814 = vpop.f32.mrf.mxu0
    %v2815 = vadd.f32 0.0, %v2814
    %2816 = vmatmul.f32.gmra.mxu0 %v2721
    %v2817 = vpop.f32.mrf.mxu0
    %v2818 = vadd.f32 0.0, %v2817
    %2819 = vdwg.mxu0
    %2820 = vmatpush.msra.mxu0 %v2754
    %2821 = vmatpush.msra.mxu0 %v2752
    %2822 = vmatpush.msra.mxu0 %v2750
    %2823 = vmatpush.msra.mxu0 %v2748
    %2824 = vmatpush.msra.mxu0 %v2746
    %2825 = vmatpush.msra.mxu0 %v2744
    %2826 = vmatpush.msra.mxu0 %v2742
    %2827 = vmatpush.msra.mxu0 %v2740
    %2828 = vmatpush.msra.mxu0 %v2738
    %2829 = vmatpush.msra.mxu0 %v2736
    %2830 = vmatpush.msra.mxu0 %v2734
    %2831 = vmatpush.msra.mxu0 %v2732
    %2832 = vmatpush.msra.mxu0 %v2730
    %2833 = vmatpush.msra.mxu0 %v2728
    %2834 = vmatpush.msra.mxu0 %v2726
    %2835 = vmatpush.msra.mxu0 %v2724
    %2836 = vmatmul.f32.gmra.mxu0 %v2706
    %v2837 = vpop.f32.mrf.mxu0
    %v2838 = vadd.f32 0.0, %v2837
    %2839 = vmatmul.f32.gmra.mxu0 %v2707
    %v2840 = vpop.f32.mrf.mxu0
    %v2841 = vadd.f32 0.0, %v2840
    %2842 = vmatmul.f32.gmra.mxu0 %v2708
    %v2843 = vpop.f32.mrf.mxu0
    %v2844 = vadd.f32 0.0, %v2843
    %2845 = vmatmul.f32.gmra.mxu0 %v2709
    %v2846 = vpop.f32.mrf.mxu0
    %v2847 = vadd.f32 0.0, %v2846
    %2848 = vmatmul.f32.gmra.mxu0 %v2710
    %v2849 = vpop.f32.mrf.mxu0
    %v2850 = vadd.f32 0.0, %v2849
    %2851 = vmatmul.f32.gmra.mxu0 %v2711
    %v2852 = vpop.f32.mrf.mxu0
    %v2853 = vadd.f32 0.0, %v2852
    %2854 = vmatmul.f32.gmra.mxu0 %v2712
    %v2855 = vpop.f32.mrf.mxu0
    %v2856 = vadd.f32 0.0, %v2855
    %2857 = vmatmul.f32.gmra.mxu0 %v2713
    %v2858 = vpop.f32.mrf.mxu0
    %v2859 = vadd.f32 0.0, %v2858
    %2860 = vmatmul.f32.gmra.mxu0 %v2714
    %v2861 = vpop.f32.mrf.mxu0
    %v2862 = vadd.f32 0.0, %v2861
    %2863 = vmatmul.f32.gmra.mxu0 %v2715
    %v2864 = vpop.f32.mrf.mxu0
    %v2865 = vadd.f32 0.0, %v2864
    %2866 = vmatmul.f32.gmra.mxu0 %v2716
    %v2867 = vpop.f32.mrf.mxu0
    %v2868 = vadd.f32 0.0, %v2867
    %2869 = vmatmul.f32.gmra.mxu0 %v2717
    %v2870 = vpop.f32.mrf.mxu0
    %v2871 = vadd.f32 0.0, %v2870
    %2872 = vmatmul.f32.gmra.mxu0 %v2718
    %v2873 = vpop.f32.mrf.mxu0
    %v2874 = vadd.f32 0.0, %v2873
    %2875 = vmatmul.f32.gmra.mxu0 %v2719
    %v2876 = vpop.f32.mrf.mxu0
    %v2877 = vadd.f32 0.0, %v2876
    %2878 = vmatmul.f32.gmra.mxu0 %v2720
    %v2879 = vpop.f32.mrf.mxu0
    %v2880 = vadd.f32 0.0, %v2879
    %2881 = vmatmul.f32.gmra.mxu0 %v2721
    %v2882 = vpop.f32.mrf.mxu0
    %v2883 = vadd.f32 0.0, %v2882
    %2884 = vdwg.mxu0
    %v2885 = vadd.f32 %v2642, %v2773
    %v2886 = vadd.f32 %v2643, %v2838
    %v2887 = vadd.f32 %v2644, %v2776
    %v2888 = vadd.f32 %v2645, %v2841
    %v2889 = vadd.f32 %v2646, %v2779
    %v2890 = vadd.f32 %v2647, %v2844
    %v2891 = vadd.f32 %v2648, %v2782
    %v2892 = vadd.f32 %v2649, %v2847
    %v2893 = vadd.f32 %v2650, %v2785
    %v2894 = vadd.f32 %v2651, %v2850
    %v2895 = vadd.f32 %v2652, %v2788
    %v2896 = vadd.f32 %v2653, %v2853
    %v2897 = vadd.f32 %v2654, %v2791
    %v2898 = vadd.f32 %v2655, %v2856
    %v2899 = vadd.f32 %v2656, %v2794
    %v2900 = vadd.f32 %v2657, %v2859
    %v2901 = vadd.f32 %v2658, %v2797
    %v2902 = vadd.f32 %v2659, %v2862
    %v2903 = vadd.f32 %v2660, %v2800
    %v2904 = vadd.f32 %v2661, %v2865
    %v2905 = vadd.f32 %v2662, %v2803
    %v2906 = vadd.f32 %v2663, %v2868
    %v2907 = vadd.f32 %v2664, %v2806
    %v2908 = vadd.f32 %v2665, %v2871
    %v2909 = vadd.f32 %v2666, %v2809
    %v2910 = vadd.f32 %v2667, %v2874
    %v2911 = vadd.f32 %v2668, %v2812
    %v2912 = vadd.f32 %v2669, %v2877
    %v2913 = vadd.f32 %v2670, %v2815
    %v2914 = vadd.f32 %v2671, %v2880
    %v2915 = vadd.f32 %v2672, %v2818
    %v2916 = vadd.f32 %v2673, %v2883
    %v2917 = vld [vmem:[#allocation2 + $0x8] sm:$0xff]
    %v2918 = vld [vmem:[#allocation2 + $0x10] sm:$0xff]
    %v2919 = vld [vmem:[#allocation2 + $0x28] sm:$0xff]
    %v2920 = vld [vmem:[#allocation2 + $0x30] sm:$0xff]
    %v2921 = vld [vmem:[#allocation2 + $0x48] sm:$0xff]
    %v2922 = vld [vmem:[#allocation2 + $0x50] sm:$0xff]
    %v2923 = vld [vmem:[#allocation2 + $0x68] sm:$0xff]
    %v2924 = vld [vmem:[#allocation2 + $0x70] sm:$0xff]
    %v2925 = vld [vmem:[#allocation2 + $0x88] sm:$0xff]
    %v2926 = vld [vmem:[#allocation2 + $0x90] sm:$0xff]
    %v2927 = vld [vmem:[#allocation2 + $0xa8] sm:$0xff]
    %v2928 = vld [vmem:[#allocation2 + $0xb0] sm:$0xff]
    %v2929 = vld [vmem:[#allocation2 + $0xc8] sm:$0xff]
    %v2930 = vld [vmem:[#allocation2 + $0xd0] sm:$0xff]
    %v2931 = vld [vmem:[#allocation2 + $0xe8] sm:$0xff]
    %v2932 = vld [vmem:[#allocation2 + $0xf0] sm:$0xff]
    %v2933 = vld [vmem:[#allocation2 + $0x9] sm:$0xff]
    %v2934 = vld [vmem:[#allocation2 + $0x11] sm:$0xff]
    %v2935 = vld [vmem:[#allocation2 + $0x29] sm:$0xff]
    %v2936 = vld [vmem:[#allocation2 + $0x31] sm:$0xff]
    %v2937 = vld [vmem:[#allocation2 + $0x49] sm:$0xff]
    %v2938 = vld [vmem:[#allocation2 + $0x51] sm:$0xff]
    %v2939 = vld [vmem:[#allocation2 + $0x69] sm:$0xff]
    %v2940 = vld [vmem:[#allocation2 + $0x71] sm:$0xff]
    %v2941 = vld [vmem:[#allocation2 + $0x89] sm:$0xff]
    %v2942 = vld [vmem:[#allocation2 + $0x91] sm:$0xff]
    %v2943 = vld [vmem:[#allocation2 + $0xa9] sm:$0xff]
    %v2944 = vld [vmem:[#allocation2 + $0xb1] sm:$0xff]
    %v2945 = vld [vmem:[#allocation2 + $0xc9] sm:$0xff]
    %v2946 = vld [vmem:[#allocation2 + $0xd1] sm:$0xff]
    %v2947 = vld [vmem:[#allocation2 + $0xe9] sm:$0xff]
    %v2948 = vld [vmem:[#allocation2 + $0xf1] sm:$0xff]
    %v2949 = vmax.f32 %v2917, %v2933
    %v2950 = vmax.f32 %v2918, %v2934
    %v2951 = vmax.f32 %v2919, %v2935
    %v2952 = vmax.f32 %v2920, %v2936
    %v2953 = vmax.f32 %v2921, %v2937
    %v2954 = vmax.f32 %v2922, %v2938
    %v2955 = vmax.f32 %v2923, %v2939
    %v2956 = vmax.f32 %v2924, %v2940
    %v2957 = vmax.f32 %v2925, %v2941
    %v2958 = vmax.f32 %v2926, %v2942
    %v2959 = vmax.f32 %v2927, %v2943
    %v2960 = vmax.f32 %v2928, %v2944
    %v2961 = vmax.f32 %v2929, %v2945
    %v2962 = vmax.f32 %v2930, %v2946
    %v2963 = vmax.f32 %v2931, %v2947
    %v2964 = vmax.f32 %v2932, %v2948
    %s2965 = scalar_lea.vmem [#allocation6], 1024
    %v2966 = vld [vmem:[%s2965] sm:$0xff]
    %v2967 = vld [vmem:[%s2965 + $0x8] sm:$0xff]
    %v2968 = vld [vmem:[%s2965 + $0x10] sm:$0xff]
    %v2969 = vld [vmem:[%s2965 + $0x18] sm:$0xff]
    %v2970 = vld [vmem:[%s2965 + $0x20] sm:$0xff]
    %v2971 = vld [vmem:[%s2965 + $0x28] sm:$0xff]
    %v2972 = vld [vmem:[%s2965 + $0x30] sm:$0xff]
    %v2973 = vld [vmem:[%s2965 + $0x38] sm:$0xff]
    %v2974 = vld [vmem:[%s2965 + $0x40] sm:$0xff]
    %v2975 = vld [vmem:[%s2965 + $0x48] sm:$0xff]
    %v2976 = vld [vmem:[%s2965 + $0x50] sm:$0xff]
    %v2977 = vld [vmem:[%s2965 + $0x58] sm:$0xff]
    %v2978 = vld [vmem:[%s2965 + $0x60] sm:$0xff]
    %v2979 = vld [vmem:[%s2965 + $0x68] sm:$0xff]
    %v2980 = vld [vmem:[%s2965 + $0x70] sm:$0xff]
    %v2981 = vld [vmem:[%s2965 + $0x78] sm:$0xff]
    %v2982 = vld [vmem:[%s2965 + $0x80] sm:$0xff]
    %v2983 = vld [vmem:[%s2965 + $0x88] sm:$0xff]
    %v2984 = vld [vmem:[%s2965 + $0x90] sm:$0xff]
    %v2985 = vld [vmem:[%s2965 + $0x98] sm:$0xff]
    %v2986 = vld [vmem:[%s2965 + $0xa0] sm:$0xff]
    %v2987 = vld [vmem:[%s2965 + $0xa8] sm:$0xff]
    %v2988 = vld [vmem:[%s2965 + $0xb0] sm:$0xff]
    %v2989 = vld [vmem:[%s2965 + $0xb8] sm:$0xff]
    %v2990 = vld [vmem:[%s2965 + $0xc0] sm:$0xff]
    %v2991 = vld [vmem:[%s2965 + $0xc8] sm:$0xff]
    %v2992 = vld [vmem:[%s2965 + $0xd0] sm:$0xff]
    %v2993 = vld [vmem:[%s2965 + $0xd8] sm:$0xff]
    %v2994 = vld [vmem:[%s2965 + $0xe0] sm:$0xff]
    %v2995 = vld [vmem:[%s2965 + $0xe8] sm:$0xff]
    %v2996 = vld [vmem:[%s2965 + $0xf0] sm:$0xff]
    %v2997 = vld [vmem:[%s2965 + $0xf8] sm:$0xff]
    %2998 = vmatpush.msra.mxu0 %v2996
    %2999 = vmatpush.msra.mxu0 %v2994
    %3000 = vmatpush.msra.mxu0 %v2992
    %3001 = vmatpush.msra.mxu0 %v2990
    %3002 = vmatpush.msra.mxu0 %v2988
    %3003 = vmatpush.msra.mxu0 %v2986
    %3004 = vmatpush.msra.mxu0 %v2984
    %3005 = vmatpush.msra.mxu0 %v2982
    %3006 = vmatpush.msra.mxu0 %v2980
    %3007 = vmatpush.msra.mxu0 %v2978
    %3008 = vmatpush.msra.mxu0 %v2976
    %3009 = vmatpush.msra.mxu0 %v2974
    %3010 = vmatpush.msra.mxu0 %v2972
    %3011 = vmatpush.msra.mxu0 %v2970
    %3012 = vmatpush.msra.mxu0 %v2968
    %3013 = vmatpush.msra.mxu0 %v2966
    %3014 = vmatmul.f32.gmra.mxu0 %v2949
    %v3015 = vpop.f32.mrf.mxu0
    %v3016 = vadd.f32 0.0, %v3015
    %3017 = vmatmul.f32.gmra.mxu0 %v2950
    %v3018 = vpop.f32.mrf.mxu0
    %v3019 = vadd.f32 0.0, %v3018
    %3020 = vmatmul.f32.gmra.mxu0 %v2951
    %v3021 = vpop.f32.mrf.mxu0
    %v3022 = vadd.f32 0.0, %v3021
    %3023 = vmatmul.f32.gmra.mxu0 %v2952
    %v3024 = vpop.f32.mrf.mxu0
    %v3025 = vadd.f32 0.0, %v3024
    %3026 = vmatmul.f32.gmra.mxu0 %v2953
    %v3027 = vpop.f32.mrf.mxu0
    %v3028 = vadd.f32 0.0, %v3027
    %3029 = vmatmul.f32.gmra.mxu0 %v2954
    %v3030 = vpop.f32.mrf.mxu0
    %v3031 = vadd.f32 0.0, %v3030
    %3032 = vmatmul.f32.gmra.mxu0 %v2955
    %v3033 = vpop.f32.mrf.mxu0
    %v3034 = vadd.f32 0.0, %v3033
    %3035 = vmatmul.f32.gmra.mxu0 %v2956
    %v3036 = vpop.f32.mrf.mxu0
    %v3037 = vadd.f32 0.0, %v3036
    %3038 = vmatmul.f32.gmra.mxu0 %v2957
    %v3039 = vpop.f32.mrf.mxu0
    %v3040 = vadd.f32 0.0, %v3039
    %3041 = vmatmul.f32.gmra.mxu0 %v2958
    %v3042 = vpop.f32.mrf.mxu0
    %v3043 = vadd.f32 0.0, %v3042
    %3044 = vmatmul.f32.gmra.mxu0 %v2959
    %v3045 = vpop.f32.mrf.mxu0
    %v3046 = vadd.f32 0.0, %v3045
    %3047 = vmatmul.f32.gmra.mxu0 %v2960
    %v3048 = vpop.f32.mrf.mxu0
    %v3049 = vadd.f32 0.0, %v3048
    %3050 = vmatmul.f32.gmra.mxu0 %v2961
    %v3051 = vpop.f32.mrf.mxu0
    %v3052 = vadd.f32 0.0, %v3051
    %3053 = vmatmul.f32.gmra.mxu0 %v2962
    %v3054 = vpop.f32.mrf.mxu0
    %v3055 = vadd.f32 0.0, %v3054
    %3056 = vmatmul.f32.gmra.mxu0 %v2963
    %v3057 = vpop.f32.mrf.mxu0
    %v3058 = vadd.f32 0.0, %v3057
    %3059 = vmatmul.f32.gmra.mxu0 %v2964
    %v3060 = vpop.f32.mrf.mxu0
    %v3061 = vadd.f32 0.0, %v3060
    %3062 = vdwg.mxu0
    %3063 = vmatpush.msra.mxu0 %v2997
    %3064 = vmatpush.msra.mxu0 %v2995
    %3065 = vmatpush.msra.mxu0 %v2993
    %3066 = vmatpush.msra.mxu0 %v2991
    %3067 = vmatpush.msra.mxu0 %v2989
    %3068 = vmatpush.msra.mxu0 %v2987
    %3069 = vmatpush.msra.mxu0 %v2985
    %3070 = vmatpush.msra.mxu0 %v2983
    %3071 = vmatpush.msra.mxu0 %v2981
    %3072 = vmatpush.msra.mxu0 %v2979
    %3073 = vmatpush.msra.mxu0 %v2977
    %3074 = vmatpush.msra.mxu0 %v2975
    %3075 = vmatpush.msra.mxu0 %v2973
    %3076 = vmatpush.msra.mxu0 %v2971
    %3077 = vmatpush.msra.mxu0 %v2969
    %3078 = vmatpush.msra.mxu0 %v2967
    %3079 = vmatmul.f32.gmra.mxu0 %v2949
    %v3080 = vpop.f32.mrf.mxu0
    %v3081 = vadd.f32 0.0, %v3080
    %3082 = vmatmul.f32.gmra.mxu0 %v2950
    %v3083 = vpop.f32.mrf.mxu0
    %v3084 = vadd.f32 0.0, %v3083
    %3085 = vmatmul.f32.gmra.mxu0 %v2951
    %v3086 = vpop.f32.mrf.mxu0
    %v3087 = vadd.f32 0.0, %v3086
    %3088 = vmatmul.f32.gmra.mxu0 %v2952
    %v3089 = vpop.f32.mrf.mxu0
    %v3090 = vadd.f32 0.0, %v3089
    %3091 = vmatmul.f32.gmra.mxu0 %v2953
    %v3092 = vpop.f32.mrf.mxu0
    %v3093 = vadd.f32 0.0, %v3092
    %3094 = vmatmul.f32.gmra.mxu0 %v2954
    %v3095 = vpop.f32.mrf.mxu0
    %v3096 = vadd.f32 0.0, %v3095
    %3097 = vmatmul.f32.gmra.mxu0 %v2955
    %v3098 = vpop.f32.mrf.mxu0
    %v3099 = vadd.f32 0.0, %v3098
    %3100 = vmatmul.f32.gmra.mxu0 %v2956
    %v3101 = vpop.f32.mrf.mxu0
    %v3102 = vadd.f32 0.0, %v3101
    %3103 = vmatmul.f32.gmra.mxu0 %v2957
    %v3104 = vpop.f32.mrf.mxu0
    %v3105 = vadd.f32 0.0, %v3104
    %3106 = vmatmul.f32.gmra.mxu0 %v2958
    %v3107 = vpop.f32.mrf.mxu0
    %v3108 = vadd.f32 0.0, %v3107
    %3109 = vmatmul.f32.gmra.mxu0 %v2959
    %v3110 = vpop.f32.mrf.mxu0
    %v3111 = vadd.f32 0.0, %v3110
    %3112 = vmatmul.f32.gmra.mxu0 %v2960
    %v3113 = vpop.f32.mrf.mxu0
    %v3114 = vadd.f32 0.0, %v3113
    %3115 = vmatmul.f32.gmra.mxu0 %v2961
    %v3116 = vpop.f32.mrf.mxu0
    %v3117 = vadd.f32 0.0, %v3116
    %3118 = vmatmul.f32.gmra.mxu0 %v2962
    %v3119 = vpop.f32.mrf.mxu0
    %v3120 = vadd.f32 0.0, %v3119
    %3121 = vmatmul.f32.gmra.mxu0 %v2963
    %v3122 = vpop.f32.mrf.mxu0
    %v3123 = vadd.f32 0.0, %v3122
    %3124 = vmatmul.f32.gmra.mxu0 %v2964
    %v3125 = vpop.f32.mrf.mxu0
    %v3126 = vadd.f32 0.0, %v3125
    %3127 = vdwg.mxu0
    %v3128 = vadd.f32 %v2885, %v3016
    %v3129 = vadd.f32 %v2886, %v3081
    %v3130 = vadd.f32 %v2887, %v3019
    %v3131 = vadd.f32 %v2888, %v3084
    %v3132 = vadd.f32 %v2889, %v3022
    %v3133 = vadd.f32 %v2890, %v3087
    %v3134 = vadd.f32 %v2891, %v3025
    %v3135 = vadd.f32 %v2892, %v3090
    %v3136 = vadd.f32 %v2893, %v3028
    %v3137 = vadd.f32 %v2894, %v3093
    %v3138 = vadd.f32 %v2895, %v3031
    %v3139 = vadd.f32 %v2896, %v3096
    %v3140 = vadd.f32 %v2897, %v3034
    %v3141 = vadd.f32 %v2898, %v3099
    %v3142 = vadd.f32 %v2899, %v3037
    %v3143 = vadd.f32 %v2900, %v3102
    %v3144 = vadd.f32 %v2901, %v3040
    %v3145 = vadd.f32 %v2902, %v3105
    %v3146 = vadd.f32 %v2903, %v3043
    %v3147 = vadd.f32 %v2904, %v3108
    %v3148 = vadd.f32 %v2905, %v3046
    %v3149 = vadd.f32 %v2906, %v3111
    %v3150 = vadd.f32 %v2907, %v3049
    %v3151 = vadd.f32 %v2908, %v3114
    %v3152 = vadd.f32 %v2909, %v3052
    %v3153 = vadd.f32 %v2910, %v3117
    %v3154 = vadd.f32 %v2911, %v3055
    %v3155 = vadd.f32 %v2912, %v3120
    %v3156 = vadd.f32 %v2913, %v3058
    %v3157 = vadd.f32 %v2914, %v3123
    %v3158 = vadd.f32 %v2915, %v3061
    %v3159 = vadd.f32 %v2916, %v3126
    %v3160 = vld [vmem:[%s4] sm:$0x3]
    %v3162 = vperm.slane %v3160, 0
    %v3163 = vperm.slane %v3160, 1
    %v3166 = vadd.f32 %v3128, %v3162
    %v3167 = vadd.f32 %v3129, %v3163
    %v3168 = vadd.f32 %v3130, %v3162
    %v3169 = vadd.f32 %v3131, %v3163
    %v3170 = vadd.f32 %v3132, %v3162
    %v3171 = vadd.f32 %v3133, %v3163
    %v3172 = vadd.f32 %v3134, %v3162
    %v3173 = vadd.f32 %v3135, %v3163
    %v3174 = vadd.f32 %v3136, %v3162
    %v3175 = vadd.f32 %v3137, %v3163
    %v3176 = vadd.f32 %v3138, %v3162
    %v3177 = vadd.f32 %v3139, %v3163
    %v3178 = vadd.f32 %v3140, %v3162
    %v3179 = vadd.f32 %v3141, %v3163
    %v3180 = vadd.f32 %v3142, %v3162
    %v3181 = vadd.f32 %v3143, %v3163
    %v3182 = vadd.f32 %v3144, %v3162
    %v3183 = vadd.f32 %v3145, %v3163
    %v3184 = vadd.f32 %v3146, %v3162
    %v3185 = vadd.f32 %v3147, %v3163
    %v3186 = vadd.f32 %v3148, %v3162
    %v3187 = vadd.f32 %v3149, %v3163
    %v3188 = vadd.f32 %v3150, %v3162
    %v3189 = vadd.f32 %v3151, %v3163
    %v3190 = vadd.f32 %v3152, %v3162
    %v3191 = vadd.f32 %v3153, %v3163
    %v3192 = vadd.f32 %v3154, %v3162
    %v3193 = vadd.f32 %v3155, %v3163
    %v3194 = vadd.f32 %v3156, %v3162
    %v3195 = vadd.f32 %v3157, %v3163
    %v3196 = vadd.f32 %v3158, %v3162
    %v3197 = vadd.f32 %v3159, %v3163
    %v3198 = vsub.f32 0.0, %v3166
    %v3199 = vsub.f32 0.0, %v3167
    %v3200 = vsub.f32 0.0, %v3168
    %v3201 = vsub.f32 0.0, %v3169
    %v3202 = vsub.f32 0.0, %v3170
    %v3203 = vsub.f32 0.0, %v3171
    %v3204 = vsub.f32 0.0, %v3172
    %v3205 = vsub.f32 0.0, %v3173
    %v3206 = vsub.f32 0.0, %v3174
    %v3207 = vsub.f32 0.0, %v3175
    %v3208 = vsub.f32 0.0, %v3176
    %v3209 = vsub.f32 0.0, %v3177
    %v3210 = vsub.f32 0.0, %v3178
    %v3211 = vsub.f32 0.0, %v3179
    %v3212 = vsub.f32 0.0, %v3180
    %v3213 = vsub.f32 0.0, %v3181
    %v3214 = vsub.f32 0.0, %v3182
    %v3215 = vsub.f32 0.0, %v3183
    %v3216 = vsub.f32 0.0, %v3184
    %v3217 = vsub.f32 0.0, %v3185
    %v3218 = vsub.f32 0.0, %v3186
    %v3219 = vsub.f32 0.0, %v3187
    %v3220 = vsub.f32 0.0, %v3188
    %v3221 = vsub.f32 0.0, %v3189
    %v3222 = vsub.f32 0.0, %v3190
    %v3223 = vsub.f32 0.0, %v3191
    %v3224 = vsub.f32 0.0, %v3192
    %v3225 = vsub.f32 0.0, %v3193
    %v3226 = vsub.f32 0.0, %v3194
    %v3227 = vsub.f32 0.0, %v3195
    %v3228 = vsub.f32 0.0, %v3196
    %v3229 = vsub.f32 0.0, %v3197
    %v3230 = vmul.f32 %v3198, 1.442695
    %v3231 = vpow.pop %v3230
    %v3232 = vmul.f32 %v3199, 1.442695
    %v3233 = vpow.pop %v3232
    %v3234 = vmul.f32 %v3200, 1.442695
    %v3235 = vpow.pop %v3234
    %v3236 = vmul.f32 %v3201, 1.442695
    %v3237 = vpow.pop %v3236
    %v3238 = vmul.f32 %v3202, 1.442695
    %v3239 = vpow.pop %v3238
    %v3240 = vmul.f32 %v3203, 1.442695
    %v3241 = vpow.pop %v3240
    %v3242 = vmul.f32 %v3204, 1.442695
    %v3243 = vpow.pop %v3242
    %v3244 = vmul.f32 %v3205, 1.442695
    %v3245 = vpow.pop %v3244
    %v3246 = vmul.f32 %v3206, 1.442695
    %v3247 = vpow.pop %v3246
    %v3248 = vmul.f32 %v3207, 1.442695
    %v3249 = vpow.pop %v3248
    %v3250 = vmul.f32 %v3208, 1.442695
    %v3251 = vpow.pop %v3250
    %v3252 = vmul.f32 %v3209, 1.442695
    %v3253 = vpow.pop %v3252
    %v3254 = vmul.f32 %v3210, 1.442695
    %v3255 = vpow.pop %v3254
    %v3256 = vmul.f32 %v3211, 1.442695
    %v3257 = vpow.pop %v3256
    %v3258 = vmul.f32 %v3212, 1.442695
    %v3259 = vpow.pop %v3258
    %v3260 = vmul.f32 %v3213, 1.442695
    %v3261 = vpow.pop %v3260
    %v3262 = vmul.f32 %v3214, 1.442695
    %v3263 = vpow.pop %v3262
    %v3264 = vmul.f32 %v3215, 1.442695
    %v3265 = vpow.pop %v3264
    %v3266 = vmul.f32 %v3216, 1.442695
    %v3267 = vpow.pop %v3266
    %v3268 = vmul.f32 %v3217, 1.442695
    %v3269 = vpow.pop %v3268
    %v3270 = vmul.f32 %v3218, 1.442695
    %v3271 = vpow.pop %v3270
    %v3272 = vmul.f32 %v3219, 1.442695
    %v3273 = vpow.pop %v3272
    %v3274 = vmul.f32 %v3220, 1.442695
    %v3275 = vpow.pop %v3274
    %v3276 = vmul.f32 %v3221, 1.442695
    %v3277 = vpow.pop %v3276
    %v3278 = vmul.f32 %v3222, 1.442695
    %v3279 = vpow.pop %v3278
    %v3280 = vmul.f32 %v3223, 1.442695
    %v3281 = vpow.pop %v3280
    %v3282 = vmul.f32 %v3224, 1.442695
    %v3283 = vpow.pop %v3282
    %v3284 = vmul.f32 %v3225, 1.442695
    %v3285 = vpow.pop %v3284
    %v3286 = vmul.f32 %v3226, 1.442695
    %v3287 = vpow.pop %v3286
    %v3288 = vmul.f32 %v3227, 1.442695
    %v3289 = vpow.pop %v3288
    %v3290 = vmul.f32 %v3228, 1.442695
    %v3291 = vpow.pop %v3290
    %v3292 = vmul.f32 %v3229, 1.442695
    %v3293 = vpow.pop %v3292
    %v3294 = vadd.f32 %v3231, 1.0
    %v3295 = vadd.f32 %v3233, 1.0
    %v3296 = vadd.f32 %v3235, 1.0
    %v3297 = vadd.f32 %v3237, 1.0
    %v3298 = vadd.f32 %v3239, 1.0
    %v3299 = vadd.f32 %v3241, 1.0
    %v3300 = vadd.f32 %v3243, 1.0
    %v3301 = vadd.f32 %v3245, 1.0
    %v3302 = vadd.f32 %v3247, 1.0
    %v3303 = vadd.f32 %v3249, 1.0
    %v3304 = vadd.f32 %v3251, 1.0
    %v3305 = vadd.f32 %v3253, 1.0
    %v3306 = vadd.f32 %v3255, 1.0
    %v3307 = vadd.f32 %v3257, 1.0
    %v3308 = vadd.f32 %v3259, 1.0
    %v3309 = vadd.f32 %v3261, 1.0
    %v3310 = vadd.f32 %v3263, 1.0
    %v3311 = vadd.f32 %v3265, 1.0
    %v3312 = vadd.f32 %v3267, 1.0
    %v3313 = vadd.f32 %v3269, 1.0
    %v3314 = vadd.f32 %v3271, 1.0
    %v3315 = vadd.f32 %v3273, 1.0
    %v3316 = vadd.f32 %v3275, 1.0
    %v3317 = vadd.f32 %v3277, 1.0
    %v3318 = vadd.f32 %v3279, 1.0
    %v3319 = vadd.f32 %v3281, 1.0
    %v3320 = vadd.f32 %v3283, 1.0
    %v3321 = vadd.f32 %v3285, 1.0
    %v3322 = vadd.f32 %v3287, 1.0
    %v3323 = vadd.f32 %v3289, 1.0
    %v3324 = vadd.f32 %v3291, 1.0
    %v3325 = vadd.f32 %v3293, 1.0
    %v3326 = vrcp.pop %v3294
    %v3327 = vrcp.pop %v3295
    %v3328 = vrcp.pop %v3296
    %v3329 = vrcp.pop %v3297
    %v3330 = vrcp.pop %v3298
    %v3331 = vrcp.pop %v3299
    %v3332 = vrcp.pop %v3300
    %v3333 = vrcp.pop %v3301
    %v3334 = vrcp.pop %v3302
    %v3335 = vrcp.pop %v3303
    %v3336 = vrcp.pop %v3304
    %v3337 = vrcp.pop %v3305
    %v3338 = vrcp.pop %v3306
    %v3339 = vrcp.pop %v3307
    %v3340 = vrcp.pop %v3308
    %v3341 = vrcp.pop %v3309
    %v3342 = vrcp.pop %v3310
    %v3343 = vrcp.pop %v3311
    %v3344 = vrcp.pop %v3312
    %v3345 = vrcp.pop %v3313
    %v3346 = vrcp.pop %v3314
    %v3347 = vrcp.pop %v3315
    %v3348 = vrcp.pop %v3316
    %v3349 = vrcp.pop %v3317
    %v3350 = vrcp.pop %v3318
    %v3351 = vrcp.pop %v3319
    %v3352 = vrcp.pop %v3320
    %v3353 = vrcp.pop %v3321
    %v3354 = vrcp.pop %v3322
    %v3355 = vrcp.pop %v3323
    %v3356 = vrcp.pop %v3324
    %v3357 = vrcp.pop %v3325
    %v3358 = vmax.f32 %v3326, %v3327
    %v3359 = vmax.f32 %v3328, %v3329
    %v3360 = vmax.f32 %v3330, %v3331
    %v3361 = vmax.f32 %v3332, %v3333
    %v3362 = vmax.f32 %v3334, %v3335
    %v3363 = vmax.f32 %v3336, %v3337
    %v3364 = vmax.f32 %v3338, %v3339
    %v3365 = vmax.f32 %v3340, %v3341
    %v3366 = vmax.f32 %v3342, %v3343
    %v3367 = vmax.f32 %v3344, %v3345
    %v3368 = vmax.f32 %v3346, %v3347
    %v3369 = vmax.f32 %v3348, %v3349
    %v3370 = vmax.f32 %v3350, %v3351
    %v3371 = vmax.f32 %v3352, %v3353
    %v3372 = vmax.f32 %v3354, %v3355
    %v3373 = vmax.f32 %v3356, %v3357
    %3374 = vst [vmem:[#allocation3] sm:$0xff] %v3358
    %3375 = vst [vmem:[#allocation3 + $0x8] sm:$0xff] %v3359
    %3376 = vst [vmem:[#allocation3 + $0x10] sm:$0xff] %v3360
    %3377 = vst [vmem:[#allocation3 + $0x18] sm:$0xff] %v3361
    %3378 = vst [vmem:[#allocation3 + $0x20] sm:$0xff] %v3362
    %3379 = vst [vmem:[#allocation3 + $0x28] sm:$0xff] %v3363
    %3380 = vst [vmem:[#allocation3 + $0x30] sm:$0xff] %v3364
    %3381 = vst [vmem:[#allocation3 + $0x38] sm:$0xff] %v3365
    %3382 = vst [vmem:[#allocation3 + $0x40] sm:$0xff] %v3366
    %3383 = vst [vmem:[#allocation3 + $0x48] sm:$0xff] %v3367
    %3384 = vst [vmem:[#allocation3 + $0x50] sm:$0xff] %v3368
    %3385 = vst [vmem:[#allocation3 + $0x58] sm:$0xff] %v3369
    %3386 = vst [vmem:[#allocation3 + $0x60] sm:$0xff] %v3370
    %3387 = vst [vmem:[#allocation3 + $0x68] sm:$0xff] %v3371
    %3388 = vst [vmem:[#allocation3 + $0x70] sm:$0xff] %v3372
    %3389 = vst [vmem:[#allocation3 + $0x78] sm:$0xff] %v3373
    %v3390 = vld [vmem:[#allocation3] sm:$0x1]
    %v3391 = vld [vmem:[#allocation3 + $0x10] sm:$0x1]
    %v3392 = vld [vmem:[#allocation3 + $0x20] sm:$0x1]
    %v3393 = vld [vmem:[#allocation3 + $0x30] sm:$0x1]
    %v3394 = vld [vmem:[#allocation3 + $0x40] sm:$0x1]
    %v3395 = vld [vmem:[#allocation3 + $0x50] sm:$0x1]
    %v3396 = vld [vmem:[#allocation3 + $0x60] sm:$0x1]
    %v3397 = vld [vmem:[#allocation3 + $0x70] sm:$0x1]
    %v3398 = vld [vmem:[#allocation3 + $0x2] sm:$0x1]
    %v3399 = vld [vmem:[#allocation3 + $0x12] sm:$0x1]
    %v3400 = vld [vmem:[#allocation3 + $0x22] sm:$0x1]
    %v3401 = vld [vmem:[#allocation3 + $0x32] sm:$0x1]
    %v3402 = vld [vmem:[#allocation3 + $0x42] sm:$0x1]
    %v3403 = vld [vmem:[#allocation3 + $0x52] sm:$0x1]
    %v3404 = vld [vmem:[#allocation3 + $0x62] sm:$0x1]
    %v3405 = vld [vmem:[#allocation3 + $0x72] sm:$0x1]
    %v3406 = vmax.f32 %v3390, %v3398
    %v3407 = vmax.f32 %v3391, %v3399
    %v3408 = vmax.f32 %v3392, %v3400
    %v3409 = vmax.f32 %v3393, %v3401
    %v3410 = vmax.f32 %v3394, %v3402
    %v3411 = vmax.f32 %v3395, %v3403
    %v3412 = vmax.f32 %v3396, %v3404
    %v3413 = vmax.f32 %v3397, %v3405
    %v3414 = vld [vmem:[%s5] sm:$0xff]
    %v3415 = vld [vmem:[%s5 + $0x8] sm:$0xff]
    %v3416 = vld [vmem:[%s5 + $0x10] sm:$0xff]
    %v3417 = vld [vmem:[%s5 + $0x18] sm:$0xff]
    %v3418 = vld [vmem:[%s5 + $0x20] sm:$0xff]
    %v3419 = vld [vmem:[%s5 + $0x28] sm:$0xff]
    %v3420 = vld [vmem:[%s5 + $0x30] sm:$0xff]
    %v3421 = vld [vmem:[%s5 + $0x38] sm:$0xff]
    %v3422 = vld [vmem:[%s5 + $0x40] sm:$0xff]
    %v3423 = vld [vmem:[%s5 + $0x48] sm:$0xff]
    %v3424 = vld [vmem:[%s5 + $0x50] sm:$0xff]
    %v3425 = vld [vmem:[%s5 + $0x58] sm:$0xff]
    %v3426 = vld [vmem:[%s5 + $0x60] sm:$0xff]
    %v3427 = vld [vmem:[%s5 + $0x68] sm:$0xff]
    %v3428 = vld [vmem:[%s5 + $0x70] sm:$0xff]
    %v3429 = vld [vmem:[%s5 + $0x78] sm:$0xff]
    %v3430 = vld [vmem:[#allocation3 + $0x4] sm:$0x1]
    %v3431 = vld [vmem:[#allocation3 + $0x14] sm:$0x1]
    %v3432 = vld [vmem:[#allocation3 + $0x24] sm:$0x1]
    %v3433 = vld [vmem:[#allocation3 + $0x34] sm:$0x1]
    %v3434 = vld [vmem:[#allocation3 + $0x44] sm:$0x1]
    %v3435 = vld [vmem:[#allocation3 + $0x54] sm:$0x1]
    %v3436 = vld [vmem:[#allocation3 + $0x64] sm:$0x1]
    %v3437 = vld [vmem:[#allocation3 + $0x74] sm:$0x1]
    %v3438 = vld [vmem:[#allocation3 + $0x6] sm:$0x1]
    %v3439 = vld [vmem:[#allocation3 + $0x16] sm:$0x1]
    %v3440 = vld [vmem:[#allocation3 + $0x26] sm:$0x1]
    %v3441 = vld [vmem:[#allocation3 + $0x36] sm:$0x1]
    %v3442 = vld [vmem:[#allocation3 + $0x46] sm:$0x1]
    %v3443 = vld [vmem:[#allocation3 + $0x56] sm:$0x1]
    %v3444 = vld [vmem:[#allocation3 + $0x66] sm:$0x1]
    %v3445 = vld [vmem:[#allocation3 + $0x76] sm:$0x1]
    %v3446 = vmax.f32 %v3430, %v3438
    %v3447 = vmax.f32 %v3431, %v3439
    %v3448 = vmax.f32 %v3432, %v3440
    %v3449 = vmax.f32 %v3433, %v3441
    %v3450 = vmax.f32 %v3434, %v3442
    %v3451 = vmax.f32 %v3435, %v3443
    %v3452 = vmax.f32 %v3436, %v3444
    %v3453 = vmax.f32 %v3437, %v3445
    %s3454 = scalar_lea.vmem %s5, 128
    %v3455 = vld [vmem:[%s3454] sm:$0xff]
    %v3456 = vld [vmem:[%s3454 + $0x8] sm:$0xff]
    %v3457 = vld [vmem:[%s3454 + $0x10] sm:$0xff]
    %v3458 = vld [vmem:[%s3454 + $0x18] sm:$0xff]
    %v3459 = vld [vmem:[%s3454 + $0x20] sm:$0xff]
    %v3460 = vld [vmem:[%s3454 + $0x28] sm:$0xff]
    %v3461 = vld [vmem:[%s3454 + $0x30] sm:$0xff]
    %v3462 = vld [vmem:[%s3454 + $0x38] sm:$0xff]
    %v3463 = vld [vmem:[%s3454 + $0x40] sm:$0xff]
    %v3464 = vld [vmem:[%s3454 + $0x48] sm:$0xff]
    %v3465 = vld [vmem:[%s3454 + $0x50] sm:$0xff]
    %v3466 = vld [vmem:[%s3454 + $0x58] sm:$0xff]
    %v3467 = vld [vmem:[%s3454 + $0x60] sm:$0xff]
    %v3468 = vld [vmem:[%s3454 + $0x68] sm:$0xff]
    %v3469 = vld [vmem:[%s3454 + $0x70] sm:$0xff]
    %v3470 = vld [vmem:[%s3454 + $0x78] sm:$0xff]
    %v3479 = vrot.slane %v3447, 7
    %vm3480 = vcmask 1041409
    %v3481 = vsel %vm3480, %v3479, %v3446
    %v3482 = vrot.slane %v3448, 6
    %vm3483 = vcmask 1042434
    %v3484 = vsel %vm3483, %v3482, %v3481
    %v3485 = vrot.slane %v3449, 5
    %vm3486 = vcmask 1043459
    %v3487 = vsel %vm3486, %v3485, %v3484
    %v3488 = vrot.slane %v3450, 4
    %vm3489 = vcmask 1044484
    %v3490 = vsel %vm3489, %v3488, %v3487
    %v3491 = vrot.slane %v3451, 3
    %vm3492 = vcmask 1045509
    %v3493 = vsel %vm3492, %v3491, %v3490
    %v3494 = vrot.slane %v3452, 2
    %vm3495 = vcmask 1046534
    %v3496 = vsel %vm3495, %v3494, %v3493
    %v3497 = vrot.slane %v3453, 1
    %vm3498 = vcmask 1047559
    %v3499 = vsel %vm3498, %v3497, %v3496
    %3501 = vmatpush.msra.mxu0 %v3470
    %3502 = vmatpush.msra.mxu0 %v3469
    %3503 = vmatpush.msra.mxu0 %v3468
    %3504 = vmatpush.msra.mxu0 %v3467
    %3505 = vmatpush.msra.mxu0 %v3466
    %3506 = vmatpush.msra.mxu0 %v3465
    %3507 = vmatpush.msra.mxu0 %v3464
    %3508 = vmatpush.msra.mxu0 %v3463
    %3509 = vmatpush.msra.mxu0 %v3462
    %3510 = vmatpush.msra.mxu0 %v3461
    %3511 = vmatpush.msra.mxu0 %v3460
    %3512 = vmatpush.msra.mxu0 %v3459
    %3513 = vmatpush.msra.mxu0 %v3458
    %3514 = vmatpush.msra.mxu0 %v3457
    %3515 = vmatpush.msra.mxu0 %v3456
    %3516 = vmatpush.msra.mxu0 %v3455
    %3517 = vmatmul.f32.gmra.mxu0 %v3499
    %v3518 = vpop.f32.mrf.mxu0
    %v3519 = vadd.f32 0.0, %v3518
    %3520 = vdwg.mxu0
    %v3529 = vrot.slane %v3407, 7
    %v3530 = vsel %vm3480, %v3529, %v3406
    %v3531 = vrot.slane %v3408, 6
    %v3532 = vsel %vm3483, %v3531, %v3530
    %v3533 = vrot.slane %v3409, 5
    %v3534 = vsel %vm3486, %v3533, %v3532
    %v3535 = vrot.slane %v3410, 4
    %v3536 = vsel %vm3489, %v3535, %v3534
    %v3537 = vrot.slane %v3411, 3
    %v3538 = vsel %vm3492, %v3537, %v3536
    %v3539 = vrot.slane %v3412, 2
    %v3540 = vsel %vm3495, %v3539, %v3538
    %v3541 = vrot.slane %v3413, 1
    %v3542 = vsel %vm3498, %v3541, %v3540
    %3544 = vmatpush.msra.mxu0 %v3429
    %3545 = vmatpush.msra.mxu0 %v3428
    %3546 = vmatpush.msra.mxu0 %v3427
    %3547 = vmatpush.msra.mxu0 %v3426
    %3548 = vmatpush.msra.mxu0 %v3425
    %3549 = vmatpush.msra.mxu0 %v3424
    %3550 = vmatpush.msra.mxu0 %v3423
    %3551 = vmatpush.msra.mxu0 %v3422
    %3552 = vmatpush.msra.mxu0 %v3421
    %3553 = vmatpush.msra.mxu0 %v3420
    %3554 = vmatpush.msra.mxu0 %v3419
    %3555 = vmatpush.msra.mxu0 %v3418
    %3556 = vmatpush.msra.mxu0 %v3417
    %3557 = vmatpush.msra.mxu0 %v3416
    %3558 = vmatpush.msra.mxu0 %v3415
    %3559 = vmatpush.msra.mxu0 %v3414
    %3560 = vmatmul.f32.gmra.mxu0 %v3542
    %v3561 = vpop.f32.mrf.mxu0
    %v3562 = vadd.f32 %v3519, %v3561
    %3563 = vdwg.mxu0
    %v3564 = vld [vmem:[#allocation3 + $0x8] sm:$0x1]
    %v3565 = vld [vmem:[#allocation3 + $0x18] sm:$0x1]
    %v3566 = vld [vmem:[#allocation3 + $0x28] sm:$0x1]
    %v3567 = vld [vmem:[#allocation3 + $0x38] sm:$0x1]
    %v3568 = vld [vmem:[#allocation3 + $0x48] sm:$0x1]
    %v3569 = vld [vmem:[#allocation3 + $0x58] sm:$0x1]
    %v3570 = vld [vmem:[#allocation3 + $0x68] sm:$0x1]
    %v3571 = vld [vmem:[#allocation3 + $0x78] sm:$0x1]
    %v3572 = vld [vmem:[#allocation3 + $0xa] sm:$0x1]
    %v3573 = vld [vmem:[#allocation3 + $0x1a] sm:$0x1]
    %v3574 = vld [vmem:[#allocation3 + $0x2a] sm:$0x1]
    %v3575 = vld [vmem:[#allocation3 + $0x3a] sm:$0x1]
    %v3576 = vld [vmem:[#allocation3 + $0x4a] sm:$0x1]
    %v3577 = vld [vmem:[#allocation3 + $0x5a] sm:$0x1]
    %v3578 = vld [vmem:[#allocation3 + $0x6a] sm:$0x1]
    %v3579 = vld [vmem:[#allocation3 + $0x7a] sm:$0x1]
    %v3580 = vmax.f32 %v3564, %v3572
    %v3581 = vmax.f32 %v3565, %v3573
    %v3582 = vmax.f32 %v3566, %v3574
    %v3583 = vmax.f32 %v3567, %v3575
    %v3584 = vmax.f32 %v3568, %v3576
    %v3585 = vmax.f32 %v3569, %v3577
    %v3586 = vmax.f32 %v3570, %v3578
    %v3587 = vmax.f32 %v3571, %v3579
    %s3588 = scalar_lea.vmem %s5, 256
    %v3589 = vld [vmem:[%s3588] sm:$0xff]
    %v3590 = vld [vmem:[%s3588 + $0x8] sm:$0xff]
    %v3591 = vld [vmem:[%s3588 + $0x10] sm:$0xff]
    %v3592 = vld [vmem:[%s3588 + $0x18] sm:$0xff]
    %v3593 = vld [vmem:[%s3588 + $0x20] sm:$0xff]
    %v3594 = vld [vmem:[%s3588 + $0x28] sm:$0xff]
    %v3595 = vld [vmem:[%s3588 + $0x30] sm:$0xff]
    %v3596 = vld [vmem:[%s3588 + $0x38] sm:$0xff]
    %v3597 = vld [vmem:[%s3588 + $0x40] sm:$0xff]
    %v3598 = vld [vmem:[%s3588 + $0x48] sm:$0xff]
    %v3599 = vld [vmem:[%s3588 + $0x50] sm:$0xff]
    %v3600 = vld [vmem:[%s3588 + $0x58] sm:$0xff]
    %v3601 = vld [vmem:[%s3588 + $0x60] sm:$0xff]
    %v3602 = vld [vmem:[%s3588 + $0x68] sm:$0xff]
    %v3603 = vld [vmem:[%s3588 + $0x70] sm:$0xff]
    %v3604 = vld [vmem:[%s3588 + $0x78] sm:$0xff]
    %v3613 = vrot.slane %v3581, 7
    %v3614 = vsel %vm3480, %v3613, %v3580
    %v3615 = vrot.slane %v3582, 6
    %v3616 = vsel %vm3483, %v3615, %v3614
    %v3617 = vrot.slane %v3583, 5
    %v3618 = vsel %vm3486, %v3617, %v3616
    %v3619 = vrot.slane %v3584, 4
    %v3620 = vsel %vm3489, %v3619, %v3618
    %v3621 = vrot.slane %v3585, 3
    %v3622 = vsel %vm3492, %v3621, %v3620
    %v3623 = vrot.slane %v3586, 2
    %v3624 = vsel %vm3495, %v3623, %v3622
    %v3625 = vrot.slane %v3587, 1
    %v3626 = vsel %vm3498, %v3625, %v3624
    %3628 = vmatpush.msra.mxu0 %v3604
    %3629 = vmatpush.msra.mxu0 %v3603
    %3630 = vmatpush.msra.mxu0 %v3602
    %3631 = vmatpush.msra.mxu0 %v3601
    %3632 = vmatpush.msra.mxu0 %v3600
    %3633 = vmatpush.msra.mxu0 %v3599
    %3634 = vmatpush.msra.mxu0 %v3598
    %3635 = vmatpush.msra.mxu0 %v3597
    %3636 = vmatpush.msra.mxu0 %v3596
    %3637 = vmatpush.msra.mxu0 %v3595
    %3638 = vmatpush.msra.mxu0 %v3594
    %3639 = vmatpush.msra.mxu0 %v3593
    %3640 = vmatpush.msra.mxu0 %v3592
    %3641 = vmatpush.msra.mxu0 %v3591
    %3642 = vmatpush.msra.mxu0 %v3590
    %3643 = vmatpush.msra.mxu0 %v3589
    %3644 = vmatmul.f32.gmra.mxu0 %v3626
    %v3645 = vpop.f32.mrf.mxu0
    %v3646 = vadd.f32 0.0, %v3645
    %3647 = vdwg.mxu0
    %v3648 = vadd.f32 %v3562, %v3646
    %v3649 = vld [vmem:[#allocation3 + $0xc] sm:$0x1]
    %v3650 = vld [vmem:[#allocation3 + $0x1c] sm:$0x1]
    %v3651 = vld [vmem:[#allocation3 + $0x2c] sm:$0x1]
    %v3652 = vld [vmem:[#allocation3 + $0x3c] sm:$0x1]
    %v3653 = vld [vmem:[#allocation3 + $0x4c] sm:$0x1]
    %v3654 = vld [vmem:[#allocation3 + $0x5c] sm:$0x1]
    %v3655 = vld [vmem:[#allocation3 + $0x6c] sm:$0x1]
    %v3656 = vld [vmem:[#allocation3 + $0x7c] sm:$0x1]
    %v3657 = vld [vmem:[#allocation3 + $0xe] sm:$0x1]
    %v3658 = vld [vmem:[#allocation3 + $0x1e] sm:$0x1]
    %v3659 = vld [vmem:[#allocation3 + $0x2e] sm:$0x1]
    %v3660 = vld [vmem:[#allocation3 + $0x3e] sm:$0x1]
    %v3661 = vld [vmem:[#allocation3 + $0x4e] sm:$0x1]
    %v3662 = vld [vmem:[#allocation3 + $0x5e] sm:$0x1]
    %v3663 = vld [vmem:[#allocation3 + $0x6e] sm:$0x1]
    %v3664 = vld [vmem:[#allocation3 + $0x7e] sm:$0x1]
    %v3665 = vmax.f32 %v3649, %v3657
    %v3666 = vmax.f32 %v3650, %v3658
    %v3667 = vmax.f32 %v3651, %v3659
    %v3668 = vmax.f32 %v3652, %v3660
    %v3669 = vmax.f32 %v3653, %v3661
    %v3670 = vmax.f32 %v3654, %v3662
    %v3671 = vmax.f32 %v3655, %v3663
    %v3672 = vmax.f32 %v3656, %v3664
    %s3673 = scalar_lea.vmem %s5, 384
    %v3674 = vld [vmem:[%s3673] sm:$0xff]
    %v3675 = vld [vmem:[%s3673 + $0x8] sm:$0xff]
    %v3676 = vld [vmem:[%s3673 + $0x10] sm:$0xff]
    %v3677 = vld [vmem:[%s3673 + $0x18] sm:$0xff]
    %v3678 = vld [vmem:[%s3673 + $0x20] sm:$0xff]
    %v3679 = vld [vmem:[%s3673 + $0x28] sm:$0xff]
    %v3680 = vld [vmem:[%s3673 + $0x30] sm:$0xff]
    %v3681 = vld [vmem:[%s3673 + $0x38] sm:$0xff]
    %v3682 = vld [vmem:[%s3673 + $0x40] sm:$0xff]
    %v3683 = vld [vmem:[%s3673 + $0x48] sm:$0xff]
    %v3684 = vld [vmem:[%s3673 + $0x50] sm:$0xff]
    %v3685 = vld [vmem:[%s3673 + $0x58] sm:$0xff]
    %v3686 = vld [vmem:[%s3673 + $0x60] sm:$0xff]
    %v3687 = vld [vmem:[%s3673 + $0x68] sm:$0xff]
    %v3688 = vld [vmem:[%s3673 + $0x70] sm:$0xff]
    %v3689 = vld [vmem:[%s3673 + $0x78] sm:$0xff]
    %v3698 = vrot.slane %v3666, 7
    %v3699 = vsel %vm3480, %v3698, %v3665
    %v3700 = vrot.slane %v3667, 6
    %v3701 = vsel %vm3483, %v3700, %v3699
    %v3702 = vrot.slane %v3668, 5
    %v3703 = vsel %vm3486, %v3702, %v3701
    %v3704 = vrot.slane %v3669, 4
    %v3705 = vsel %vm3489, %v3704, %v3703
    %v3706 = vrot.slane %v3670, 3
    %v3707 = vsel %vm3492, %v3706, %v3705
    %v3708 = vrot.slane %v3671, 2
    %v3709 = vsel %vm3495, %v3708, %v3707
    %v3710 = vrot.slane %v3672, 1
    %v3711 = vsel %vm3498, %v3710, %v3709
    %3713 = vmatpush.msra.mxu0 %v3689
    %3714 = vmatpush.msra.mxu0 %v3688
    %3715 = vmatpush.msra.mxu0 %v3687
    %3716 = vmatpush.msra.mxu0 %v3686
    %3717 = vmatpush.msra.mxu0 %v3685
    %3718 = vmatpush.msra.mxu0 %v3684
    %3719 = vmatpush.msra.mxu0 %v3683
    %3720 = vmatpush.msra.mxu0 %v3682
    %3721 = vmatpush.msra.mxu0 %v3681
    %3722 = vmatpush.msra.mxu0 %v3680
    %3723 = vmatpush.msra.mxu0 %v3679
    %3724 = vmatpush.msra.mxu0 %v3678
    %3725 = vmatpush.msra.mxu0 %v3677
    %3726 = vmatpush.msra.mxu0 %v3676
    %3727 = vmatpush.msra.mxu0 %v3675
    %3728 = vmatpush.msra.mxu0 %v3674
    %3729 = vmatmul.f32.gmra.mxu0 %v3711
    %v3730 = vpop.f32.mrf.mxu0
    %v3731 = vadd.f32 0.0, %v3730
    %3732 = vdwg.mxu0
    %v3733 = vadd.f32 %v3648, %v3731
    %v3734 = vld [vmem:[%s6] sm:$0x1]
    %v3736 = vperm.slane %v3734, 0
    %v3738 = vadd.f32 %v3733, %v3736
    %v3739 = vsub.f32 0.0, %v3738
    %v3740 = vmul.f32 %v3739, 1.442695
    %v3741 = vpow.pop %v3740
    %v3742 = vadd.f32 %v3741, 1.0
    %v3743 = vrcp.pop %v3742
    %v3744 = vld [vmem:[#allocation8] sm:$0xff]
    %v3745 = vld [vmem:[#allocation8 + $0x8] sm:$0xff]
    %v3746 = vld [vmem:[#allocation8 + $0x10] sm:$0xff]
    %v3747 = vld [vmem:[#allocation8 + $0x18] sm:$0xff]
    %v3748 = vld [vmem:[#allocation8 + $0x20] sm:$0xff]
    %v3749 = vld [vmem:[#allocation8 + $0x28] sm:$0xff]
    %v3750 = vld [vmem:[#allocation8 + $0x30] sm:$0xff]
    %v3751 = vld [vmem:[#allocation8 + $0x38] sm:$0xff]
    %v3752 = vld [vmem:[#allocation8 + $0x40] sm:$0xff]
    %v3753 = vld [vmem:[#allocation8 + $0x48] sm:$0xff]
    %v3754 = vld [vmem:[#allocation8 + $0x50] sm:$0xff]
    %v3755 = vld [vmem:[#allocation8 + $0x58] sm:$0xff]
    %v3756 = vld [vmem:[#allocation8 + $0x60] sm:$0xff]
    %v3757 = vld [vmem:[#allocation8 + $0x68] sm:$0xff]
    %v3758 = vld [vmem:[#allocation8 + $0x70] sm:$0xff]
    %v3759 = vld [vmem:[#allocation8 + $0x78] sm:$0xff]
    %v3760 = vld [vmem:[%s8] sm:$0x1]
    %v3762 = vperm.slane %v3760, 0
    %3764 = vmatpush.msra.mxu0 %v3759
    %3765 = vmatpush.msra.mxu0 %v3758
    %3766 = vmatpush.msra.mxu0 %v3757
    %3767 = vmatpush.msra.mxu0 %v3756
    %3768 = vmatpush.msra.mxu0 %v3755
    %3769 = vmatpush.msra.mxu0 %v3754
    %3770 = vmatpush.msra.mxu0 %v3753
    %3771 = vmatpush.msra.mxu0 %v3752
    %3772 = vmatpush.msra.mxu0 %v3751
    %3773 = vmatpush.msra.mxu0 %v3750
    %3774 = vmatpush.msra.mxu0 %v3749
    %3775 = vmatpush.msra.mxu0 %v3748
    %3776 = vmatpush.msra.mxu0 %v3747
    %3777 = vmatpush.msra.mxu0 %v3746
    %3778 = vmatpush.msra.mxu0 %v3745
    %3779 = vmatpush.msra.mxu0 %v3744
    %3780 = vmatmul.f32.gmra.mxu0 %v3743
    %v3781 = vpop.f32.mrf.mxu0
    %v3782 = vadd.f32 %v3762, %v3781
    %3783 = vdwg.mxu0
    %v3784 = vsub.f32 0.0, %v3782
    %v3785 = vmul.f32 %v3784, 1.442695
    %v3786 = vpow.pop %v3785
    %v3787 = vadd.f32 %v3786, 1.0
    %v3788 = vrcp.pop %v3787
    %v3789 = vld [vmem:[#allocation9] sm:$0xff]
    %v3790 = vld [vmem:[#allocation9 + $0x8] sm:$0xff]
    %v3791 = vld [vmem:[#allocation9 + $0x10] sm:$0xff]
    %v3792 = vld [vmem:[#allocation9 + $0x18] sm:$0xff]
    %v3793 = vld [vmem:[#allocation9 + $0x20] sm:$0xff]
    %v3794 = vld [vmem:[#allocation9 + $0x28] sm:$0xff]
    %v3795 = vld [vmem:[#allocation9 + $0x30] sm:$0xff]
    %v3796 = vld [vmem:[#allocation9 + $0x38] sm:$0xff]
    %v3797 = vld [vmem:[#allocation9 + $0x40] sm:$0xff]
    %v3798 = vld [vmem:[#allocation9 + $0x48] sm:$0xff]
    %v3799 = vld [vmem:[#allocation9 + $0x50] sm:$0xff]
    %v3800 = vld [vmem:[#allocation9 + $0x58] sm:$0xff]
    %v3801 = vld [vmem:[#allocation9 + $0x60] sm:$0xff]
    %v3802 = vld [vmem:[#allocation9 + $0x68] sm:$0xff]
    %v3803 = vld [vmem:[#allocation9 + $0x70] sm:$0xff]
    %v3804 = vld [vmem:[#allocation9 + $0x78] sm:$0xff]
    %v3805 = vld [vmem:[%s10] sm:$0x1]
    %v3807 = vperm.slane %v3805, 0
    %3809 = vmatpush.msra.mxu0 %v3804
    %3810 = vmatpush.msra.mxu0 %v3803
    %3811 = vmatpush.msra.mxu0 %v3802
    %3812 = vmatpush.msra.mxu0 %v3801
    %3813 = vmatpush.msra.mxu0 %v3800
    %3814 = vmatpush.msra.mxu0 %v3799
    %3815 = vmatpush.msra.mxu0 %v3798
    %3816 = vmatpush.msra.mxu0 %v3797
    %3817 = vmatpush.msra.mxu0 %v3796
    %3818 = vmatpush.msra.mxu0 %v3795
    %3819 = vmatpush.msra.mxu0 %v3794
    %3820 = vmatpush.msra.mxu0 %v3793
    %3821 = vmatpush.msra.mxu0 %v3792
    %3822 = vmatpush.msra.mxu0 %v3791
    %3823 = vmatpush.msra.mxu0 %v3790
    %3824 = vmatpush.msra.mxu0 %v3789
    %3825 = vmatmul.f32.gmra.mxu0 %v3788
    %v3826 = vpop.f32.mrf.mxu0
    %v3827 = vadd.f32 %v3807, %v3826
    %3828 = vdwg.mxu0
    %3829 = vst [vmem:[%s11] sm:$0xff] %v3827
    // Predicated region
    $region62: #{lenet_forward.1} parent=1 // pred_check
      _
    $region63: #{lenet_forward.1} parent=1 // pred_check_branch
      %3831 = sbr.rel (0) target = $region65
    $region64: #{lenet_forward.1} parent=1 // pred_region
      _
    $region65: #{lenet_forward.1} parent=1 // pred_fallthru
      _
    // Predicated region
    $region66: #{lenet_forward.1} parent=1 // pred_check
      _
    $region67: #{lenet_forward.1} parent=1 // pred_check_branch
      %3833 = sbr.rel (0) target = $region69
    $region68: #{lenet_forward.1} parent=1 // pred_region
      _
    $region69: #{lenet_forward.1} parent=1 // pred_fallthru
      _
    %3834 = vsyncpa [#allocation5], 1
    %3835 = vsyncpa [#allocation7], 1
    %3836 = vsyncpa [#allocation10], 1

</llo_original>
